<compile_context>
chip_gen: v5e
topology: v5e:2x2
jax: 0.10.0
libtpu: 0.0.40
codegen_flags: <defaults>
</compile_context>

<pallas_src>
import jax
import jax.numpy as jnp
from jax.experimental import pallas as pl
from jax.experimental.pallas import tpu as pltpu

_LEAKY_SLOPE = 0.02
_NUM_LAYERS = 7  # linear_1..linear_6 + linear_8 (linear_7 exists but is unused)


def _mlp_kernel(x_ref, w_ref, b_ref, out_ref):
    # x_ref:   (tm, H)  bf16   -- lane-padded [points, z] rows
    # w_ref:   (7, H, H) bf16  -- packed, zero-padded weights (y = x @ W + b)
    # b_ref:   (7, 1, H) f32   -- packed, zero-padded biases
    # out_ref: (tm, H)  f32    -- first 3 lanes valid, rest are exactly 0
    h = x_ref[...]  # bf16
    for l in range(_NUM_LAYERS - 1):
        acc = jnp.dot(h, w_ref[l], preferred_element_type=jnp.float32) + b_ref[l]
        act = jnp.maximum(acc, _LEAKY_SLOPE * acc)      # leaky_relu, one VALU op
        h = act.astype(jnp.bfloat16)                    # bf16 operand for next MXU pass
    l8 = (jnp.dot(h, w_ref[_NUM_LAYERS - 1], preferred_element_type=jnp.float32)
          + b_ref[_NUM_LAYERS - 1])
    # torch.max(torch.min(l8, 1), 0) == clamp to [0, 1]
    out_ref[...] = jnp.minimum(jnp.maximum(l8, 0.0), 1.0).astype(out_ref.dtype)


def generator_color_forward(points, z, params, *, tm=512):
    """points: (B, N, point_dim) f32, z: (B, z_dim) f32.  Returns (B, N, 3) f32."""
    B, N, point_dim = points.shape
    z_dim = z.shape[1]
    d_in = z_dim + point_dim

    ws = params[0::2]
    bs = params[1::2]
    assert len(ws) == _NUM_LAYERS

    # One shared lane-aligned width for every layer (>= all in/out dims).
    dims = [d_in] + [int(w.shape[1]) for w in ws]
    H = ((max(dims) + 127) // 128) * 128

    # Pack weights: (din, dout) -> zero-padded (H, H), stacked, bf16.
    # Zero-padding is exact: padded activation lanes stay 0 through every layer
    # (bias 0, leaky_relu(0) = 0), and padded weight rows multiply those zeros.
    wb = jnp.stack(
        [jnp.pad(w, ((0, H - w.shape[0]), (0, H - w.shape[1]))) for w in ws]
    ).astype(jnp.bfloat16)
    bb = jnp.stack(
        [jnp.pad(b.reshape(1, -1), ((0, 0), (0, H - b.shape[-1]))) for b in bs]
    ).astype(jnp.float32)

    # Glue (plain JAX): broadcast z over points, concat, flatten rows,
    # lane-pad features to H and row-pad to a multiple of tm.
    zs = jnp.broadcast_to(z[:, None, :], (B, N, z_dim))
    pointz = jnp.concatenate([points, zs], axis=2).reshape(B * N, d_in)
    M = B * N
    M_pad = int(pl.cdiv(M, tm)) * tm
    x = jnp.pad(pointz, ((0, M_pad - M), (0, H - d_in))).astype(jnp.bfloat16)

    flops = 2 * M_pad * sum(int(w.shape[0]) * int(w.shape[1]) for w in ws)
    bytes_accessed = x.size * 2 + wb.size * 2 + bb.size * 4 + M_pad * H * 4

    out = pl.pallas_call(
        _mlp_kernel,
        out_shape=jax.ShapeDtypeStruct((M_pad, H), jnp.float32),
        grid_spec=pltpu.PrefetchScalarGridSpec(
            num_scalar_prefetch=0,
            grid=(M_pad // tm,),
            in_specs=[
                pl.BlockSpec((tm, H), lambda i: (i, 0)),              # x row tile
                pl.BlockSpec((_NUM_LAYERS, H, H), lambda i: (0, 0, 0)),  # packed W
                pl.BlockSpec((_NUM_LAYERS, 1, H), lambda i: (0, 0, 0)),  # packed b
            ],
            out_specs=pl.BlockSpec((tm, H), lambda i: (i, 0)),
        ),
        compiler_params=pltpu.CompilerParams(
            dimension_semantics=("parallel",)),
        cost_estimate=pl.CostEstimate(
            flops=flops, transcendentals=0, bytes_accessed=bytes_accessed),
    )(x, wb, bb)

    return out[:M, :3].reshape(B, N, 3)


def init_params(key, z_dim, point_dim, gf_dim):
    """Deterministic init matching the PyTorch module's init scheme.

    Weights stored transposed relative to nn.Linear: shape (in, out) so the
    kernel computes y = x @ W + b.  Biases kept as (1, out).
    """
    dims = [
        (z_dim + point_dim, gf_dim * 8, 0.0),   # linear_1
        (gf_dim * 8,        gf_dim * 8, 0.0),   # linear_2
        (gf_dim * 8,        gf_dim * 8, 0.0),   # linear_3
        (gf_dim * 8,        gf_dim * 4, 0.0),   # linear_4
        (gf_dim * 4,        gf_dim * 2, 0.0),   # linear_5
        (gf_dim * 2,        gf_dim * 1, 0.0),   # linear_6
        (gf_dim * 1,        3,          1e-5),  # linear_8 (linear_7 unused)
    ]
    params = []
    keys = jax.random.split(key, len(dims))
    for k, (din, dout, mean) in zip(keys, dims):
        w = mean + 0.02 * jax.random.normal(k, (din, dout), dtype=jnp.float32)
        b = jnp.zeros((1, dout), dtype=jnp.float32)
        params.extend([w, b])
    return tuple(params)


def _leaky_relu(x, slope=_LEAKY_SLOPE):
    return jnp.maximum(x, slope * x)


def _reference_forward(points, z, params):
    """Pure-JAX f32 reference for verification."""
    (w1, b1, w2, b2, w3, b3, w4, b4, w5, b5, w6, b6, w8, b8) = params
    B, N, _ = points.shape
    zs = jnp.broadcast_to(z[:, None, :], (B, N, z.shape[1]))
    h = jnp.concatenate([points, zs], axis=2)
    for w, b in [(w1, b1), (w2, b2), (w3, b3), (w4, b4), (w5, b5), (w6, b6)]:
        h = _leaky_relu(h @ w + b)
    l8 = h @ w8 + b8
    return jnp.clip(l8, 0.0, 1.0)


if __name__ == "__main__":
    z_dim, point_dim, gf_dim = 32, 3, 16
    B, N = 2, 1024  # M = 2048 rows -> 4 grid steps at tm=512

    key = jax.random.PRNGKey(0)
    k_pts, k_z, k_par = jax.random.split(key, 3)
    points = jax.random.normal(k_pts, (B, N, point_dim), dtype=jnp.float32)
    z = jax.random.normal(k_z, (B, z_dim), dtype=jnp.float32)
    params = init_params(k_par, z_dim, point_dim, gf_dim)

    out = generator_color_forward(points, z, params, tm=512)
    out = jax.block_until_ready(out)

    ref = _reference_forward(points, z, params)
    assert out.shape == (B, N, 3)
    # bf16 matmul operands (f32 accumulate) -> relaxed tolerance vs f32 reference.
    max_diff = float(jnp.max(jnp.abs(out - ref)))
    assert jnp.allclose(out, ref, atol=5e-3, rtol=5e-2), (
        "mismatch vs reference: max abs diff = %g" % max_diff)

    print("KERNEL_OK")
</pallas_src>

<mosaic_0001>
module attributes {stable_mosaic.version = 11 : i64} {
  func.func @_mlp_kernel(%arg0: i32, %arg1: memref<512x128xbf16, #tpu.memory_space<vmem>>, %arg2: memref<7x128x128xbf16, #tpu.memory_space<vmem>>, %arg3: memref<7x1x128xf32, #tpu.memory_space<vmem>>, %arg4: memref<512x128xf32, #tpu.memory_space<vmem>>) attributes {dimension_semantics = [#tpu.dimension_semantics<parallel>], iteration_bounds = array<i64: 4>, scalar_prefetch = 0 : i64, scratch_operands = 0 : i64, tpu.core_type = #tpu.core_type<tc>, window_params = [{transform_indices = @transform_0, window_bounds = array<i64: 512, 128>}, {pipeline_mode = #tpu.pipeline_mode<synchronous>, transform_indices = @transform_1, window_bounds = array<i64: 7, 128, 128>}, {pipeline_mode = #tpu.pipeline_mode<synchronous>, transform_indices = @transform_2, window_bounds = array<i64: 7, 1, 128>}, {transform_indices = @transform_3, window_bounds = array<i64: 512, 128>}]} {
    %c0 = arith.constant 0 : index
    %c0_0 = arith.constant 0 : index
    %0 = vector.load %arg1[%c0, %c0_0] : memref<512x128xbf16, #tpu.memory_space<vmem>>, vector<512x128xbf16>
    %c0_1 = arith.constant 0 : index
    %c0_2 = arith.constant 0 : index
    %c0_3 = arith.constant 0 : index
    %1 = vector.load %arg2[%c0_1, %c0_2, %c0_3] : memref<7x128x128xbf16, #tpu.memory_space<vmem>>, vector<1x128x128xbf16>
    %2 = vector.shape_cast %1 : vector<1x128x128xbf16> to vector<128x128xbf16>
    %cst = arith.constant dense<0.000000e+00> : vector<512x128xf32>
    %3 = tpu.matmul %0, %2, %cst {dimension_numbers = #tpu.dot_dimension_numbers<[1], [0], [0], [1], [0, 0, 1, 1], [], []>} : vector<512x128xbf16>, vector<128x128xbf16>, vector<512x128xf32> -> vector<512x128xf32>
    %c0_4 = arith.constant 0 : index
    %c0_5 = arith.constant 0 : index
    %c0_6 = arith.constant 0 : index
    %4 = vector.load %arg3[%c0_4, %c0_5, %c0_6] : memref<7x1x128xf32, #tpu.memory_space<vmem>>, vector<1x1x128xf32>
    %5 = vector.shape_cast %4 : vector<1x1x128xf32> to vector<1x128xf32>
    %6 = vector.broadcast %5 : vector<1x128xf32> to vector<512x128xf32>
    %7 = arith.addf %3, %6 : vector<512x128xf32>
    %cst_7 = arith.constant 2.000000e-02 : f32
    %8 = vector.broadcast %cst_7 : f32 to vector<512x128xf32>
    %9 = arith.mulf %8, %7 : vector<512x128xf32>
    %10 = arith.maximumf %7, %9 : vector<512x128xf32>
    %11 = arith.truncf %10 : vector<512x128xf32> to vector<512x128xbf16>
    %c1 = arith.constant 1 : index
    %c0_8 = arith.constant 0 : index
    %c0_9 = arith.constant 0 : index
    %12 = vector.load %arg2[%c1, %c0_8, %c0_9] : memref<7x128x128xbf16, #tpu.memory_space<vmem>>, vector<1x128x128xbf16>
    %13 = vector.shape_cast %12 : vector<1x128x128xbf16> to vector<128x128xbf16>
    %cst_10 = arith.constant dense<0.000000e+00> : vector<512x128xf32>
    %14 = tpu.matmul %11, %13, %cst_10 {dimension_numbers = #tpu.dot_dimension_numbers<[1], [0], [0], [1], [0, 0, 1, 1], [], []>} : vector<512x128xbf16>, vector<128x128xbf16>, vector<512x128xf32> -> vector<512x128xf32>
    %c1_11 = arith.constant 1 : index
    %c0_12 = arith.constant 0 : index
    %c0_13 = arith.constant 0 : index
    %15 = vector.load %arg3[%c1_11, %c0_12, %c0_13] : memref<7x1x128xf32, #tpu.memory_space<vmem>>, vector<1x1x128xf32>
    %16 = vector.shape_cast %15 : vector<1x1x128xf32> to vector<1x128xf32>
    %17 = vector.broadcast %16 : vector<1x128xf32> to vector<512x128xf32>
    %18 = arith.addf %14, %17 : vector<512x128xf32>
    %cst_14 = arith.constant 2.000000e-02 : f32
    %19 = vector.broadcast %cst_14 : f32 to vector<512x128xf32>
    %20 = arith.mulf %19, %18 : vector<512x128xf32>
    %21 = arith.maximumf %18, %20 : vector<512x128xf32>
    %22 = arith.truncf %21 : vector<512x128xf32> to vector<512x128xbf16>
    %c2 = arith.constant 2 : index
    %c0_15 = arith.constant 0 : index
    %c0_16 = arith.constant 0 : index
    %23 = vector.load %arg2[%c2, %c0_15, %c0_16] : memref<7x128x128xbf16, #tpu.memory_space<vmem>>, vector<1x128x128xbf16>
    %24 = vector.shape_cast %23 : vector<1x128x128xbf16> to vector<128x128xbf16>
    %cst_17 = arith.constant dense<0.000000e+00> : vector<512x128xf32>
    %25 = tpu.matmul %22, %24, %cst_17 {dimension_numbers = #tpu.dot_dimension_numbers<[1], [0], [0], [1], [0, 0, 1, 1], [], []>} : vector<512x128xbf16>, vector<128x128xbf16>, vector<512x128xf32> -> vector<512x128xf32>
    %c2_18 = arith.constant 2 : index
    %c0_19 = arith.constant 0 : index
    %c0_20 = arith.constant 0 : index
    %26 = vector.load %arg3[%c2_18, %c0_19, %c0_20] : memref<7x1x128xf32, #tpu.memory_space<vmem>>, vector<1x1x128xf32>
    %27 = vector.shape_cast %26 : vector<1x1x128xf32> to vector<1x128xf32>
    %28 = vector.broadcast %27 : vector<1x128xf32> to vector<512x128xf32>
    %29 = arith.addf %25, %28 : vector<512x128xf32>
    %cst_21 = arith.constant 2.000000e-02 : f32
    %30 = vector.broadcast %cst_21 : f32 to vector<512x128xf32>
    %31 = arith.mulf %30, %29 : vector<512x128xf32>
    %32 = arith.maximumf %29, %31 : vector<512x128xf32>
    %33 = arith.truncf %32 : vector<512x128xf32> to vector<512x128xbf16>
    %c3 = arith.constant 3 : index
    %c0_22 = arith.constant 0 : index
    %c0_23 = arith.constant 0 : index
    %34 = vector.load %arg2[%c3, %c0_22, %c0_23] : memref<7x128x128xbf16, #tpu.memory_space<vmem>>, vector<1x128x128xbf16>
    %35 = vector.shape_cast %34 : vector<1x128x128xbf16> to vector<128x128xbf16>
    %cst_24 = arith.constant dense<0.000000e+00> : vector<512x128xf32>
    %36 = tpu.matmul %33, %35, %cst_24 {dimension_numbers = #tpu.dot_dimension_numbers<[1], [0], [0], [1], [0, 0, 1, 1], [], []>} : vector<512x128xbf16>, vector<128x128xbf16>, vector<512x128xf32> -> vector<512x128xf32>
    %c3_25 = arith.constant 3 : index
    %c0_26 = arith.constant 0 : index
    %c0_27 = arith.constant 0 : index
    %37 = vector.load %arg3[%c3_25, %c0_26, %c0_27] : memref<7x1x128xf32, #tpu.memory_space<vmem>>, vector<1x1x128xf32>
    %38 = vector.shape_cast %37 : vector<1x1x128xf32> to vector<1x128xf32>
    %39 = vector.broadcast %38 : vector<1x128xf32> to vector<512x128xf32>
    %40 = arith.addf %36, %39 : vector<512x128xf32>
    %cst_28 = arith.constant 2.000000e-02 : f32
    %41 = vector.broadcast %cst_28 : f32 to vector<512x128xf32>
    %42 = arith.mulf %41, %40 : vector<512x128xf32>
    %43 = arith.maximumf %40, %42 : vector<512x128xf32>
    %44 = arith.truncf %43 : vector<512x128xf32> to vector<512x128xbf16>
    %c4 = arith.constant 4 : index
    %c0_29 = arith.constant 0 : index
    %c0_30 = arith.constant 0 : index
    %45 = vector.load %arg2[%c4, %c0_29, %c0_30] : memref<7x128x128xbf16, #tpu.memory_space<vmem>>, vector<1x128x128xbf16>
    %46 = vector.shape_cast %45 : vector<1x128x128xbf16> to vector<128x128xbf16>
    %cst_31 = arith.constant dense<0.000000e+00> : vector<512x128xf32>
    %47 = tpu.matmul %44, %46, %cst_31 {dimension_numbers = #tpu.dot_dimension_numbers<[1], [0], [0], [1], [0, 0, 1, 1], [], []>} : vector<512x128xbf16>, vector<128x128xbf16>, vector<512x128xf32> -> vector<512x128xf32>
    %c4_32 = arith.constant 4 : index
    %c0_33 = arith.constant 0 : index
    %c0_34 = arith.constant 0 : index
    %48 = vector.load %arg3[%c4_32, %c0_33, %c0_34] : memref<7x1x128xf32, #tpu.memory_space<vmem>>, vector<1x1x128xf32>
    %49 = vector.shape_cast %48 : vector<1x1x128xf32> to vector<1x128xf32>
    %50 = vector.broadcast %49 : vector<1x128xf32> to vector<512x128xf32>
    %51 = arith.addf %47, %50 : vector<512x128xf32>
    %cst_35 = arith.constant 2.000000e-02 : f32
    %52 = vector.broadcast %cst_35 : f32 to vector<512x128xf32>
    %53 = arith.mulf %52, %51 : vector<512x128xf32>
    %54 = arith.maximumf %51, %53 : vector<512x128xf32>
    %55 = arith.truncf %54 : vector<512x128xf32> to vector<512x128xbf16>
    %c5 = arith.constant 5 : index
    %c0_36 = arith.constant 0 : index
    %c0_37 = arith.constant 0 : index
    %56 = vector.load %arg2[%c5, %c0_36, %c0_37] : memref<7x128x128xbf16, #tpu.memory_space<vmem>>, vector<1x128x128xbf16>
    %57 = vector.shape_cast %56 : vector<1x128x128xbf16> to vector<128x128xbf16>
    %cst_38 = arith.constant dense<0.000000e+00> : vector<512x128xf32>
    %58 = tpu.matmul %55, %57, %cst_38 {dimension_numbers = #tpu.dot_dimension_numbers<[1], [0], [0], [1], [0, 0, 1, 1], [], []>} : vector<512x128xbf16>, vector<128x128xbf16>, vector<512x128xf32> -> vector<512x128xf32>
    %c5_39 = arith.constant 5 : index
    %c0_40 = arith.constant 0 : index
    %c0_41 = arith.constant 0 : index
    %59 = vector.load %arg3[%c5_39, %c0_40, %c0_41] : memref<7x1x128xf32, #tpu.memory_space<vmem>>, vector<1x1x128xf32>
    %60 = vector.shape_cast %59 : vector<1x1x128xf32> to vector<1x128xf32>
    %61 = vector.broadcast %60 : vector<1x128xf32> to vector<512x128xf32>
    %62 = arith.addf %58, %61 : vector<512x128xf32>
    %cst_42 = arith.constant 2.000000e-02 : f32
    %63 = vector.broadcast %cst_42 : f32 to vector<512x128xf32>
    %64 = arith.mulf %63, %62 : vector<512x128xf32>
    %65 = arith.maximumf %62, %64 : vector<512x128xf32>
    %66 = arith.truncf %65 : vector<512x128xf32> to vector<512x128xbf16>
    %c6 = arith.constant 6 : index
    %c0_43 = arith.constant 0 : index
    %c0_44 = arith.constant 0 : index
    %67 = vector.load %arg2[%c6, %c0_43, %c0_44] : memref<7x128x128xbf16, #tpu.memory_space<vmem>>, vector<1x128x128xbf16>
    %68 = vector.shape_cast %67 : vector<1x128x128xbf16> to vector<128x128xbf16>
    %cst_45 = arith.constant dense<0.000000e+00> : vector<512x128xf32>
    %69 = tpu.matmul %66, %68, %cst_45 {dimension_numbers = #tpu.dot_dimension_numbers<[1], [0], [0], [1], [0, 0, 1, 1], [], []>} : vector<512x128xbf16>, vector<128x128xbf16>, vector<512x128xf32> -> vector<512x128xf32>
    %c6_46 = arith.constant 6 : index
    %c0_47 = arith.constant 0 : index
    %c0_48 = arith.constant 0 : index
    %70 = vector.load %arg3[%c6_46, %c0_47, %c0_48] : memref<7x1x128xf32, #tpu.memory_space<vmem>>, vector<1x1x128xf32>
    %71 = vector.shape_cast %70 : vector<1x1x128xf32> to vector<1x128xf32>
    %72 = vector.broadcast %71 : vector<1x128xf32> to vector<512x128xf32>
    %73 = arith.addf %69, %72 : vector<512x128xf32>
    %cst_49 = arith.constant 0.000000e+00 : f32
    %74 = vector.broadcast %cst_49 : f32 to vector<512x128xf32>
    %75 = arith.maximumf %73, %74 : vector<512x128xf32>
    %cst_50 = arith.constant 1.000000e+00 : f32
    %76 = vector.broadcast %cst_50 : f32 to vector<512x128xf32>
    %77 = arith.minimumf %75, %76 : vector<512x128xf32>
    %c0_51 = arith.constant 0 : index
    %c0_52 = arith.constant 0 : index
    %78 = vector.load %arg4[%c0_51, %c0_52] : memref<512x128xf32, #tpu.memory_space<vmem>>, vector<512x128xf32>
    tpu.vector_store %arg4[%c0_51, %c0_52], %77 {strides = array<i32>} : memref<512x128xf32, #tpu.memory_space<vmem>>, vector<512x128xf32>,
    return
  }
  func.func @transform_0(%arg0: i32) -> (i32, i32) {
    %c0_i32 = arith.constant 0 : i32
    %c0_i32_0 = arith.constant 0 : i32
    return %arg0, %c0_i32 : i32, i32
  }
  func.func @transform_1(%arg0: i32) -> (i32, i32, i32) {
    %c0_i32 = arith.constant 0 : i32
    %c0_i32_0 = arith.constant 0 : i32
    %c0_i32_1 = arith.constant 0 : i32
    %c0_i32_2 = arith.constant 0 : i32
    return %c0_i32, %c0_i32_0, %c0_i32_1 : i32, i32, i32
  }
  func.func @transform_2(%arg0: i32) -> (i32, i32, i32) {
    %c0_i32 = arith.constant 0 : i32
    %c0_i32_0 = arith.constant 0 : i32
    %c0_i32_1 = arith.constant 0 : i32
    %c0_i32_2 = arith.constant 0 : i32
    return %c0_i32, %c0_i32_0, %c0_i32_1 : i32, i32, i32
  }
  func.func @transform_3(%arg0: i32) -> (i32, i32) {
    %c0_i32 = arith.constant 0 : i32
    %c0_i32_0 = arith.constant 0 : i32
    return %arg0, %c0_i32 : i32, i32
  }
}

</mosaic_0001>

<llo_original>
// kernel: tpu_custom_call.1
$region0: #{tpu_custom_call.1}
  #allocation0 [shape = 'u32[]', space=smem, size = 0x4, offset = 0x4, fixed_abs, tag = 'smem constant byte address 0x4 - core index']
  #allocation1 [shape = 'u32[72,128]{1,0:T(1,128)}', space=vmem, size = 0x9000, scoped, tag = 'internal scratch']
  %s0 = inlined_call_operand.hbm [shape: bf16[2048,128], index: 0, kind: input, shape index: {}]
  %s1 = inlined_call_operand.hbm [shape: bf16[7,128,128], index: 1, kind: input, shape index: {}]
  %s2 = inlined_call_operand.hbm [shape: f32[7,1,128], index: 2, kind: input, shape index: {}]
  %s3 = inlined_call_operand.hbm [shape: f32[2048,128], index: 3, kind: output, shape index: {}]
  %s4 = sld [smem:[#allocation0]]
  $region57: #{tpu_custom_call.1} parent=0
    _
  %s6 = ssub.s32 1, %s4
  %s7 = scalar_select 0, %s6, %s4
  $region1: #{tpu_custom_call.1} parent=0
    #allocation2 [shape = 'u8[262144]{0}', space=vmem, size = 0x40000, scoped, tag = 'input window, operand 0']
    #allocation3 [shape = 's32[2]{0}', space=sflag, size = 0x8, scoped, tag = 'scoped memory for tpu_custom_call.1']
    #allocation4 [shape = 's32[2]{0}', space=sflag, size = 0x8, scoped, tag = 'scoped memory for tpu_custom_call.1']
    #allocation5 [shape = 'u8[229376]{0}', space=vmem, size = 0x38000, scoped, tag = 'input window, operand 1, single buffered']
    #allocation6 [shape = 's32[1]{0}', space=sflag, size = 0x4, scoped, tag = 'scoped memory for tpu_custom_call.1']
    #allocation7 [shape = 'u8[3584]{0}', space=vmem, size = 0x1000, scoped, tag = 'input window, operand 2, single buffered']
    #allocation8 [shape = 'u8[524288]{0}', space=vmem, size = 0x80000, scoped, tag = 'output window, operand 0']
    %8 = vsyncpa [#allocation3], 0
    %s9 = scalar_lea.sflag [#allocation3], 1
    %10 = vsyncpa %s9, 0
    %11 = vsyncpa [#allocation6], 0
    %12 = vsyncpa [#allocation4], 0
    %s13 = scalar_lea.sflag [#allocation4], 1
    %14 = vsyncpa %s13, 0
    loop: start=0, step=1, limit=6
    $region2: #{tpu_custom_call.1} parent=1 // loop_pre_header
      _
    $region3: #{tpu_custom_call.1} parent=1 // loop_header
      %s16 = sphi 0, %s20
      %p17 = scmp.ge.s32.totalorder %s16, 6
      %s26 = sphi 0, %s28
      %s29 = sphi 0, %s26
      %s30 = sphi 0, %s29
      %s46 = sphi 0, %s30
      %s50 = sphi 0, %s50
      %s52 = sphi 0, %s50
      %s53 = sphi 0, %s52
      %s67 = sphi 0, %s53
      %s71 = sphi 0, %s71
      %s73 = sphi 0, %s71
      %s74 = sphi 0, %s73
      %s88 = sphi 0, %s74
      %s94 = sphi 0, %s96
      %s97 = sphi 0, %s94
      %s98 = sphi 0, %s97
      %s114 = sphi 0, %s98
    $region4: #{tpu_custom_call.1} parent=1 // loop_header_branch
      %19 = sbr.rel (%p17) target = $region8
    $region5: #{tpu_custom_call.1} parent=1 // loop_body
      %s21 = ssub.s32 %s16, 1
      %s22 = ssub.s32 %s16, 2
      %s23 = sadd.s32 %s16, 1
      %s24 = ssub.s32 %s16, %s23
      %p25 = scmp.eq.s32.totalorder %s24, 0
      %s27 = sadd.s32 %s26, 1
      %s28 = scalar_select %p25, %s26, %s27
      %p31 = pneg %p25
      %p32 = scmp.eq.s32.totalorder %s16, 3
      %p33 = por %p31, %p32
      %p34 = scmp.ne.s32.totalorder %s26, %s29
      %p35 = scmp.eq.s32.totalorder %s16, 0
      %p36 = por %p34, %p35
      %p37 = scmp.ne.s32.totalorder %s26, %s29
      %p38 = scmp.eq.s32.totalorder %s21, 3
      %p39 = por %p37, %p38
      %p40 = scmp.ne.s32.totalorder %s29, %s30
      %p41 = scmp.eq.s32.totalorder %s21, 0
      %p42 = por %p40, %p41
      %p43 = scmp.ne.s32.totalorder %s29, %s30
      %p44 = scmp.eq.s32.totalorder %s22, 3
      %p45 = por %p43, %p44
      %p47 = scmp.ne.s32.totalorder %s30, %s46
      %p48 = scmp.eq.s32.totalorder %s22, 0
      %p49 = por %p47, %p48
      %s51 = sadd.s32 %s50, 1
      %p54 = scmp.eq.s32.totalorder %s16, 3
      %p55 = scmp.ne.s32.totalorder %s50, %s52
      %p56 = scmp.eq.s32.totalorder %s16, 0
      %p57 = por %p55, %p56
      %p58 = scmp.ne.s32.totalorder %s50, %s52
      %p59 = scmp.eq.s32.totalorder %s21, 3
      %p60 = por %p58, %p59
      %p61 = scmp.ne.s32.totalorder %s52, %s53
      %p62 = scmp.eq.s32.totalorder %s21, 0
      %p63 = por %p61, %p62
      %p64 = scmp.ne.s32.totalorder %s52, %s53
      %p65 = scmp.eq.s32.totalorder %s22, 3
      %p66 = por %p64, %p65
      %p68 = scmp.ne.s32.totalorder %s53, %s67
      %p69 = scmp.eq.s32.totalorder %s22, 0
      %p70 = por %p68, %p69
      %s72 = sadd.s32 %s71, 1
      %p75 = scmp.eq.s32.totalorder %s16, 3
      %p76 = scmp.ne.s32.totalorder %s71, %s73
      %p77 = scmp.eq.s32.totalorder %s16, 0
      %p78 = por %p76, %p77
      %p79 = scmp.ne.s32.totalorder %s71, %s73
      %p80 = scmp.eq.s32.totalorder %s21, 3
      %p81 = por %p79, %p80
      %p82 = scmp.ne.s32.totalorder %s73, %s74
      %p83 = scmp.eq.s32.totalorder %s21, 0
      %p84 = por %p82, %p83
      %p85 = scmp.ne.s32.totalorder %s73, %s74
      %p86 = scmp.eq.s32.totalorder %s22, 3
      %p87 = por %p85, %p86
      %p89 = scmp.ne.s32.totalorder %s74, %s88
      %p90 = scmp.eq.s32.totalorder %s22, 0
      %p91 = por %p89, %p90
      %s92 = ssub.s32 %s16, %s23
      %p93 = scmp.eq.s32.totalorder %s92, 0
      %s95 = sadd.s32 %s94, 1
      %s96 = scalar_select %p93, %s94, %s95
      %p99 = pneg %p93
      %p100 = scmp.eq.s32.totalorder %s16, 3
      %p101 = por %p99, %p100
      %p102 = scmp.ne.s32.totalorder %s94, %s97
      %p103 = scmp.eq.s32.totalorder %s16, 0
      %p104 = por %p102, %p103
      %p105 = scmp.ne.s32.totalorder %s94, %s97
      %p106 = scmp.eq.s32.totalorder %s21, 3
      %p107 = por %p105, %p106
      %p108 = scmp.ne.s32.totalorder %s97, %s98
      %p109 = scmp.eq.s32.totalorder %s21, 0
      %p110 = por %p108, %p109
      %p111 = scmp.ne.s32.totalorder %s97, %s98
      %p112 = scmp.eq.s32.totalorder %s22, 3
      %p113 = por %p111, %p112
      %p115 = scmp.ne.s32.totalorder %s98, %s114
      %p116 = scmp.eq.s32.totalorder %s22, 0
      %p117 = por %p115, %p116
      %p118 = scmp.le.s32.totalorder 1, %s16
      %p119 = scmp.lt.s32.totalorder %s16, 5
      %p120 = pnand %p118, %p119
      %p121 = pneg %p120
      // Predicated region
      $region9: #{tpu_custom_call.1} parent=5 // pred_check
        _
      $region10: #{tpu_custom_call.1} parent=5 // pred_check_branch
        %123 = sbr.rel (%p120) target = $region12
      $region11: #{tpu_custom_call.1} parent=5 // pred_region
        %s124 = ssub.s32 %s16, 1
        // Predicated region
        $region13: #{tpu_custom_call.1} parent=11 // pred_check
          %p125 = pneg %p63
        $region14: #{tpu_custom_call.1} parent=11 // pred_check_branch
          %127 = sbr.rel (%p125) target = $region16
        $region15: #{tpu_custom_call.1} parent=11 // pred_region
          %129 = vsyncadd [#allocation6], 0
          %s130 = sshll.u32 %s1, 4
          %s131 = int_to_ptr.hbm [resolvable:$true] %s130
          %s132 = sshll.u32 [#allocation5], 4
          %s133 = int_to_ptr.vmem [resolvable:$true] %s132
          %138 = dma.hbm_to_vmem [thread:$0]  %s131, 7168, %s133, [#allocation6], 64, 64, 4
        $region16: #{tpu_custom_call.1} parent=11 // pred_fallthru
          _
        // Predicated region
        $region17: #{tpu_custom_call.1} parent=11 // pred_check
          %p139 = pneg %p84
        $region18: #{tpu_custom_call.1} parent=11 // pred_check_branch
          %141 = sbr.rel (%p139) target = $region20
        $region19: #{tpu_custom_call.1} parent=11 // pred_region
          %143 = vsyncadd [#allocation6], 0
          %s144 = sshll.u32 %s2, 4
          %s145 = int_to_ptr.hbm [resolvable:$true] %s144
          %s146 = sshll.u32 [#allocation7], 4
          %s147 = int_to_ptr.vmem [resolvable:$true] %s146
          %152 = dma.hbm_to_vmem [thread:$0]  %s145, 112, %s147, [#allocation6], 16, 16, 1
        $region20: #{tpu_custom_call.1} parent=11 // pred_fallthru
          _
      $region12: #{tpu_custom_call.1} parent=5 // pred_fallthru
        _
      %p153 = scmp.lt.s32.totalorder %s16, 4
      // Predicated region
      $region21: #{tpu_custom_call.1} parent=5 // pred_check
        %p154 = pneg %p153
      $region22: #{tpu_custom_call.1} parent=5 // pred_check_branch
        %156 = sbr.rel (%p154) target = $region24
      $region23: #{tpu_custom_call.1} parent=5 // pred_region
        // Predicated region
        $region25: #{tpu_custom_call.1} parent=23 // pred_check
          %p157 = pneg %p36
        $region26: #{tpu_custom_call.1} parent=23 // pred_check_branch
          %159 = sbr.rel (%p157) target = $region28
        $region27: #{tpu_custom_call.1} parent=23 // pred_region
          %s160 = sand.u32 %s26, 1
          %s161 = scalar_lea.sflag [#allocation3], %s160
          %s162 = sand.u32 %s26, 1
          %s163 = smul.addr %s162, 256
          %s164 = scalar_lea.vmem [#allocation2], %s163
          %s165 = smul.u32 64, %s16
          %167 = vsyncadd %s161, 0
          %s168 = smul.addr %s165, 4
          %s169 = scalar_lea.hbm %s0, %s168
          %s170 = sshll.u32 %s169, 4
          %s171 = int_to_ptr.hbm [resolvable:$true] %s170
          %s172 = sshll.u32 %s164, 4
          %s173 = int_to_ptr.vmem [resolvable:$true] %s172
          %178 = dma.hbm_to_vmem [thread:$0]  %s171, 4096, %s173, %s161, 64, 64, 4
        $region28: #{tpu_custom_call.1} parent=23 // pred_fallthru
          _
      $region24: #{tpu_custom_call.1} parent=5 // pred_fallthru
        _
      %p179 = scmp.le.s32.totalorder 1, %s16
      %p180 = scmp.lt.s32.totalorder %s16, 5
      %p181 = pnand %p179, %p180
      %p182 = pneg %p181
      // Predicated region
      $region29: #{tpu_custom_call.1} parent=5 // pred_check
        _
      $region30: #{tpu_custom_call.1} parent=5 // pred_check_branch
        %184 = sbr.rel (%p181) target = $region32
      $region31: #{tpu_custom_call.1} parent=5 // pred_region
        %s185 = ssub.s32 %s16, 1
        %s186 = sand.u32 %s29, 1
        %s187 = scalar_lea.sflag [#allocation3], %s186
        %s188 = sand.u32 %s29, 1
        %s189 = smul.addr %s188, 256
        %s190 = scalar_lea.vmem [#allocation2], %s189
        // Predicated region
        $region33: #{tpu_custom_call.1} parent=31 // pred_check
          %p191 = pneg %p42
        $region34: #{tpu_custom_call.1} parent=31 // pred_check_branch
          %193 = sbr.rel (%p191) target = $region36
        $region35: #{tpu_custom_call.1} parent=31 // pred_region
          %195 = dma.done %s187, 4096
        $region36: #{tpu_custom_call.1} parent=31 // pred_fallthru
          _
        // Predicated region
        $region37: #{tpu_custom_call.1} parent=31 // pred_check
          %p196 = pneg %p63
        $region38: #{tpu_custom_call.1} parent=31 // pred_check_branch
          %198 = sbr.rel (%p196) target = $region40
        $region39: #{tpu_custom_call.1} parent=31 // pred_region
          %200 = dma.done [#allocation6], 7168
        $region40: #{tpu_custom_call.1} parent=31 // pred_fallthru
          _
        // Predicated region
        $region41: #{tpu_custom_call.1} parent=31 // pred_check
          %p201 = pneg %p84
        $region42: #{tpu_custom_call.1} parent=31 // pred_check_branch
          %203 = sbr.rel (%p201) target = $region44
        $region43: #{tpu_custom_call.1} parent=31 // pred_region
          %205 = dma.done [#allocation6], 112
        $region44: #{tpu_custom_call.1} parent=31 // pred_fallthru
          _
        %s206 = sand.u32 %s29, 1
        %s207 = scalar_lea.sflag [#allocation3], %s206
        %s208 = sand.u32 %s29, 1
        %s209 = smul.addr %s208, 256
        %s210 = scalar_lea.vmem [#allocation2], %s209
        %p211 = pneg %p42
        %p212 = pneg %p39
        %p213 = pneg %p63
        %p214 = pneg %p60
        %p215 = pneg %p84
        %p216 = pneg %p81
        %p217 = pneg %p110
        %p218 = pneg %p107
        %s219 = sand.u32 %s97, 1
        %s220 = scalar_lea.sflag [#allocation4], %s219
        %s221 = sand.u32 %s97, 1
        %s222 = smul.addr %s221, 512
        %s223 = scalar_lea.vmem [#allocation8], %s222
        %s224 = smul.u32 64, %s21
        %s225 = smul.u32 64, %s21
        %v226 = vld [vmem:[%s190] sm:$0xf]
        %v227 = vld [vmem:[%s190 + $0x4] sm:$0xf]
        %v228 = vld [vmem:[%s190 + $0x8] sm:$0xf]
        %v229 = vld [vmem:[%s190 + $0xc] sm:$0xf]
        %v230 = vld [vmem:[%s190 + $0x10] sm:$0xf]
        %v231 = vld [vmem:[%s190 + $0x14] sm:$0xf]
        %v232 = vld [vmem:[%s190 + $0x18] sm:$0xf]
        %v233 = vld [vmem:[%s190 + $0x1c] sm:$0xf]
        %v234 = vld [vmem:[%s190 + $0x20] sm:$0xf]
        %v235 = vld [vmem:[%s190 + $0x24] sm:$0xf]
        %v236 = vld [vmem:[%s190 + $0x28] sm:$0xf]
        %v237 = vld [vmem:[%s190 + $0x2c] sm:$0xf]
        %v238 = vld [vmem:[%s190 + $0x30] sm:$0xf]
        %v239 = vld [vmem:[%s190 + $0x34] sm:$0xf]
        %v240 = vld [vmem:[%s190 + $0x38] sm:$0xf]
        %v241 = vld [vmem:[%s190 + $0x3c] sm:$0xf]
        %v242 = vld [vmem:[%s190 + $0x40] sm:$0xf]
        %v243 = vld [vmem:[%s190 + $0x44] sm:$0xf]
        %v244 = vld [vmem:[%s190 + $0x48] sm:$0xf]
        %v245 = vld [vmem:[%s190 + $0x4c] sm:$0xf]
        %v246 = vld [vmem:[%s190 + $0x50] sm:$0xf]
        %v247 = vld [vmem:[%s190 + $0x54] sm:$0xf]
        %v248 = vld [vmem:[%s190 + $0x58] sm:$0xf]
        %v249 = vld [vmem:[%s190 + $0x5c] sm:$0xf]
        %v250 = vld [vmem:[%s190 + $0x60] sm:$0xf]
        %v251 = vld [vmem:[%s190 + $0x64] sm:$0xf]
        %v252 = vld [vmem:[%s190 + $0x68] sm:$0xf]
        %v253 = vld [vmem:[%s190 + $0x6c] sm:$0xf]
        %v254 = vld [vmem:[%s190 + $0x70] sm:$0xf]
        %v255 = vld [vmem:[%s190 + $0x74] sm:$0xf]
        %v256 = vld [vmem:[%s190 + $0x78] sm:$0xf]
        %v257 = vld [vmem:[%s190 + $0x7c] sm:$0xf]
        %v258 = vld [vmem:[%s190 + $0x80] sm:$0xf]
        %v259 = vld [vmem:[%s190 + $0x84] sm:$0xf]
        %v260 = vld [vmem:[%s190 + $0x88] sm:$0xf]
        %v261 = vld [vmem:[%s190 + $0x8c] sm:$0xf]
        %v262 = vld [vmem:[%s190 + $0x90] sm:$0xf]
        %v263 = vld [vmem:[%s190 + $0x94] sm:$0xf]
        %v264 = vld [vmem:[%s190 + $0x98] sm:$0xf]
        %v265 = vld [vmem:[%s190 + $0x9c] sm:$0xf]
        %v266 = vld [vmem:[%s190 + $0xa0] sm:$0xf]
        %v267 = vld [vmem:[%s190 + $0xa4] sm:$0xf]
        %v268 = vld [vmem:[%s190 + $0xa8] sm:$0xf]
        %v269 = vld [vmem:[%s190 + $0xac] sm:$0xf]
        %v270 = vld [vmem:[%s190 + $0xb0] sm:$0xf]
        %v271 = vld [vmem:[%s190 + $0xb4] sm:$0xf]
        %v272 = vld [vmem:[%s190 + $0xb8] sm:$0xf]
        %v273 = vld [vmem:[%s190 + $0xbc] sm:$0xf]
        %v274 = vld [vmem:[%s190 + $0xc0] sm:$0xf]
        %v275 = vld [vmem:[%s190 + $0xc4] sm:$0xf]
        %v276 = vld [vmem:[%s190 + $0xc8] sm:$0xf]
        %v277 = vld [vmem:[%s190 + $0xcc] sm:$0xf]
        %v278 = vld [vmem:[%s190 + $0xd0] sm:$0xf]
        %v279 = vld [vmem:[%s190 + $0xd4] sm:$0xf]
        %v280 = vld [vmem:[%s190 + $0xd8] sm:$0xf]
        %v281 = vld [vmem:[%s190 + $0xdc] sm:$0xf]
        %v282 = vld [vmem:[%s190 + $0xe0] sm:$0xf]
        %v283 = vld [vmem:[%s190 + $0xe4] sm:$0xf]
        %v284 = vld [vmem:[%s190 + $0xe8] sm:$0xf]
        %v285 = vld [vmem:[%s190 + $0xec] sm:$0xf]
        %v286 = vld [vmem:[%s190 + $0xf0] sm:$0xf]
        %v287 = vld [vmem:[%s190 + $0xf4] sm:$0xf]
        %v288 = vld [vmem:[%s190 + $0xf8] sm:$0xf]
        %v289 = vld [vmem:[%s190 + $0xfc] sm:$0xf]
        %v290 = vld [vmem:[#allocation5] sm:$0xf]
        %v291 = vld [vmem:[#allocation5 + $0x4] sm:$0xf]
        %v292 = vld [vmem:[#allocation5 + $0x8] sm:$0xf]
        %v293 = vld [vmem:[#allocation5 + $0xc] sm:$0xf]
        %v294 = vld [vmem:[#allocation5 + $0x10] sm:$0xf]
        %v295 = vld [vmem:[#allocation5 + $0x14] sm:$0xf]
        %v296 = vld [vmem:[#allocation5 + $0x18] sm:$0xf]
        %v297 = vld [vmem:[#allocation5 + $0x1c] sm:$0xf]
        %v298 = vld [vmem:[#allocation5 + $0x20] sm:$0xf]
        %v299 = vld [vmem:[#allocation5 + $0x24] sm:$0xf]
        %v300 = vld [vmem:[#allocation5 + $0x28] sm:$0xf]
        %v301 = vld [vmem:[#allocation5 + $0x2c] sm:$0xf]
        %v302 = vld [vmem:[#allocation5 + $0x30] sm:$0xf]
        %v303 = vld [vmem:[#allocation5 + $0x34] sm:$0xf]
        %v304 = vld [vmem:[#allocation5 + $0x38] sm:$0xf]
        %v305 = vld [vmem:[#allocation5 + $0x3c] sm:$0xf]
        %v306 = vld [vmem:[#allocation7] sm:$0x1]
        %v308 = vperm.slane %v306, 0
        %v374 = vunpack.c.l.b16 %v226
        %v375 = vunpack.c.l.b16 %v227
        %v376 = vunpack.c.l.b16 %v228
        %v377 = vunpack.c.l.b16 %v229
        %v378 = vunpack.c.l.b16 %v230
        %v379 = vunpack.c.l.b16 %v231
        %v380 = vunpack.c.l.b16 %v232
        %v381 = vunpack.c.l.b16 %v233
        %v382 = vunpack.c.l.b16 %v234
        %v383 = vunpack.c.l.b16 %v235
        %v384 = vunpack.c.l.b16 %v236
        %v385 = vunpack.c.l.b16 %v237
        %v386 = vunpack.c.l.b16 %v238
        %v387 = vunpack.c.l.b16 %v239
        %v388 = vunpack.c.l.b16 %v240
        %v389 = vunpack.c.l.b16 %v241
        %v390 = vunpack.c.l.b16 %v242
        %v391 = vunpack.c.l.b16 %v243
        %v392 = vunpack.c.l.b16 %v244
        %v393 = vunpack.c.l.b16 %v245
        %v394 = vunpack.c.l.b16 %v246
        %v395 = vunpack.c.l.b16 %v247
        %v396 = vunpack.c.l.b16 %v248
        %v397 = vunpack.c.l.b16 %v249
        %v398 = vunpack.c.l.b16 %v250
        %v399 = vunpack.c.l.b16 %v251
        %v400 = vunpack.c.l.b16 %v252
        %v401 = vunpack.c.l.b16 %v253
        %v402 = vunpack.c.l.b16 %v254
        %v403 = vunpack.c.l.b16 %v255
        %v404 = vunpack.c.l.b16 %v256
        %v405 = vunpack.c.l.b16 %v257
        %v406 = vunpack.c.l.b16 %v258
        %v407 = vunpack.c.l.b16 %v259
        %v408 = vunpack.c.l.b16 %v260
        %v409 = vunpack.c.l.b16 %v261
        %v410 = vunpack.c.l.b16 %v262
        %v411 = vunpack.c.l.b16 %v263
        %v412 = vunpack.c.l.b16 %v264
        %v413 = vunpack.c.l.b16 %v265
        %v414 = vunpack.c.l.b16 %v266
        %v415 = vunpack.c.l.b16 %v267
        %v416 = vunpack.c.l.b16 %v268
        %v417 = vunpack.c.l.b16 %v269
        %v418 = vunpack.c.l.b16 %v270
        %v419 = vunpack.c.l.b16 %v271
        %v420 = vunpack.c.l.b16 %v272
        %v421 = vunpack.c.l.b16 %v273
        %v422 = vunpack.c.l.b16 %v274
        %v423 = vunpack.c.l.b16 %v275
        %v424 = vunpack.c.l.b16 %v276
        %v425 = vunpack.c.l.b16 %v277
        %v426 = vunpack.c.l.b16 %v278
        %v427 = vunpack.c.l.b16 %v279
        %v428 = vunpack.c.l.b16 %v280
        %v429 = vunpack.c.l.b16 %v281
        %v430 = vunpack.c.l.b16 %v282
        %v431 = vunpack.c.l.b16 %v283
        %v432 = vunpack.c.l.b16 %v284
        %v433 = vunpack.c.l.b16 %v285
        %v434 = vunpack.c.l.b16 %v286
        %v435 = vunpack.c.l.b16 %v287
        %v436 = vunpack.c.l.b16 %v288
        %v437 = vunpack.c.l.b16 %v289
        %v438 = vpack.c.b16 %v375, %v374
        %v439 = vpack.c.b16 %v377, %v376
        %v440 = vpack.c.b16 %v379, %v378
        %v441 = vpack.c.b16 %v381, %v380
        %v442 = vpack.c.b16 %v383, %v382
        %v443 = vpack.c.b16 %v385, %v384
        %v444 = vpack.c.b16 %v387, %v386
        %v445 = vpack.c.b16 %v389, %v388
        %v446 = vpack.c.b16 %v391, %v390
        %v447 = vpack.c.b16 %v393, %v392
        %v448 = vpack.c.b16 %v395, %v394
        %v449 = vpack.c.b16 %v397, %v396
        %v450 = vpack.c.b16 %v399, %v398
        %v451 = vpack.c.b16 %v401, %v400
        %v452 = vpack.c.b16 %v403, %v402
        %v453 = vpack.c.b16 %v405, %v404
        %v454 = vpack.c.b16 %v407, %v406
        %v455 = vpack.c.b16 %v409, %v408
        %v456 = vpack.c.b16 %v411, %v410
        %v457 = vpack.c.b16 %v413, %v412
        %v458 = vpack.c.b16 %v415, %v414
        %v459 = vpack.c.b16 %v417, %v416
        %v460 = vpack.c.b16 %v419, %v418
        %v461 = vpack.c.b16 %v421, %v420
        %v462 = vpack.c.b16 %v423, %v422
        %v463 = vpack.c.b16 %v425, %v424
        %v464 = vpack.c.b16 %v427, %v426
        %v465 = vpack.c.b16 %v429, %v428
        %v466 = vpack.c.b16 %v431, %v430
        %v467 = vpack.c.b16 %v433, %v432
        %v468 = vpack.c.b16 %v435, %v434
        %v469 = vpack.c.b16 %v437, %v436
        %v518 = vunpack.c.l.b16 %v290
        %v519 = vunpack.c.l.b16 %v291
        %v520 = vunpack.c.l.b16 %v292
        %v521 = vunpack.c.l.b16 %v293
        %v522 = vunpack.c.l.b16 %v294
        %v523 = vunpack.c.l.b16 %v295
        %v524 = vunpack.c.l.b16 %v296
        %v525 = vunpack.c.l.b16 %v297
        %v526 = vunpack.c.l.b16 %v298
        %v527 = vunpack.c.l.b16 %v299
        %v528 = vunpack.c.l.b16 %v300
        %v529 = vunpack.c.l.b16 %v301
        %v530 = vunpack.c.l.b16 %v302
        %v531 = vunpack.c.l.b16 %v303
        %v532 = vunpack.c.l.b16 %v304
        %v533 = vunpack.c.l.b16 %v305
        %v534 = vpack.c.b16 %v519, %v518
        %v535 = vpack.c.b16 %v521, %v520
        %v536 = vpack.c.b16 %v523, %v522
        %v537 = vpack.c.b16 %v525, %v524
        %v538 = vpack.c.b16 %v527, %v526
        %v539 = vpack.c.b16 %v529, %v528
        %v540 = vpack.c.b16 %v531, %v530
        %v541 = vpack.c.b16 %v533, %v532
        %550 = vmatpush.bf16.msra.mxu0 %v541
        %551 = vmatpush.bf16.msra.mxu0 %v540
        %552 = vmatpush.bf16.msra.mxu0 %v539
        %553 = vmatpush.bf16.msra.mxu0 %v538
        %554 = vmatpush.bf16.msra.mxu0 %v537
        %555 = vmatpush.bf16.msra.mxu0 %v536
        %556 = vmatpush.bf16.msra.mxu0 %v535
        %557 = vmatpush.bf16.msra.mxu0 %v534
        %558 = vmatmul.bf16.gmra.mxu0 %v438
        %v559 = vpop.f32.mrf.mxu0
        %v560 = vadd.f32 %v308, %v559
        %v561 = vpop.f32.mrf.mxu0
        %v562 = vadd.f32 %v308, %v561
        %563 = vmatmul.bf16.gmra.mxu0 %v439
        %v564 = vpop.f32.mrf.mxu0
        %v565 = vadd.f32 %v308, %v564
        %v566 = vpop.f32.mrf.mxu0
        %v567 = vadd.f32 %v308, %v566
        %568 = vmatmul.bf16.gmra.mxu0 %v440
        %v569 = vpop.f32.mrf.mxu0
        %v570 = vadd.f32 %v308, %v569
        %v571 = vpop.f32.mrf.mxu0
        %v572 = vadd.f32 %v308, %v571
        %573 = vmatmul.bf16.gmra.mxu0 %v441
        %v574 = vpop.f32.mrf.mxu0
        %v575 = vadd.f32 %v308, %v574
        %v576 = vpop.f32.mrf.mxu0
        %v577 = vadd.f32 %v308, %v576
        %578 = vmatmul.bf16.gmra.mxu0 %v442
        %v579 = vpop.f32.mrf.mxu0
        %v580 = vadd.f32 %v308, %v579
        %v581 = vpop.f32.mrf.mxu0
        %v582 = vadd.f32 %v308, %v581
        %583 = vmatmul.bf16.gmra.mxu0 %v443
        %v584 = vpop.f32.mrf.mxu0
        %v585 = vadd.f32 %v308, %v584
        %v586 = vpop.f32.mrf.mxu0
        %v587 = vadd.f32 %v308, %v586
        %588 = vmatmul.bf16.gmra.mxu0 %v444
        %v589 = vpop.f32.mrf.mxu0
        %v590 = vadd.f32 %v308, %v589
        %v591 = vpop.f32.mrf.mxu0
        %v592 = vadd.f32 %v308, %v591
        %593 = vmatmul.bf16.gmra.mxu0 %v445
        %v594 = vpop.f32.mrf.mxu0
        %v595 = vadd.f32 %v308, %v594
        %v596 = vpop.f32.mrf.mxu0
        %v597 = vadd.f32 %v308, %v596
        %598 = vmatmul.bf16.gmra.mxu0 %v446
        %v599 = vpop.f32.mrf.mxu0
        %v600 = vadd.f32 %v308, %v599
        %v601 = vpop.f32.mrf.mxu0
        %v602 = vadd.f32 %v308, %v601
        %603 = vmatmul.bf16.gmra.mxu0 %v447
        %v604 = vpop.f32.mrf.mxu0
        %v605 = vadd.f32 %v308, %v604
        %v606 = vpop.f32.mrf.mxu0
        %v607 = vadd.f32 %v308, %v606
        %608 = vmatmul.bf16.gmra.mxu0 %v448
        %v609 = vpop.f32.mrf.mxu0
        %v610 = vadd.f32 %v308, %v609
        %v611 = vpop.f32.mrf.mxu0
        %v612 = vadd.f32 %v308, %v611
        %613 = vmatmul.bf16.gmra.mxu0 %v449
        %v614 = vpop.f32.mrf.mxu0
        %v615 = vadd.f32 %v308, %v614
        %v616 = vpop.f32.mrf.mxu0
        %v617 = vadd.f32 %v308, %v616
        %618 = vmatmul.bf16.gmra.mxu0 %v450
        %v619 = vpop.f32.mrf.mxu0
        %v620 = vadd.f32 %v308, %v619
        %v621 = vpop.f32.mrf.mxu0
        %v622 = vadd.f32 %v308, %v621
        %623 = vmatmul.bf16.gmra.mxu0 %v451
        %v624 = vpop.f32.mrf.mxu0
        %v625 = vadd.f32 %v308, %v624
        %v626 = vpop.f32.mrf.mxu0
        %v627 = vadd.f32 %v308, %v626
        %628 = vmatmul.bf16.gmra.mxu0 %v452
        %v629 = vpop.f32.mrf.mxu0
        %v630 = vadd.f32 %v308, %v629
        %v631 = vpop.f32.mrf.mxu0
        %v632 = vadd.f32 %v308, %v631
        %633 = vmatmul.bf16.gmra.mxu0 %v453
        %v634 = vpop.f32.mrf.mxu0
        %v635 = vadd.f32 %v308, %v634
        %v636 = vpop.f32.mrf.mxu0
        %v637 = vadd.f32 %v308, %v636
        %638 = vmatmul.bf16.gmra.mxu0 %v454
        %v639 = vpop.f32.mrf.mxu0
        %v640 = vadd.f32 %v308, %v639
        %v641 = vpop.f32.mrf.mxu0
        %v642 = vadd.f32 %v308, %v641
        %643 = vmatmul.bf16.gmra.mxu0 %v455
        %v644 = vpop.f32.mrf.mxu0
        %v645 = vadd.f32 %v308, %v644
        %v646 = vpop.f32.mrf.mxu0
        %v647 = vadd.f32 %v308, %v646
        %648 = vmatmul.bf16.gmra.mxu0 %v456
        %v649 = vpop.f32.mrf.mxu0
        %v650 = vadd.f32 %v308, %v649
        %v651 = vpop.f32.mrf.mxu0
        %v652 = vadd.f32 %v308, %v651
        %653 = vmatmul.bf16.gmra.mxu0 %v457
        %v654 = vpop.f32.mrf.mxu0
        %v655 = vadd.f32 %v308, %v654
        %v656 = vpop.f32.mrf.mxu0
        %v657 = vadd.f32 %v308, %v656
        %658 = vmatmul.bf16.gmra.mxu0 %v458
        %v659 = vpop.f32.mrf.mxu0
        %v660 = vadd.f32 %v308, %v659
        %v661 = vpop.f32.mrf.mxu0
        %v662 = vadd.f32 %v308, %v661
        %663 = vmatmul.bf16.gmra.mxu0 %v459
        %v664 = vpop.f32.mrf.mxu0
        %v665 = vadd.f32 %v308, %v664
        %v666 = vpop.f32.mrf.mxu0
        %v667 = vadd.f32 %v308, %v666
        %668 = vmatmul.bf16.gmra.mxu0 %v460
        %v669 = vpop.f32.mrf.mxu0
        %v670 = vadd.f32 %v308, %v669
        %v671 = vpop.f32.mrf.mxu0
        %v672 = vadd.f32 %v308, %v671
        %673 = vmatmul.bf16.gmra.mxu0 %v461
        %v674 = vpop.f32.mrf.mxu0
        %v675 = vadd.f32 %v308, %v674
        %v676 = vpop.f32.mrf.mxu0
        %v677 = vadd.f32 %v308, %v676
        %678 = vmatmul.bf16.gmra.mxu0 %v462
        %v679 = vpop.f32.mrf.mxu0
        %v680 = vadd.f32 %v308, %v679
        %v681 = vpop.f32.mrf.mxu0
        %v682 = vadd.f32 %v308, %v681
        %683 = vmatmul.bf16.gmra.mxu0 %v463
        %v684 = vpop.f32.mrf.mxu0
        %v685 = vadd.f32 %v308, %v684
        %v686 = vpop.f32.mrf.mxu0
        %v687 = vadd.f32 %v308, %v686
        %688 = vmatmul.bf16.gmra.mxu0 %v464
        %v689 = vpop.f32.mrf.mxu0
        %v690 = vadd.f32 %v308, %v689
        %v691 = vpop.f32.mrf.mxu0
        %v692 = vadd.f32 %v308, %v691
        %693 = vmatmul.bf16.gmra.mxu0 %v465
        %v694 = vpop.f32.mrf.mxu0
        %v695 = vadd.f32 %v308, %v694
        %v696 = vpop.f32.mrf.mxu0
        %v697 = vadd.f32 %v308, %v696
        %698 = vmatmul.bf16.gmra.mxu0 %v466
        %v699 = vpop.f32.mrf.mxu0
        %v700 = vadd.f32 %v308, %v699
        %v701 = vpop.f32.mrf.mxu0
        %v702 = vadd.f32 %v308, %v701
        %703 = vmatmul.bf16.gmra.mxu0 %v467
        %v704 = vpop.f32.mrf.mxu0
        %v705 = vadd.f32 %v308, %v704
        %v706 = vpop.f32.mrf.mxu0
        %v707 = vadd.f32 %v308, %v706
        %708 = vmatmul.bf16.gmra.mxu0 %v468
        %v709 = vpop.f32.mrf.mxu0
        %v710 = vadd.f32 %v308, %v709
        %v711 = vpop.f32.mrf.mxu0
        %v712 = vadd.f32 %v308, %v711
        %713 = vmatmul.bf16.gmra.mxu0 %v469
        %v714 = vpop.f32.mrf.mxu0
        %v715 = vadd.f32 %v308, %v714
        %v716 = vpop.f32.mrf.mxu0
        %v717 = vadd.f32 %v308, %v716
        %718 = vdwg.mxu0
        %v719 = vmul.f32 %v560, 0.02
        %v720 = vmul.f32 %v562, 0.02
        %v721 = vmul.f32 %v565, 0.02
        %v722 = vmul.f32 %v567, 0.02
        %v723 = vmul.f32 %v570, 0.02
        %v724 = vmul.f32 %v572, 0.02
        %v725 = vmul.f32 %v575, 0.02
        %v726 = vmul.f32 %v577, 0.02
        %v727 = vmul.f32 %v580, 0.02
        %v728 = vmul.f32 %v582, 0.02
        %v729 = vmul.f32 %v585, 0.02
        %v730 = vmul.f32 %v587, 0.02
        %v731 = vmul.f32 %v590, 0.02
        %v732 = vmul.f32 %v592, 0.02
        %v733 = vmul.f32 %v595, 0.02
        %v734 = vmul.f32 %v597, 0.02
        %v735 = vmul.f32 %v600, 0.02
        %v736 = vmul.f32 %v602, 0.02
        %v737 = vmul.f32 %v605, 0.02
        %v738 = vmul.f32 %v607, 0.02
        %v739 = vmul.f32 %v610, 0.02
        %v740 = vmul.f32 %v612, 0.02
        %v741 = vmul.f32 %v615, 0.02
        %v742 = vmul.f32 %v617, 0.02
        %v743 = vmul.f32 %v620, 0.02
        %v744 = vmul.f32 %v622, 0.02
        %v745 = vmul.f32 %v625, 0.02
        %v746 = vmul.f32 %v627, 0.02
        %v747 = vmul.f32 %v630, 0.02
        %v748 = vmul.f32 %v632, 0.02
        %v749 = vmul.f32 %v635, 0.02
        %v750 = vmul.f32 %v637, 0.02
        %v751 = vmul.f32 %v640, 0.02
        %v752 = vmul.f32 %v642, 0.02
        %v753 = vmul.f32 %v645, 0.02
        %v754 = vmul.f32 %v647, 0.02
        %v755 = vmul.f32 %v650, 0.02
        %v756 = vmul.f32 %v652, 0.02
        %v757 = vmul.f32 %v655, 0.02
        %v758 = vmul.f32 %v657, 0.02
        %v759 = vmul.f32 %v660, 0.02
        %v760 = vmul.f32 %v662, 0.02
        %v761 = vmul.f32 %v665, 0.02
        %v762 = vmul.f32 %v667, 0.02
        %v763 = vmul.f32 %v670, 0.02
        %v764 = vmul.f32 %v672, 0.02
        %v765 = vmul.f32 %v675, 0.02
        %v766 = vmul.f32 %v677, 0.02
        %v767 = vmul.f32 %v680, 0.02
        %v768 = vmul.f32 %v682, 0.02
        %v769 = vmul.f32 %v685, 0.02
        %v770 = vmul.f32 %v687, 0.02
        %v771 = vmul.f32 %v690, 0.02
        %v772 = vmul.f32 %v692, 0.02
        %v773 = vmul.f32 %v695, 0.02
        %v774 = vmul.f32 %v697, 0.02
        %v775 = vmul.f32 %v700, 0.02
        %v776 = vmul.f32 %v702, 0.02
        %v777 = vmul.f32 %v705, 0.02
        %v778 = vmul.f32 %v707, 0.02
        %v779 = vmul.f32 %v710, 0.02
        %v780 = vmul.f32 %v712, 0.02
        %v781 = vmul.f32 %v715, 0.02
        %v782 = vmul.f32 %v717, 0.02
        %v783 = vmax.f32 %v560, %v719
        %v784 = vmax.f32 %v562, %v720
        %v785 = vmax.f32 %v565, %v721
        %v786 = vmax.f32 %v567, %v722
        %v787 = vmax.f32 %v570, %v723
        %v788 = vmax.f32 %v572, %v724
        %v789 = vmax.f32 %v575, %v725
        %v790 = vmax.f32 %v577, %v726
        %v791 = vmax.f32 %v580, %v727
        %v792 = vmax.f32 %v582, %v728
        %v793 = vmax.f32 %v585, %v729
        %v794 = vmax.f32 %v587, %v730
        %v795 = vmax.f32 %v590, %v731
        %v796 = vmax.f32 %v592, %v732
        %v797 = vmax.f32 %v595, %v733
        %v798 = vmax.f32 %v597, %v734
        %v799 = vmax.f32 %v600, %v735
        %v800 = vmax.f32 %v602, %v736
        %v801 = vmax.f32 %v605, %v737
        %v802 = vmax.f32 %v607, %v738
        %v803 = vmax.f32 %v610, %v739
        %v804 = vmax.f32 %v612, %v740
        %v805 = vmax.f32 %v615, %v741
        %v806 = vmax.f32 %v617, %v742
        %v807 = vmax.f32 %v620, %v743
        %v808 = vmax.f32 %v622, %v744
        %v809 = vmax.f32 %v625, %v745
        %v810 = vmax.f32 %v627, %v746
        %v811 = vmax.f32 %v630, %v747
        %v812 = vmax.f32 %v632, %v748
        %v813 = vmax.f32 %v635, %v749
        %v814 = vmax.f32 %v637, %v750
        %v815 = vmax.f32 %v640, %v751
        %v816 = vmax.f32 %v642, %v752
        %v817 = vmax.f32 %v645, %v753
        %v818 = vmax.f32 %v647, %v754
        %v819 = vmax.f32 %v650, %v755
        %v820 = vmax.f32 %v652, %v756
        %v821 = vmax.f32 %v655, %v757
        %v822 = vmax.f32 %v657, %v758
        %v823 = vmax.f32 %v660, %v759
        %v824 = vmax.f32 %v662, %v760
        %v825 = vmax.f32 %v665, %v761
        %v826 = vmax.f32 %v667, %v762
        %v827 = vmax.f32 %v670, %v763
        %v828 = vmax.f32 %v672, %v764
        %v829 = vmax.f32 %v675, %v765
        %v830 = vmax.f32 %v677, %v766
        %v831 = vmax.f32 %v680, %v767
        %v832 = vmax.f32 %v682, %v768
        %v833 = vmax.f32 %v685, %v769
        %v834 = vmax.f32 %v687, %v770
        %v835 = vmax.f32 %v690, %v771
        %v836 = vmax.f32 %v692, %v772
        %v837 = vmax.f32 %v695, %v773
        %v838 = vmax.f32 %v697, %v774
        %v839 = vmax.f32 %v700, %v775
        %v840 = vmax.f32 %v702, %v776
        %v841 = vmax.f32 %v705, %v777
        %v842 = vmax.f32 %v707, %v778
        %v843 = vmax.f32 %v710, %v779
        %v844 = vmax.f32 %v712, %v780
        %v845 = vmax.f32 %v715, %v781
        %v846 = vmax.f32 %v717, %v782
        %v847 = vpack.c.bf16 %v784, %v783
        %v848 = vpack.c.bf16 %v786, %v785
        %v849 = vpack.c.bf16 %v788, %v787
        %v850 = vpack.c.bf16 %v790, %v789
        %v851 = vpack.c.bf16 %v792, %v791
        %v852 = vpack.c.bf16 %v794, %v793
        %v853 = vpack.c.bf16 %v796, %v795
        %v854 = vpack.c.bf16 %v798, %v797
        %v855 = vpack.c.bf16 %v800, %v799
        %v856 = vpack.c.bf16 %v802, %v801
        %v857 = vpack.c.bf16 %v804, %v803
        %v858 = vpack.c.bf16 %v806, %v805
        %v859 = vpack.c.bf16 %v808, %v807
        %v860 = vpack.c.bf16 %v810, %v809
        %v861 = vpack.c.bf16 %v812, %v811
        %v862 = vpack.c.bf16 %v814, %v813
        %v863 = vpack.c.bf16 %v816, %v815
        %v864 = vpack.c.bf16 %v818, %v817
        %v865 = vpack.c.bf16 %v820, %v819
        %v866 = vpack.c.bf16 %v822, %v821
        %v867 = vpack.c.bf16 %v824, %v823
        %v868 = vpack.c.bf16 %v826, %v825
        %v869 = vpack.c.bf16 %v828, %v827
        %v870 = vpack.c.bf16 %v830, %v829
        %v871 = vpack.c.bf16 %v832, %v831
        %v872 = vpack.c.bf16 %v834, %v833
        %v873 = vpack.c.bf16 %v836, %v835
        %v874 = vpack.c.bf16 %v838, %v837
        %v875 = vpack.c.bf16 %v840, %v839
        %v876 = vpack.c.bf16 %v842, %v841
        %v877 = vpack.c.bf16 %v844, %v843
        %v878 = vpack.c.bf16 %v846, %v845
        %s879 = scalar_lea.vmem [#allocation5], 64
        %v880 = vld [vmem:[%s879] sm:$0xf]
        %v881 = vld [vmem:[%s879 + $0x4] sm:$0xf]
        %v882 = vld [vmem:[%s879 + $0x8] sm:$0xf]
        %v883 = vld [vmem:[%s879 + $0xc] sm:$0xf]
        %v884 = vld [vmem:[%s879 + $0x10] sm:$0xf]
        %v885 = vld [vmem:[%s879 + $0x14] sm:$0xf]
        %v886 = vld [vmem:[%s879 + $0x18] sm:$0xf]
        %v887 = vld [vmem:[%s879 + $0x1c] sm:$0xf]
        %v888 = vld [vmem:[%s879 + $0x20] sm:$0xf]
        %v889 = vld [vmem:[%s879 + $0x24] sm:$0xf]
        %v890 = vld [vmem:[%s879 + $0x28] sm:$0xf]
        %v891 = vld [vmem:[%s879 + $0x2c] sm:$0xf]
        %v892 = vld [vmem:[%s879 + $0x30] sm:$0xf]
        %v893 = vld [vmem:[%s879 + $0x34] sm:$0xf]
        %v894 = vld [vmem:[%s879 + $0x38] sm:$0xf]
        %v895 = vld [vmem:[%s879 + $0x3c] sm:$0xf]
        %s896 = scalar_lea.vmem [#allocation7], 1
        %v897 = vld [vmem:[%s896] sm:$0x1]
        %v899 = vperm.slane %v897, 0
        %v917 = vunpack.c.l.b16 %v880
        %v918 = vunpack.c.l.b16 %v881
        %v919 = vunpack.c.l.b16 %v882
        %v920 = vunpack.c.l.b16 %v883
        %v921 = vunpack.c.l.b16 %v884
        %v922 = vunpack.c.l.b16 %v885
        %v923 = vunpack.c.l.b16 %v886
        %v924 = vunpack.c.l.b16 %v887
        %v925 = vunpack.c.l.b16 %v888
        %v926 = vunpack.c.l.b16 %v889
        %v927 = vunpack.c.l.b16 %v890
        %v928 = vunpack.c.l.b16 %v891
        %v929 = vunpack.c.l.b16 %v892
        %v930 = vunpack.c.l.b16 %v893
        %v931 = vunpack.c.l.b16 %v894
        %v932 = vunpack.c.l.b16 %v895
        %v933 = vpack.c.b16 %v918, %v917
        %v934 = vpack.c.b16 %v920, %v919
        %v935 = vpack.c.b16 %v922, %v921
        %v936 = vpack.c.b16 %v924, %v923
        %v937 = vpack.c.b16 %v926, %v925
        %v938 = vpack.c.b16 %v928, %v927
        %v939 = vpack.c.b16 %v930, %v929
        %v940 = vpack.c.b16 %v932, %v931
        %949 = vmatpush.bf16.msra.mxu0 %v940
        %950 = vmatpush.bf16.msra.mxu0 %v939
        %951 = vmatpush.bf16.msra.mxu0 %v938
        %952 = vmatpush.bf16.msra.mxu0 %v937
        %953 = vmatpush.bf16.msra.mxu0 %v936
        %954 = vmatpush.bf16.msra.mxu0 %v935
        %955 = vmatpush.bf16.msra.mxu0 %v934
        %956 = vmatpush.bf16.msra.mxu0 %v933
        %957 = vmatmul.bf16.gmra.mxu0 %v847
        %v958 = vpop.f32.mrf.mxu0
        %v959 = vadd.f32 %v899, %v958
        %v960 = vpop.f32.mrf.mxu0
        %v961 = vadd.f32 %v899, %v960
        %962 = vmatmul.bf16.gmra.mxu0 %v848
        %v963 = vpop.f32.mrf.mxu0
        %v964 = vadd.f32 %v899, %v963
        %v965 = vpop.f32.mrf.mxu0
        %v966 = vadd.f32 %v899, %v965
        %967 = vmatmul.bf16.gmra.mxu0 %v849
        %v968 = vpop.f32.mrf.mxu0
        %v969 = vadd.f32 %v899, %v968
        %v970 = vpop.f32.mrf.mxu0
        %v971 = vadd.f32 %v899, %v970
        %972 = vmatmul.bf16.gmra.mxu0 %v850
        %v973 = vpop.f32.mrf.mxu0
        %v974 = vadd.f32 %v899, %v973
        %v975 = vpop.f32.mrf.mxu0
        %v976 = vadd.f32 %v899, %v975
        %977 = vmatmul.bf16.gmra.mxu0 %v851
        %v978 = vpop.f32.mrf.mxu0
        %v979 = vadd.f32 %v899, %v978
        %v980 = vpop.f32.mrf.mxu0
        %v981 = vadd.f32 %v899, %v980
        %982 = vmatmul.bf16.gmra.mxu0 %v852
        %v983 = vpop.f32.mrf.mxu0
        %v984 = vadd.f32 %v899, %v983
        %v985 = vpop.f32.mrf.mxu0
        %v986 = vadd.f32 %v899, %v985
        %987 = vmatmul.bf16.gmra.mxu0 %v853
        %v988 = vpop.f32.mrf.mxu0
        %v989 = vadd.f32 %v899, %v988
        %v990 = vpop.f32.mrf.mxu0
        %v991 = vadd.f32 %v899, %v990
        %992 = vmatmul.bf16.gmra.mxu0 %v854
        %v993 = vpop.f32.mrf.mxu0
        %v994 = vadd.f32 %v899, %v993
        %v995 = vpop.f32.mrf.mxu0
        %v996 = vadd.f32 %v899, %v995
        %997 = vmatmul.bf16.gmra.mxu0 %v855
        %v998 = vpop.f32.mrf.mxu0
        %v999 = vadd.f32 %v899, %v998
        %v1000 = vpop.f32.mrf.mxu0
        %v1001 = vadd.f32 %v899, %v1000
        %1002 = vmatmul.bf16.gmra.mxu0 %v856
        %v1003 = vpop.f32.mrf.mxu0
        %v1004 = vadd.f32 %v899, %v1003
        %v1005 = vpop.f32.mrf.mxu0
        %v1006 = vadd.f32 %v899, %v1005
        %1007 = vmatmul.bf16.gmra.mxu0 %v857
        %v1008 = vpop.f32.mrf.mxu0
        %v1009 = vadd.f32 %v899, %v1008
        %v1010 = vpop.f32.mrf.mxu0
        %v1011 = vadd.f32 %v899, %v1010
        %1012 = vmatmul.bf16.gmra.mxu0 %v858
        %v1013 = vpop.f32.mrf.mxu0
        %v1014 = vadd.f32 %v899, %v1013
        %v1015 = vpop.f32.mrf.mxu0
        %v1016 = vadd.f32 %v899, %v1015
        %1017 = vmatmul.bf16.gmra.mxu0 %v859
        %v1018 = vpop.f32.mrf.mxu0
        %v1019 = vadd.f32 %v899, %v1018
        %v1020 = vpop.f32.mrf.mxu0
        %v1021 = vadd.f32 %v899, %v1020
        %1022 = vmatmul.bf16.gmra.mxu0 %v860
        %v1023 = vpop.f32.mrf.mxu0
        %v1024 = vadd.f32 %v899, %v1023
        %v1025 = vpop.f32.mrf.mxu0
        %v1026 = vadd.f32 %v899, %v1025
        %1027 = vmatmul.bf16.gmra.mxu0 %v861
        %v1028 = vpop.f32.mrf.mxu0
        %v1029 = vadd.f32 %v899, %v1028
        %v1030 = vpop.f32.mrf.mxu0
        %v1031 = vadd.f32 %v899, %v1030
        %1032 = vmatmul.bf16.gmra.mxu0 %v862
        %v1033 = vpop.f32.mrf.mxu0
        %v1034 = vadd.f32 %v899, %v1033
        %v1035 = vpop.f32.mrf.mxu0
        %v1036 = vadd.f32 %v899, %v1035
        %1037 = vmatmul.bf16.gmra.mxu0 %v863
        %v1038 = vpop.f32.mrf.mxu0
        %v1039 = vadd.f32 %v899, %v1038
        %v1040 = vpop.f32.mrf.mxu0
        %v1041 = vadd.f32 %v899, %v1040
        %1042 = vmatmul.bf16.gmra.mxu0 %v864
        %v1043 = vpop.f32.mrf.mxu0
        %v1044 = vadd.f32 %v899, %v1043
        %v1045 = vpop.f32.mrf.mxu0
        %v1046 = vadd.f32 %v899, %v1045
        %1047 = vmatmul.bf16.gmra.mxu0 %v865
        %v1048 = vpop.f32.mrf.mxu0
        %v1049 = vadd.f32 %v899, %v1048
        %v1050 = vpop.f32.mrf.mxu0
        %v1051 = vadd.f32 %v899, %v1050
        %1052 = vmatmul.bf16.gmra.mxu0 %v866
        %v1053 = vpop.f32.mrf.mxu0
        %v1054 = vadd.f32 %v899, %v1053
        %v1055 = vpop.f32.mrf.mxu0
        %v1056 = vadd.f32 %v899, %v1055
        %1057 = vmatmul.bf16.gmra.mxu0 %v867
        %v1058 = vpop.f32.mrf.mxu0
        %v1059 = vadd.f32 %v899, %v1058
        %v1060 = vpop.f32.mrf.mxu0
        %v1061 = vadd.f32 %v899, %v1060
        %1062 = vmatmul.bf16.gmra.mxu0 %v868
        %v1063 = vpop.f32.mrf.mxu0
        %v1064 = vadd.f32 %v899, %v1063
        %v1065 = vpop.f32.mrf.mxu0
        %v1066 = vadd.f32 %v899, %v1065
        %1067 = vmatmul.bf16.gmra.mxu0 %v869
        %v1068 = vpop.f32.mrf.mxu0
        %v1069 = vadd.f32 %v899, %v1068
        %v1070 = vpop.f32.mrf.mxu0
        %v1071 = vadd.f32 %v899, %v1070
        %1072 = vmatmul.bf16.gmra.mxu0 %v870
        %v1073 = vpop.f32.mrf.mxu0
        %v1074 = vadd.f32 %v899, %v1073
        %v1075 = vpop.f32.mrf.mxu0
        %v1076 = vadd.f32 %v899, %v1075
        %1077 = vmatmul.bf16.gmra.mxu0 %v871
        %v1078 = vpop.f32.mrf.mxu0
        %v1079 = vadd.f32 %v899, %v1078
        %v1080 = vpop.f32.mrf.mxu0
        %v1081 = vadd.f32 %v899, %v1080
        %1082 = vmatmul.bf16.gmra.mxu0 %v872
        %v1083 = vpop.f32.mrf.mxu0
        %v1084 = vadd.f32 %v899, %v1083
        %v1085 = vpop.f32.mrf.mxu0
        %v1086 = vadd.f32 %v899, %v1085
        %1087 = vmatmul.bf16.gmra.mxu0 %v873
        %v1088 = vpop.f32.mrf.mxu0
        %v1089 = vadd.f32 %v899, %v1088
        %v1090 = vpop.f32.mrf.mxu0
        %v1091 = vadd.f32 %v899, %v1090
        %1092 = vmatmul.bf16.gmra.mxu0 %v874
        %v1093 = vpop.f32.mrf.mxu0
        %v1094 = vadd.f32 %v899, %v1093
        %v1095 = vpop.f32.mrf.mxu0
        %v1096 = vadd.f32 %v899, %v1095
        %1097 = vmatmul.bf16.gmra.mxu0 %v875
        %v1098 = vpop.f32.mrf.mxu0
        %v1099 = vadd.f32 %v899, %v1098
        %v1100 = vpop.f32.mrf.mxu0
        %v1101 = vadd.f32 %v899, %v1100
        %1102 = vmatmul.bf16.gmra.mxu0 %v876
        %v1103 = vpop.f32.mrf.mxu0
        %v1104 = vadd.f32 %v899, %v1103
        %v1105 = vpop.f32.mrf.mxu0
        %v1106 = vadd.f32 %v899, %v1105
        %1107 = vmatmul.bf16.gmra.mxu0 %v877
        %v1108 = vpop.f32.mrf.mxu0
        %v1109 = vadd.f32 %v899, %v1108
        %v1110 = vpop.f32.mrf.mxu0
        %v1111 = vadd.f32 %v899, %v1110
        %1112 = vmatmul.bf16.gmra.mxu0 %v878
        %v1113 = vpop.f32.mrf.mxu0
        %v1114 = vadd.f32 %v899, %v1113
        %v1115 = vpop.f32.mrf.mxu0
        %v1116 = vadd.f32 %v899, %v1115
        %1117 = vdwg.mxu0
        %v1118 = vmul.f32 %v959, 0.02
        %v1119 = vmul.f32 %v961, 0.02
        %v1120 = vmul.f32 %v964, 0.02
        %v1121 = vmul.f32 %v966, 0.02
        %v1122 = vmul.f32 %v969, 0.02
        %v1123 = vmul.f32 %v971, 0.02
        %v1124 = vmul.f32 %v974, 0.02
        %v1125 = vmul.f32 %v976, 0.02
        %v1126 = vmul.f32 %v979, 0.02
        %v1127 = vmul.f32 %v981, 0.02
        %v1128 = vmul.f32 %v984, 0.02
        %v1129 = vmul.f32 %v986, 0.02
        %v1130 = vmul.f32 %v989, 0.02
        %v1131 = vmul.f32 %v991, 0.02
        %v1132 = vmul.f32 %v994, 0.02
        %v1133 = vmul.f32 %v996, 0.02
        %v1134 = vmul.f32 %v999, 0.02
        %v1135 = vmul.f32 %v1001, 0.02
        %v1136 = vmul.f32 %v1004, 0.02
        %v1137 = vmul.f32 %v1006, 0.02
        %v1138 = vmul.f32 %v1009, 0.02
        %v1139 = vmul.f32 %v1011, 0.02
        %v1140 = vmul.f32 %v1014, 0.02
        %v1141 = vmul.f32 %v1016, 0.02
        %v1142 = vmul.f32 %v1019, 0.02
        %v1143 = vmul.f32 %v1021, 0.02
        %v1144 = vmul.f32 %v1024, 0.02
        %v1145 = vmul.f32 %v1026, 0.02
        %v1146 = vmul.f32 %v1029, 0.02
        %v1147 = vmul.f32 %v1031, 0.02
        %v1148 = vmul.f32 %v1034, 0.02
        %v1149 = vmul.f32 %v1036, 0.02
        %v1150 = vmul.f32 %v1039, 0.02
        %v1151 = vmul.f32 %v1041, 0.02
        %v1152 = vmul.f32 %v1044, 0.02
        %v1153 = vmul.f32 %v1046, 0.02
        %v1154 = vmul.f32 %v1049, 0.02
        %v1155 = vmul.f32 %v1051, 0.02
        %v1156 = vmul.f32 %v1054, 0.02
        %v1157 = vmul.f32 %v1056, 0.02
        %v1158 = vmul.f32 %v1059, 0.02
        %v1159 = vmul.f32 %v1061, 0.02
        %v1160 = vmul.f32 %v1064, 0.02
        %v1161 = vmul.f32 %v1066, 0.02
        %v1162 = vmul.f32 %v1069, 0.02
        %v1163 = vmul.f32 %v1071, 0.02
        %v1164 = vmul.f32 %v1074, 0.02
        %v1165 = vmul.f32 %v1076, 0.02
        %v1166 = vmul.f32 %v1079, 0.02
        %v1167 = vmul.f32 %v1081, 0.02
        %v1168 = vmul.f32 %v1084, 0.02
        %v1169 = vmul.f32 %v1086, 0.02
        %v1170 = vmul.f32 %v1089, 0.02
        %v1171 = vmul.f32 %v1091, 0.02
        %v1172 = vmul.f32 %v1094, 0.02
        %v1173 = vmul.f32 %v1096, 0.02
        %v1174 = vmul.f32 %v1099, 0.02
        %v1175 = vmul.f32 %v1101, 0.02
        %v1176 = vmul.f32 %v1104, 0.02
        %v1177 = vmul.f32 %v1106, 0.02
        %v1178 = vmul.f32 %v1109, 0.02
        %v1179 = vmul.f32 %v1111, 0.02
        %v1180 = vmul.f32 %v1114, 0.02
        %v1181 = vmul.f32 %v1116, 0.02
        %v1182 = vmax.f32 %v959, %v1118
        %v1183 = vmax.f32 %v961, %v1119
        %v1184 = vmax.f32 %v964, %v1120
        %v1185 = vmax.f32 %v966, %v1121
        %v1186 = vmax.f32 %v969, %v1122
        %v1187 = vmax.f32 %v971, %v1123
        %v1188 = vmax.f32 %v974, %v1124
        %v1189 = vmax.f32 %v976, %v1125
        %v1190 = vmax.f32 %v979, %v1126
        %v1191 = vmax.f32 %v981, %v1127
        %v1192 = vmax.f32 %v984, %v1128
        %v1193 = vmax.f32 %v986, %v1129
        %v1194 = vmax.f32 %v989, %v1130
        %v1195 = vmax.f32 %v991, %v1131
        %v1196 = vmax.f32 %v994, %v1132
        %v1197 = vmax.f32 %v996, %v1133
        %v1198 = vmax.f32 %v999, %v1134
        %v1199 = vmax.f32 %v1001, %v1135
        %v1200 = vmax.f32 %v1004, %v1136
        %v1201 = vmax.f32 %v1006, %v1137
        %v1202 = vmax.f32 %v1009, %v1138
        %v1203 = vmax.f32 %v1011, %v1139
        %v1204 = vmax.f32 %v1014, %v1140
        %v1205 = vmax.f32 %v1016, %v1141
        %v1206 = vmax.f32 %v1019, %v1142
        %v1207 = vmax.f32 %v1021, %v1143
        %v1208 = vmax.f32 %v1024, %v1144
        %v1209 = vmax.f32 %v1026, %v1145
        %v1210 = vmax.f32 %v1029, %v1146
        %v1211 = vmax.f32 %v1031, %v1147
        %v1212 = vmax.f32 %v1034, %v1148
        %v1213 = vmax.f32 %v1036, %v1149
        %v1214 = vmax.f32 %v1039, %v1150
        %v1215 = vmax.f32 %v1041, %v1151
        %v1216 = vmax.f32 %v1044, %v1152
        %v1217 = vmax.f32 %v1046, %v1153
        %v1218 = vmax.f32 %v1049, %v1154
        %v1219 = vmax.f32 %v1051, %v1155
        %v1220 = vmax.f32 %v1054, %v1156
        %v1221 = vmax.f32 %v1056, %v1157
        %v1222 = vmax.f32 %v1059, %v1158
        %v1223 = vmax.f32 %v1061, %v1159
        %v1224 = vmax.f32 %v1064, %v1160
        %v1225 = vmax.f32 %v1066, %v1161
        %v1226 = vmax.f32 %v1069, %v1162
        %v1227 = vmax.f32 %v1071, %v1163
        %v1228 = vmax.f32 %v1074, %v1164
        %v1229 = vmax.f32 %v1076, %v1165
        %v1230 = vmax.f32 %v1079, %v1166
        %v1231 = vmax.f32 %v1081, %v1167
        %v1232 = vmax.f32 %v1084, %v1168
        %v1233 = vmax.f32 %v1086, %v1169
        %v1234 = vmax.f32 %v1089, %v1170
        %v1235 = vmax.f32 %v1091, %v1171
        %v1236 = vmax.f32 %v1094, %v1172
        %v1237 = vmax.f32 %v1096, %v1173
        %v1238 = vmax.f32 %v1099, %v1174
        %v1239 = vmax.f32 %v1101, %v1175
        %v1240 = vmax.f32 %v1104, %v1176
        %v1241 = vmax.f32 %v1106, %v1177
        %v1242 = vmax.f32 %v1109, %v1178
        %v1243 = vmax.f32 %v1111, %v1179
        %v1244 = vmax.f32 %v1114, %v1180
        %v1245 = vmax.f32 %v1116, %v1181
        %v1246 = vpack.c.bf16 %v1183, %v1182
        %v1247 = vpack.c.bf16 %v1185, %v1184
        %v1248 = vpack.c.bf16 %v1187, %v1186
        %v1249 = vpack.c.bf16 %v1189, %v1188
        %v1250 = vpack.c.bf16 %v1191, %v1190
        %v1251 = vpack.c.bf16 %v1193, %v1192
        %v1252 = vpack.c.bf16 %v1195, %v1194
        %v1253 = vpack.c.bf16 %v1197, %v1196
        %v1254 = vpack.c.bf16 %v1199, %v1198
        %v1255 = vpack.c.bf16 %v1201, %v1200
        %v1256 = vpack.c.bf16 %v1203, %v1202
        %v1257 = vpack.c.bf16 %v1205, %v1204
        %v1258 = vpack.c.bf16 %v1207, %v1206
        %v1259 = vpack.c.bf16 %v1209, %v1208
        %v1260 = vpack.c.bf16 %v1211, %v1210
        %v1261 = vpack.c.bf16 %v1213, %v1212
        %v1262 = vpack.c.bf16 %v1215, %v1214
        %v1263 = vpack.c.bf16 %v1217, %v1216
        %v1264 = vpack.c.bf16 %v1219, %v1218
        %v1265 = vpack.c.bf16 %v1221, %v1220
        %v1266 = vpack.c.bf16 %v1223, %v1222
        %v1267 = vpack.c.bf16 %v1225, %v1224
        %v1268 = vpack.c.bf16 %v1227, %v1226
        %v1269 = vpack.c.bf16 %v1229, %v1228
        %v1270 = vpack.c.bf16 %v1231, %v1230
        %v1271 = vpack.c.bf16 %v1233, %v1232
        %v1272 = vpack.c.bf16 %v1235, %v1234
        %v1273 = vpack.c.bf16 %v1237, %v1236
        %v1274 = vpack.c.bf16 %v1239, %v1238
        %v1275 = vpack.c.bf16 %v1241, %v1240
        %v1276 = vpack.c.bf16 %v1243, %v1242
        %v1277 = vpack.c.bf16 %v1245, %v1244
        %s1278 = scalar_lea.vmem [#allocation5], 128
        %v1279 = vld [vmem:[%s1278] sm:$0xf]
        %v1280 = vld [vmem:[%s1278 + $0x4] sm:$0xf]
        %v1281 = vld [vmem:[%s1278 + $0x8] sm:$0xf]
        %v1282 = vld [vmem:[%s1278 + $0xc] sm:$0xf]
        %v1283 = vld [vmem:[%s1278 + $0x10] sm:$0xf]
        %v1284 = vld [vmem:[%s1278 + $0x14] sm:$0xf]
        %v1285 = vld [vmem:[%s1278 + $0x18] sm:$0xf]
        %v1286 = vld [vmem:[%s1278 + $0x1c] sm:$0xf]
        %v1287 = vld [vmem:[%s1278 + $0x20] sm:$0xf]
        %v1288 = vld [vmem:[%s1278 + $0x24] sm:$0xf]
        %v1289 = vld [vmem:[%s1278 + $0x28] sm:$0xf]
        %v1290 = vld [vmem:[%s1278 + $0x2c] sm:$0xf]
        %v1291 = vld [vmem:[%s1278 + $0x30] sm:$0xf]
        %v1292 = vld [vmem:[%s1278 + $0x34] sm:$0xf]
        %v1293 = vld [vmem:[%s1278 + $0x38] sm:$0xf]
        %v1294 = vld [vmem:[%s1278 + $0x3c] sm:$0xf]
        %s1295 = scalar_lea.vmem [#allocation7], 2
        %v1296 = vld [vmem:[%s1295] sm:$0x1]
        %v1298 = vperm.slane %v1296, 0
        %v1316 = vunpack.c.l.b16 %v1279
        %v1317 = vunpack.c.l.b16 %v1280
        %v1318 = vunpack.c.l.b16 %v1281
        %v1319 = vunpack.c.l.b16 %v1282
        %v1320 = vunpack.c.l.b16 %v1283
        %v1321 = vunpack.c.l.b16 %v1284
        %v1322 = vunpack.c.l.b16 %v1285
        %v1323 = vunpack.c.l.b16 %v1286
        %v1324 = vunpack.c.l.b16 %v1287
        %v1325 = vunpack.c.l.b16 %v1288
        %v1326 = vunpack.c.l.b16 %v1289
        %v1327 = vunpack.c.l.b16 %v1290
        %v1328 = vunpack.c.l.b16 %v1291
        %v1329 = vunpack.c.l.b16 %v1292
        %v1330 = vunpack.c.l.b16 %v1293
        %v1331 = vunpack.c.l.b16 %v1294
        %v1332 = vpack.c.b16 %v1317, %v1316
        %v1333 = vpack.c.b16 %v1319, %v1318
        %v1334 = vpack.c.b16 %v1321, %v1320
        %v1335 = vpack.c.b16 %v1323, %v1322
        %v1336 = vpack.c.b16 %v1325, %v1324
        %v1337 = vpack.c.b16 %v1327, %v1326
        %v1338 = vpack.c.b16 %v1329, %v1328
        %v1339 = vpack.c.b16 %v1331, %v1330
        %1348 = vmatpush.bf16.msra.mxu0 %v1339
        %1349 = vmatpush.bf16.msra.mxu0 %v1338
        %1350 = vmatpush.bf16.msra.mxu0 %v1337
        %1351 = vmatpush.bf16.msra.mxu0 %v1336
        %1352 = vmatpush.bf16.msra.mxu0 %v1335
        %1353 = vmatpush.bf16.msra.mxu0 %v1334
        %1354 = vmatpush.bf16.msra.mxu0 %v1333
        %1355 = vmatpush.bf16.msra.mxu0 %v1332
        %1356 = vmatmul.bf16.gmra.mxu0 %v1246
        %v1357 = vpop.f32.mrf.mxu0
        %v1358 = vadd.f32 %v1298, %v1357
        %v1359 = vpop.f32.mrf.mxu0
        %v1360 = vadd.f32 %v1298, %v1359
        %1361 = vmatmul.bf16.gmra.mxu0 %v1247
        %v1362 = vpop.f32.mrf.mxu0
        %v1363 = vadd.f32 %v1298, %v1362
        %v1364 = vpop.f32.mrf.mxu0
        %v1365 = vadd.f32 %v1298, %v1364
        %1366 = vmatmul.bf16.gmra.mxu0 %v1248
        %v1367 = vpop.f32.mrf.mxu0
        %v1368 = vadd.f32 %v1298, %v1367
        %v1369 = vpop.f32.mrf.mxu0
        %v1370 = vadd.f32 %v1298, %v1369
        %1371 = vmatmul.bf16.gmra.mxu0 %v1249
        %v1372 = vpop.f32.mrf.mxu0
        %v1373 = vadd.f32 %v1298, %v1372
        %v1374 = vpop.f32.mrf.mxu0
        %v1375 = vadd.f32 %v1298, %v1374
        %1376 = vmatmul.bf16.gmra.mxu0 %v1250
        %v1377 = vpop.f32.mrf.mxu0
        %v1378 = vadd.f32 %v1298, %v1377
        %v1379 = vpop.f32.mrf.mxu0
        %v1380 = vadd.f32 %v1298, %v1379
        %1381 = vmatmul.bf16.gmra.mxu0 %v1251
        %v1382 = vpop.f32.mrf.mxu0
        %v1383 = vadd.f32 %v1298, %v1382
        %v1384 = vpop.f32.mrf.mxu0
        %v1385 = vadd.f32 %v1298, %v1384
        %1386 = vmatmul.bf16.gmra.mxu0 %v1252
        %v1387 = vpop.f32.mrf.mxu0
        %v1388 = vadd.f32 %v1298, %v1387
        %v1389 = vpop.f32.mrf.mxu0
        %v1390 = vadd.f32 %v1298, %v1389
        %1391 = vmatmul.bf16.gmra.mxu0 %v1253
        %v1392 = vpop.f32.mrf.mxu0
        %v1393 = vadd.f32 %v1298, %v1392
        %v1394 = vpop.f32.mrf.mxu0
        %v1395 = vadd.f32 %v1298, %v1394
        %1396 = vmatmul.bf16.gmra.mxu0 %v1254
        %v1397 = vpop.f32.mrf.mxu0
        %v1398 = vadd.f32 %v1298, %v1397
        %v1399 = vpop.f32.mrf.mxu0
        %v1400 = vadd.f32 %v1298, %v1399
        %1401 = vmatmul.bf16.gmra.mxu0 %v1255
        %v1402 = vpop.f32.mrf.mxu0
        %v1403 = vadd.f32 %v1298, %v1402
        %v1404 = vpop.f32.mrf.mxu0
        %v1405 = vadd.f32 %v1298, %v1404
        %1406 = vmatmul.bf16.gmra.mxu0 %v1256
        %v1407 = vpop.f32.mrf.mxu0
        %v1408 = vadd.f32 %v1298, %v1407
        %v1409 = vpop.f32.mrf.mxu0
        %v1410 = vadd.f32 %v1298, %v1409
        %1411 = vmatmul.bf16.gmra.mxu0 %v1257
        %v1412 = vpop.f32.mrf.mxu0
        %v1413 = vadd.f32 %v1298, %v1412
        %v1414 = vpop.f32.mrf.mxu0
        %v1415 = vadd.f32 %v1298, %v1414
        %1416 = vmatmul.bf16.gmra.mxu0 %v1258
        %v1417 = vpop.f32.mrf.mxu0
        %v1418 = vadd.f32 %v1298, %v1417
        %v1419 = vpop.f32.mrf.mxu0
        %v1420 = vadd.f32 %v1298, %v1419
        %1421 = vmatmul.bf16.gmra.mxu0 %v1259
        %v1422 = vpop.f32.mrf.mxu0
        %v1423 = vadd.f32 %v1298, %v1422
        %v1424 = vpop.f32.mrf.mxu0
        %v1425 = vadd.f32 %v1298, %v1424
        %1426 = vmatmul.bf16.gmra.mxu0 %v1260
        %v1427 = vpop.f32.mrf.mxu0
        %v1428 = vadd.f32 %v1298, %v1427
        %v1429 = vpop.f32.mrf.mxu0
        %v1430 = vadd.f32 %v1298, %v1429
        %1431 = vmatmul.bf16.gmra.mxu0 %v1261
        %v1432 = vpop.f32.mrf.mxu0
        %v1433 = vadd.f32 %v1298, %v1432
        %v1434 = vpop.f32.mrf.mxu0
        %v1435 = vadd.f32 %v1298, %v1434
        %1436 = vmatmul.bf16.gmra.mxu0 %v1262
        %v1437 = vpop.f32.mrf.mxu0
        %v1438 = vadd.f32 %v1298, %v1437
        %v1439 = vpop.f32.mrf.mxu0
        %v1440 = vadd.f32 %v1298, %v1439
        %1441 = vmatmul.bf16.gmra.mxu0 %v1263
        %v1442 = vpop.f32.mrf.mxu0
        %v1443 = vadd.f32 %v1298, %v1442
        %v1444 = vpop.f32.mrf.mxu0
        %v1445 = vadd.f32 %v1298, %v1444
        %1446 = vmatmul.bf16.gmra.mxu0 %v1264
        %v1447 = vpop.f32.mrf.mxu0
        %v1448 = vadd.f32 %v1298, %v1447
        %v1449 = vpop.f32.mrf.mxu0
        %v1450 = vadd.f32 %v1298, %v1449
        %1451 = vmatmul.bf16.gmra.mxu0 %v1265
        %v1452 = vpop.f32.mrf.mxu0
        %v1453 = vadd.f32 %v1298, %v1452
        %v1454 = vpop.f32.mrf.mxu0
        %v1455 = vadd.f32 %v1298, %v1454
        %1456 = vmatmul.bf16.gmra.mxu0 %v1266
        %v1457 = vpop.f32.mrf.mxu0
        %v1458 = vadd.f32 %v1298, %v1457
        %v1459 = vpop.f32.mrf.mxu0
        %v1460 = vadd.f32 %v1298, %v1459
        %1461 = vmatmul.bf16.gmra.mxu0 %v1267
        %v1462 = vpop.f32.mrf.mxu0
        %v1463 = vadd.f32 %v1298, %v1462
        %v1464 = vpop.f32.mrf.mxu0
        %v1465 = vadd.f32 %v1298, %v1464
        %1466 = vmatmul.bf16.gmra.mxu0 %v1268
        %v1467 = vpop.f32.mrf.mxu0
        %v1468 = vadd.f32 %v1298, %v1467
        %v1469 = vpop.f32.mrf.mxu0
        %v1470 = vadd.f32 %v1298, %v1469
        %1471 = vmatmul.bf16.gmra.mxu0 %v1269
        %v1472 = vpop.f32.mrf.mxu0
        %v1473 = vadd.f32 %v1298, %v1472
        %v1474 = vpop.f32.mrf.mxu0
        %v1475 = vadd.f32 %v1298, %v1474
        %1476 = vmatmul.bf16.gmra.mxu0 %v1270
        %v1477 = vpop.f32.mrf.mxu0
        %v1478 = vadd.f32 %v1298, %v1477
        %v1479 = vpop.f32.mrf.mxu0
        %v1480 = vadd.f32 %v1298, %v1479
        %1481 = vmatmul.bf16.gmra.mxu0 %v1271
        %v1482 = vpop.f32.mrf.mxu0
        %v1483 = vadd.f32 %v1298, %v1482
        %v1484 = vpop.f32.mrf.mxu0
        %v1485 = vadd.f32 %v1298, %v1484
        %1486 = vmatmul.bf16.gmra.mxu0 %v1272
        %v1487 = vpop.f32.mrf.mxu0
        %v1488 = vadd.f32 %v1298, %v1487
        %v1489 = vpop.f32.mrf.mxu0
        %v1490 = vadd.f32 %v1298, %v1489
        %1491 = vmatmul.bf16.gmra.mxu0 %v1273
        %v1492 = vpop.f32.mrf.mxu0
        %v1493 = vadd.f32 %v1298, %v1492
        %v1494 = vpop.f32.mrf.mxu0
        %v1495 = vadd.f32 %v1298, %v1494
        %1496 = vmatmul.bf16.gmra.mxu0 %v1274
        %v1497 = vpop.f32.mrf.mxu0
        %v1498 = vadd.f32 %v1298, %v1497
        %v1499 = vpop.f32.mrf.mxu0
        %v1500 = vadd.f32 %v1298, %v1499
        %1501 = vmatmul.bf16.gmra.mxu0 %v1275
        %v1502 = vpop.f32.mrf.mxu0
        %v1503 = vadd.f32 %v1298, %v1502
        %v1504 = vpop.f32.mrf.mxu0
        %v1505 = vadd.f32 %v1298, %v1504
        %1506 = vmatmul.bf16.gmra.mxu0 %v1276
        %v1507 = vpop.f32.mrf.mxu0
        %v1508 = vadd.f32 %v1298, %v1507
        %v1509 = vpop.f32.mrf.mxu0
        %v1510 = vadd.f32 %v1298, %v1509
        %1511 = vmatmul.bf16.gmra.mxu0 %v1277
        %v1512 = vpop.f32.mrf.mxu0
        %v1513 = vadd.f32 %v1298, %v1512
        %v1514 = vpop.f32.mrf.mxu0
        %v1515 = vadd.f32 %v1298, %v1514
        %1516 = vdwg.mxu0
        %v1517 = vmul.f32 %v1358, 0.02
        %v1518 = vmul.f32 %v1360, 0.02
        %v1519 = vmul.f32 %v1363, 0.02
        %v1520 = vmul.f32 %v1365, 0.02
        %v1521 = vmul.f32 %v1368, 0.02
        %v1522 = vmul.f32 %v1370, 0.02
        %v1523 = vmul.f32 %v1373, 0.02
        %v1524 = vmul.f32 %v1375, 0.02
        %v1525 = vmul.f32 %v1378, 0.02
        %v1526 = vmul.f32 %v1380, 0.02
        %v1527 = vmul.f32 %v1383, 0.02
        %v1528 = vmul.f32 %v1385, 0.02
        %v1529 = vmul.f32 %v1388, 0.02
        %v1530 = vmul.f32 %v1390, 0.02
        %v1531 = vmul.f32 %v1393, 0.02
        %v1532 = vmul.f32 %v1395, 0.02
        %v1533 = vmul.f32 %v1398, 0.02
        %v1534 = vmul.f32 %v1400, 0.02
        %v1535 = vmul.f32 %v1403, 0.02
        %v1536 = vmul.f32 %v1405, 0.02
        %v1537 = vmul.f32 %v1408, 0.02
        %v1538 = vmul.f32 %v1410, 0.02
        %v1539 = vmul.f32 %v1413, 0.02
        %v1540 = vmul.f32 %v1415, 0.02
        %v1541 = vmul.f32 %v1418, 0.02
        %v1542 = vmul.f32 %v1420, 0.02
        %v1543 = vmul.f32 %v1423, 0.02
        %v1544 = vmul.f32 %v1425, 0.02
        %v1545 = vmul.f32 %v1428, 0.02
        %v1546 = vmul.f32 %v1430, 0.02
        %v1547 = vmul.f32 %v1433, 0.02
        %v1548 = vmul.f32 %v1435, 0.02
        %v1549 = vmul.f32 %v1438, 0.02
        %v1550 = vmul.f32 %v1440, 0.02
        %v1551 = vmul.f32 %v1443, 0.02
        %v1552 = vmul.f32 %v1445, 0.02
        %v1553 = vmul.f32 %v1448, 0.02
        %v1554 = vmul.f32 %v1450, 0.02
        %v1555 = vmul.f32 %v1453, 0.02
        %v1556 = vmul.f32 %v1455, 0.02
        %v1557 = vmul.f32 %v1458, 0.02
        %v1558 = vmul.f32 %v1460, 0.02
        %v1559 = vmul.f32 %v1463, 0.02
        %v1560 = vmul.f32 %v1465, 0.02
        %v1561 = vmul.f32 %v1468, 0.02
        %v1562 = vmul.f32 %v1470, 0.02
        %v1563 = vmul.f32 %v1473, 0.02
        %v1564 = vmul.f32 %v1475, 0.02
        %v1565 = vmul.f32 %v1478, 0.02
        %v1566 = vmul.f32 %v1480, 0.02
        %v1567 = vmul.f32 %v1483, 0.02
        %v1568 = vmul.f32 %v1485, 0.02
        %v1569 = vmul.f32 %v1488, 0.02
        %v1570 = vmul.f32 %v1490, 0.02
        %v1571 = vmul.f32 %v1493, 0.02
        %v1572 = vmul.f32 %v1495, 0.02
        %v1573 = vmul.f32 %v1498, 0.02
        %v1574 = vmul.f32 %v1500, 0.02
        %v1575 = vmul.f32 %v1503, 0.02
        %v1576 = vmul.f32 %v1505, 0.02
        %v1577 = vmul.f32 %v1508, 0.02
        %v1578 = vmul.f32 %v1510, 0.02
        %v1579 = vmul.f32 %v1513, 0.02
        %v1580 = vmul.f32 %v1515, 0.02
        %v1581 = vmax.f32 %v1358, %v1517
        %v1582 = vmax.f32 %v1360, %v1518
        %v1583 = vmax.f32 %v1363, %v1519
        %v1584 = vmax.f32 %v1365, %v1520
        %v1585 = vmax.f32 %v1368, %v1521
        %v1586 = vmax.f32 %v1370, %v1522
        %v1587 = vmax.f32 %v1373, %v1523
        %v1588 = vmax.f32 %v1375, %v1524
        %v1589 = vmax.f32 %v1378, %v1525
        %v1590 = vmax.f32 %v1380, %v1526
        %v1591 = vmax.f32 %v1383, %v1527
        %v1592 = vmax.f32 %v1385, %v1528
        %v1593 = vmax.f32 %v1388, %v1529
        %v1594 = vmax.f32 %v1390, %v1530
        %v1595 = vmax.f32 %v1393, %v1531
        %v1596 = vmax.f32 %v1395, %v1532
        %v1597 = vmax.f32 %v1398, %v1533
        %v1598 = vmax.f32 %v1400, %v1534
        %v1599 = vmax.f32 %v1403, %v1535
        %v1600 = vmax.f32 %v1405, %v1536
        %v1601 = vmax.f32 %v1408, %v1537
        %v1602 = vmax.f32 %v1410, %v1538
        %v1603 = vmax.f32 %v1413, %v1539
        %v1604 = vmax.f32 %v1415, %v1540
        %v1605 = vmax.f32 %v1418, %v1541
        %v1606 = vmax.f32 %v1420, %v1542
        %v1607 = vmax.f32 %v1423, %v1543
        %v1608 = vmax.f32 %v1425, %v1544
        %v1609 = vmax.f32 %v1428, %v1545
        %v1610 = vmax.f32 %v1430, %v1546
        %v1611 = vmax.f32 %v1433, %v1547
        %v1612 = vmax.f32 %v1435, %v1548
        %v1613 = vmax.f32 %v1438, %v1549
        %v1614 = vmax.f32 %v1440, %v1550
        %v1615 = vmax.f32 %v1443, %v1551
        %v1616 = vmax.f32 %v1445, %v1552
        %v1617 = vmax.f32 %v1448, %v1553
        %v1618 = vmax.f32 %v1450, %v1554
        %v1619 = vmax.f32 %v1453, %v1555
        %v1620 = vmax.f32 %v1455, %v1556
        %v1621 = vmax.f32 %v1458, %v1557
        %v1622 = vmax.f32 %v1460, %v1558
        %v1623 = vmax.f32 %v1463, %v1559
        %v1624 = vmax.f32 %v1465, %v1560
        %v1625 = vmax.f32 %v1468, %v1561
        %v1626 = vmax.f32 %v1470, %v1562
        %v1627 = vmax.f32 %v1473, %v1563
        %v1628 = vmax.f32 %v1475, %v1564
        %v1629 = vmax.f32 %v1478, %v1565
        %v1630 = vmax.f32 %v1480, %v1566
        %v1631 = vmax.f32 %v1483, %v1567
        %v1632 = vmax.f32 %v1485, %v1568
        %v1633 = vmax.f32 %v1488, %v1569
        %v1634 = vmax.f32 %v1490, %v1570
        %v1635 = vmax.f32 %v1493, %v1571
        %v1636 = vmax.f32 %v1495, %v1572
        %v1637 = vmax.f32 %v1498, %v1573
        %v1638 = vmax.f32 %v1500, %v1574
        %v1639 = vmax.f32 %v1503, %v1575
        %v1640 = vmax.f32 %v1505, %v1576
        %v1641 = vmax.f32 %v1508, %v1577
        %v1642 = vmax.f32 %v1510, %v1578
        %v1643 = vmax.f32 %v1513, %v1579
        %v1644 = vmax.f32 %v1515, %v1580
        %v1645 = vpack.c.bf16 %v1582, %v1581
        %v1646 = vpack.c.bf16 %v1584, %v1583
        %v1647 = vpack.c.bf16 %v1586, %v1585
        %v1648 = vpack.c.bf16 %v1588, %v1587
        %v1649 = vpack.c.bf16 %v1590, %v1589
        %v1650 = vpack.c.bf16 %v1592, %v1591
        %v1651 = vpack.c.bf16 %v1594, %v1593
        %v1652 = vpack.c.bf16 %v1596, %v1595
        %v1653 = vpack.c.bf16 %v1598, %v1597
        %v1654 = vpack.c.bf16 %v1600, %v1599
        %v1655 = vpack.c.bf16 %v1602, %v1601
        %v1656 = vpack.c.bf16 %v1604, %v1603
        %v1657 = vpack.c.bf16 %v1606, %v1605
        %v1658 = vpack.c.bf16 %v1608, %v1607
        %v1659 = vpack.c.bf16 %v1610, %v1609
        %v1660 = vpack.c.bf16 %v1612, %v1611
        %v1661 = vpack.c.bf16 %v1614, %v1613
        %v1662 = vpack.c.bf16 %v1616, %v1615
        %v1663 = vpack.c.bf16 %v1618, %v1617
        %v1664 = vpack.c.bf16 %v1620, %v1619
        %v1665 = vpack.c.bf16 %v1622, %v1621
        %v1666 = vpack.c.bf16 %v1624, %v1623
        %v1667 = vpack.c.bf16 %v1626, %v1625
        %v1668 = vpack.c.bf16 %v1628, %v1627
        %v1669 = vpack.c.bf16 %v1630, %v1629
        %v1670 = vpack.c.bf16 %v1632, %v1631
        %v1671 = vpack.c.bf16 %v1634, %v1633
        %v1672 = vpack.c.bf16 %v1636, %v1635
        %v1673 = vpack.c.bf16 %v1638, %v1637
        %v1674 = vpack.c.bf16 %v1640, %v1639
        %v1675 = vpack.c.bf16 %v1642, %v1641
        %v1676 = vpack.c.bf16 %v1644, %v1643
        %s1677 = scalar_lea.vmem [#allocation5], 192
        %v1678 = vld [vmem:[%s1677] sm:$0xf]
        %v1679 = vld [vmem:[%s1677 + $0x4] sm:$0xf]
        %v1680 = vld [vmem:[%s1677 + $0x8] sm:$0xf]
        %v1681 = vld [vmem:[%s1677 + $0xc] sm:$0xf]
        %v1682 = vld [vmem:[%s1677 + $0x10] sm:$0xf]
        %v1683 = vld [vmem:[%s1677 + $0x14] sm:$0xf]
        %v1684 = vld [vmem:[%s1677 + $0x18] sm:$0xf]
        %v1685 = vld [vmem:[%s1677 + $0x1c] sm:$0xf]
        %v1686 = vld [vmem:[%s1677 + $0x20] sm:$0xf]
        %v1687 = vld [vmem:[%s1677 + $0x24] sm:$0xf]
        %v1688 = vld [vmem:[%s1677 + $0x28] sm:$0xf]
        %v1689 = vld [vmem:[%s1677 + $0x2c] sm:$0xf]
        %v1690 = vld [vmem:[%s1677 + $0x30] sm:$0xf]
        %v1691 = vld [vmem:[%s1677 + $0x34] sm:$0xf]
        %v1692 = vld [vmem:[%s1677 + $0x38] sm:$0xf]
        %v1693 = vld [vmem:[%s1677 + $0x3c] sm:$0xf]
        %s1694 = scalar_lea.vmem [#allocation7], 3
        %v1695 = vld [vmem:[%s1694] sm:$0x1]
        %v1697 = vperm.slane %v1695, 0
        %v1715 = vunpack.c.l.b16 %v1678
        %v1716 = vunpack.c.l.b16 %v1679
        %v1717 = vunpack.c.l.b16 %v1680
        %v1718 = vunpack.c.l.b16 %v1681
        %v1719 = vunpack.c.l.b16 %v1682
        %v1720 = vunpack.c.l.b16 %v1683
        %v1721 = vunpack.c.l.b16 %v1684
        %v1722 = vunpack.c.l.b16 %v1685
        %v1723 = vunpack.c.l.b16 %v1686
        %v1724 = vunpack.c.l.b16 %v1687
        %v1725 = vunpack.c.l.b16 %v1688
        %v1726 = vunpack.c.l.b16 %v1689
        %v1727 = vunpack.c.l.b16 %v1690
        %v1728 = vunpack.c.l.b16 %v1691
        %v1729 = vunpack.c.l.b16 %v1692
        %v1730 = vunpack.c.l.b16 %v1693
        %v1731 = vpack.c.b16 %v1716, %v1715
        %v1732 = vpack.c.b16 %v1718, %v1717
        %v1733 = vpack.c.b16 %v1720, %v1719
        %v1734 = vpack.c.b16 %v1722, %v1721
        %v1735 = vpack.c.b16 %v1724, %v1723
        %v1736 = vpack.c.b16 %v1726, %v1725
        %v1737 = vpack.c.b16 %v1728, %v1727
        %v1738 = vpack.c.b16 %v1730, %v1729
        %1747 = vmatpush.bf16.msra.mxu0 %v1738
        %1748 = vmatpush.bf16.msra.mxu0 %v1737
        %1749 = vmatpush.bf16.msra.mxu0 %v1736
        %1750 = vmatpush.bf16.msra.mxu0 %v1735
        %1751 = vmatpush.bf16.msra.mxu0 %v1734
        %1752 = vmatpush.bf16.msra.mxu0 %v1733
        %1753 = vmatpush.bf16.msra.mxu0 %v1732
        %1754 = vmatpush.bf16.msra.mxu0 %v1731
        %1755 = vmatmul.bf16.gmra.mxu0 %v1645
        %v1756 = vpop.f32.mrf.mxu0
        %v1757 = vadd.f32 %v1697, %v1756
        %v1758 = vpop.f32.mrf.mxu0
        %v1759 = vadd.f32 %v1697, %v1758
        %1760 = vmatmul.bf16.gmra.mxu0 %v1646
        %v1761 = vpop.f32.mrf.mxu0
        %v1762 = vadd.f32 %v1697, %v1761
        %v1763 = vpop.f32.mrf.mxu0
        %v1764 = vadd.f32 %v1697, %v1763
        %1765 = vmatmul.bf16.gmra.mxu0 %v1647
        %v1766 = vpop.f32.mrf.mxu0
        %v1767 = vadd.f32 %v1697, %v1766
        %v1768 = vpop.f32.mrf.mxu0
        %v1769 = vadd.f32 %v1697, %v1768
        %1770 = vmatmul.bf16.gmra.mxu0 %v1648
        %v1771 = vpop.f32.mrf.mxu0
        %v1772 = vadd.f32 %v1697, %v1771
        %v1773 = vpop.f32.mrf.mxu0
        %v1774 = vadd.f32 %v1697, %v1773
        %1775 = vmatmul.bf16.gmra.mxu0 %v1649
        %v1776 = vpop.f32.mrf.mxu0
        %v1777 = vadd.f32 %v1697, %v1776
        %v1778 = vpop.f32.mrf.mxu0
        %v1779 = vadd.f32 %v1697, %v1778
        %1780 = vmatmul.bf16.gmra.mxu0 %v1650
        %v1781 = vpop.f32.mrf.mxu0
        %v1782 = vadd.f32 %v1697, %v1781
        %v1783 = vpop.f32.mrf.mxu0
        %v1784 = vadd.f32 %v1697, %v1783
        %1785 = vmatmul.bf16.gmra.mxu0 %v1651
        %v1786 = vpop.f32.mrf.mxu0
        %v1787 = vadd.f32 %v1697, %v1786
        %v1788 = vpop.f32.mrf.mxu0
        %v1789 = vadd.f32 %v1697, %v1788
        %1790 = vmatmul.bf16.gmra.mxu0 %v1652
        %v1791 = vpop.f32.mrf.mxu0
        %v1792 = vadd.f32 %v1697, %v1791
        %v1793 = vpop.f32.mrf.mxu0
        %v1794 = vadd.f32 %v1697, %v1793
        %1795 = vmatmul.bf16.gmra.mxu0 %v1653
        %v1796 = vpop.f32.mrf.mxu0
        %v1797 = vadd.f32 %v1697, %v1796
        %v1798 = vpop.f32.mrf.mxu0
        %v1799 = vadd.f32 %v1697, %v1798
        %1800 = vmatmul.bf16.gmra.mxu0 %v1654
        %v1801 = vpop.f32.mrf.mxu0
        %v1802 = vadd.f32 %v1697, %v1801
        %v1803 = vpop.f32.mrf.mxu0
        %v1804 = vadd.f32 %v1697, %v1803
        %1805 = vmatmul.bf16.gmra.mxu0 %v1655
        %v1806 = vpop.f32.mrf.mxu0
        %v1807 = vadd.f32 %v1697, %v1806
        %v1808 = vpop.f32.mrf.mxu0
        %v1809 = vadd.f32 %v1697, %v1808
        %1810 = vmatmul.bf16.gmra.mxu0 %v1656
        %v1811 = vpop.f32.mrf.mxu0
        %v1812 = vadd.f32 %v1697, %v1811
        %v1813 = vpop.f32.mrf.mxu0
        %v1814 = vadd.f32 %v1697, %v1813
        %1815 = vmatmul.bf16.gmra.mxu0 %v1657
        %v1816 = vpop.f32.mrf.mxu0
        %v1817 = vadd.f32 %v1697, %v1816
        %v1818 = vpop.f32.mrf.mxu0
        %v1819 = vadd.f32 %v1697, %v1818
        %1820 = vmatmul.bf16.gmra.mxu0 %v1658
        %v1821 = vpop.f32.mrf.mxu0
        %v1822 = vadd.f32 %v1697, %v1821
        %v1823 = vpop.f32.mrf.mxu0
        %v1824 = vadd.f32 %v1697, %v1823
        %1825 = vmatmul.bf16.gmra.mxu0 %v1659
        %v1826 = vpop.f32.mrf.mxu0
        %v1827 = vadd.f32 %v1697, %v1826
        %v1828 = vpop.f32.mrf.mxu0
        %v1829 = vadd.f32 %v1697, %v1828
        %1830 = vmatmul.bf16.gmra.mxu0 %v1660
        %v1831 = vpop.f32.mrf.mxu0
        %v1832 = vadd.f32 %v1697, %v1831
        %v1833 = vpop.f32.mrf.mxu0
        %v1834 = vadd.f32 %v1697, %v1833
        %1835 = vmatmul.bf16.gmra.mxu0 %v1661
        %v1836 = vpop.f32.mrf.mxu0
        %v1837 = vadd.f32 %v1697, %v1836
        %v1838 = vpop.f32.mrf.mxu0
        %v1839 = vadd.f32 %v1697, %v1838
        %1840 = vmatmul.bf16.gmra.mxu0 %v1662
        %v1841 = vpop.f32.mrf.mxu0
        %v1842 = vadd.f32 %v1697, %v1841
        %v1843 = vpop.f32.mrf.mxu0
        %v1844 = vadd.f32 %v1697, %v1843
        %1845 = vmatmul.bf16.gmra.mxu0 %v1663
        %v1846 = vpop.f32.mrf.mxu0
        %v1847 = vadd.f32 %v1697, %v1846
        %v1848 = vpop.f32.mrf.mxu0
        %v1849 = vadd.f32 %v1697, %v1848
        %1850 = vmatmul.bf16.gmra.mxu0 %v1664
        %v1851 = vpop.f32.mrf.mxu0
        %v1852 = vadd.f32 %v1697, %v1851
        %v1853 = vpop.f32.mrf.mxu0
        %v1854 = vadd.f32 %v1697, %v1853
        %1855 = vmatmul.bf16.gmra.mxu0 %v1665
        %v1856 = vpop.f32.mrf.mxu0
        %v1857 = vadd.f32 %v1697, %v1856
        %v1858 = vpop.f32.mrf.mxu0
        %v1859 = vadd.f32 %v1697, %v1858
        %1860 = vmatmul.bf16.gmra.mxu0 %v1666
        %v1861 = vpop.f32.mrf.mxu0
        %v1862 = vadd.f32 %v1697, %v1861
        %v1863 = vpop.f32.mrf.mxu0
        %v1864 = vadd.f32 %v1697, %v1863
        %1865 = vmatmul.bf16.gmra.mxu0 %v1667
        %v1866 = vpop.f32.mrf.mxu0
        %v1867 = vadd.f32 %v1697, %v1866
        %v1868 = vpop.f32.mrf.mxu0
        %v1869 = vadd.f32 %v1697, %v1868
        %1870 = vmatmul.bf16.gmra.mxu0 %v1668
        %v1871 = vpop.f32.mrf.mxu0
        %v1872 = vadd.f32 %v1697, %v1871
        %v1873 = vpop.f32.mrf.mxu0
        %v1874 = vadd.f32 %v1697, %v1873
        %1875 = vmatmul.bf16.gmra.mxu0 %v1669
        %v1876 = vpop.f32.mrf.mxu0
        %v1877 = vadd.f32 %v1697, %v1876
        %v1878 = vpop.f32.mrf.mxu0
        %v1879 = vadd.f32 %v1697, %v1878
        %1880 = vmatmul.bf16.gmra.mxu0 %v1670
        %v1881 = vpop.f32.mrf.mxu0
        %v1882 = vadd.f32 %v1697, %v1881
        %v1883 = vpop.f32.mrf.mxu0
        %v1884 = vadd.f32 %v1697, %v1883
        %1885 = vmatmul.bf16.gmra.mxu0 %v1671
        %v1886 = vpop.f32.mrf.mxu0
        %v1887 = vadd.f32 %v1697, %v1886
        %v1888 = vpop.f32.mrf.mxu0
        %v1889 = vadd.f32 %v1697, %v1888
        %1890 = vmatmul.bf16.gmra.mxu0 %v1672
        %v1891 = vpop.f32.mrf.mxu0
        %v1892 = vadd.f32 %v1697, %v1891
        %v1893 = vpop.f32.mrf.mxu0
        %v1894 = vadd.f32 %v1697, %v1893
        %1895 = vmatmul.bf16.gmra.mxu0 %v1673
        %v1896 = vpop.f32.mrf.mxu0
        %v1897 = vadd.f32 %v1697, %v1896
        %v1898 = vpop.f32.mrf.mxu0
        %v1899 = vadd.f32 %v1697, %v1898
        %1900 = vmatmul.bf16.gmra.mxu0 %v1674
        %v1901 = vpop.f32.mrf.mxu0
        %v1902 = vadd.f32 %v1697, %v1901
        %v1903 = vpop.f32.mrf.mxu0
        %v1904 = vadd.f32 %v1697, %v1903
        %1905 = vmatmul.bf16.gmra.mxu0 %v1675
        %v1906 = vpop.f32.mrf.mxu0
        %v1907 = vadd.f32 %v1697, %v1906
        %v1908 = vpop.f32.mrf.mxu0
        %v1909 = vadd.f32 %v1697, %v1908
        %1910 = vmatmul.bf16.gmra.mxu0 %v1676
        %v1911 = vpop.f32.mrf.mxu0
        %v1912 = vadd.f32 %v1697, %v1911
        %v1913 = vpop.f32.mrf.mxu0
        %v1914 = vadd.f32 %v1697, %v1913
        %1915 = vdwg.mxu0
        %v1916 = vmul.f32 %v1757, 0.02
        %v1917 = vmul.f32 %v1759, 0.02
        %v1918 = vmul.f32 %v1762, 0.02
        %v1919 = vmul.f32 %v1764, 0.02
        %v1920 = vmul.f32 %v1767, 0.02
        %v1921 = vmul.f32 %v1769, 0.02
        %v1922 = vmul.f32 %v1772, 0.02
        %v1923 = vmul.f32 %v1774, 0.02
        %v1924 = vmul.f32 %v1777, 0.02
        %v1925 = vmul.f32 %v1779, 0.02
        %v1926 = vmul.f32 %v1782, 0.02
        %v1927 = vmul.f32 %v1784, 0.02
        %v1928 = vmul.f32 %v1787, 0.02
        %v1929 = vmul.f32 %v1789, 0.02
        %v1930 = vmul.f32 %v1792, 0.02
        %v1931 = vmul.f32 %v1794, 0.02
        %v1932 = vmul.f32 %v1797, 0.02
        %v1933 = vmul.f32 %v1799, 0.02
        %v1934 = vmul.f32 %v1802, 0.02
        %v1935 = vmul.f32 %v1804, 0.02
        %v1936 = vmul.f32 %v1807, 0.02
        %v1937 = vmul.f32 %v1809, 0.02
        %v1938 = vmul.f32 %v1812, 0.02
        %v1939 = vmul.f32 %v1814, 0.02
        %v1940 = vmul.f32 %v1817, 0.02
        %v1941 = vmul.f32 %v1819, 0.02
        %v1942 = vmul.f32 %v1822, 0.02
        %v1943 = vmul.f32 %v1824, 0.02
        %v1944 = vmul.f32 %v1827, 0.02
        %v1945 = vmul.f32 %v1829, 0.02
        %v1946 = vmul.f32 %v1832, 0.02
        %v1947 = vmul.f32 %v1834, 0.02
        %v1948 = vmul.f32 %v1837, 0.02
        %v1949 = vmul.f32 %v1839, 0.02
        %v1950 = vmul.f32 %v1842, 0.02
        %v1951 = vmul.f32 %v1844, 0.02
        %v1952 = vmul.f32 %v1847, 0.02
        %v1953 = vmul.f32 %v1849, 0.02
        %v1954 = vmul.f32 %v1852, 0.02
        %v1955 = vmul.f32 %v1854, 0.02
        %v1956 = vmul.f32 %v1857, 0.02
        %v1957 = vmul.f32 %v1859, 0.02
        %v1958 = vmul.f32 %v1862, 0.02
        %v1959 = vmul.f32 %v1864, 0.02
        %v1960 = vmul.f32 %v1867, 0.02
        %v1961 = vmul.f32 %v1869, 0.02
        %v1962 = vmul.f32 %v1872, 0.02
        %v1963 = vmul.f32 %v1874, 0.02
        %v1964 = vmul.f32 %v1877, 0.02
        %v1965 = vmul.f32 %v1879, 0.02
        %v1966 = vmul.f32 %v1882, 0.02
        %v1967 = vmul.f32 %v1884, 0.02
        %v1968 = vmul.f32 %v1887, 0.02
        %v1969 = vmul.f32 %v1889, 0.02
        %v1970 = vmul.f32 %v1892, 0.02
        %v1971 = vmul.f32 %v1894, 0.02
        %v1972 = vmul.f32 %v1897, 0.02
        %v1973 = vmul.f32 %v1899, 0.02
        %v1974 = vmul.f32 %v1902, 0.02
        %v1975 = vmul.f32 %v1904, 0.02
        %v1976 = vmul.f32 %v1907, 0.02
        %v1977 = vmul.f32 %v1909, 0.02
        %v1978 = vmul.f32 %v1912, 0.02
        %v1979 = vmul.f32 %v1914, 0.02
        %v1980 = vmax.f32 %v1757, %v1916
        %v1981 = vmax.f32 %v1759, %v1917
        %v1982 = vmax.f32 %v1762, %v1918
        %v1983 = vmax.f32 %v1764, %v1919
        %v1984 = vmax.f32 %v1767, %v1920
        %v1985 = vmax.f32 %v1769, %v1921
        %v1986 = vmax.f32 %v1772, %v1922
        %v1987 = vmax.f32 %v1774, %v1923
        %v1988 = vmax.f32 %v1777, %v1924
        %v1989 = vmax.f32 %v1779, %v1925
        %v1990 = vmax.f32 %v1782, %v1926
        %v1991 = vmax.f32 %v1784, %v1927
        %v1992 = vmax.f32 %v1787, %v1928
        %v1993 = vmax.f32 %v1789, %v1929
        %v1994 = vmax.f32 %v1792, %v1930
        %v1995 = vmax.f32 %v1794, %v1931
        %v1996 = vmax.f32 %v1797, %v1932
        %v1997 = vmax.f32 %v1799, %v1933
        %v1998 = vmax.f32 %v1802, %v1934
        %v1999 = vmax.f32 %v1804, %v1935
        %v2000 = vmax.f32 %v1807, %v1936
        %v2001 = vmax.f32 %v1809, %v1937
        %v2002 = vmax.f32 %v1812, %v1938
        %v2003 = vmax.f32 %v1814, %v1939
        %v2004 = vmax.f32 %v1817, %v1940
        %v2005 = vmax.f32 %v1819, %v1941
        %v2006 = vmax.f32 %v1822, %v1942
        %v2007 = vmax.f32 %v1824, %v1943
        %v2008 = vmax.f32 %v1827, %v1944
        %v2009 = vmax.f32 %v1829, %v1945
        %v2010 = vmax.f32 %v1832, %v1946
        %v2011 = vmax.f32 %v1834, %v1947
        %v2012 = vmax.f32 %v1837, %v1948
        %v2013 = vmax.f32 %v1839, %v1949
        %v2014 = vmax.f32 %v1842, %v1950
        %v2015 = vmax.f32 %v1844, %v1951
        %v2016 = vmax.f32 %v1847, %v1952
        %v2017 = vmax.f32 %v1849, %v1953
        %v2018 = vmax.f32 %v1852, %v1954
        %v2019 = vmax.f32 %v1854, %v1955
        %v2020 = vmax.f32 %v1857, %v1956
        %v2021 = vmax.f32 %v1859, %v1957
        %v2022 = vmax.f32 %v1862, %v1958
        %v2023 = vmax.f32 %v1864, %v1959
        %v2024 = vmax.f32 %v1867, %v1960
        %v2025 = vmax.f32 %v1869, %v1961
        %v2026 = vmax.f32 %v1872, %v1962
        %v2027 = vmax.f32 %v1874, %v1963
        %v2028 = vmax.f32 %v1877, %v1964
        %v2029 = vmax.f32 %v1879, %v1965
        %v2030 = vmax.f32 %v1882, %v1966
        %v2031 = vmax.f32 %v1884, %v1967
        %v2032 = vmax.f32 %v1887, %v1968
        %v2033 = vmax.f32 %v1889, %v1969
        %v2034 = vmax.f32 %v1892, %v1970
        %v2035 = vmax.f32 %v1894, %v1971
        %v2036 = vmax.f32 %v1897, %v1972
        %v2037 = vmax.f32 %v1899, %v1973
        %v2038 = vmax.f32 %v1902, %v1974
        %v2039 = vmax.f32 %v1904, %v1975
        %v2040 = vmax.f32 %v1907, %v1976
        %v2041 = vmax.f32 %v1909, %v1977
        %v2042 = vmax.f32 %v1912, %v1978
        %v2043 = vmax.f32 %v1914, %v1979
        %v2044 = vpack.c.bf16 %v1981, %v1980
        %v2045 = vpack.c.bf16 %v1983, %v1982
        %v2046 = vpack.c.bf16 %v1985, %v1984
        %v2047 = vpack.c.bf16 %v1987, %v1986
        %v2048 = vpack.c.bf16 %v1989, %v1988
        %v2049 = vpack.c.bf16 %v1991, %v1990
        %v2050 = vpack.c.bf16 %v1993, %v1992
        %v2051 = vpack.c.bf16 %v1995, %v1994
        %v2052 = vpack.c.bf16 %v1997, %v1996
        %v2053 = vpack.c.bf16 %v1999, %v1998
        %v2054 = vpack.c.bf16 %v2001, %v2000
        %v2055 = vpack.c.bf16 %v2003, %v2002
        %v2056 = vpack.c.bf16 %v2005, %v2004
        %v2057 = vpack.c.bf16 %v2007, %v2006
        %v2058 = vpack.c.bf16 %v2009, %v2008
        %v2059 = vpack.c.bf16 %v2011, %v2010
        %v2060 = vpack.c.bf16 %v2013, %v2012
        %v2061 = vpack.c.bf16 %v2015, %v2014
        %v2062 = vpack.c.bf16 %v2017, %v2016
        %v2063 = vpack.c.bf16 %v2019, %v2018
        %v2064 = vpack.c.bf16 %v2021, %v2020
        %v2065 = vpack.c.bf16 %v2023, %v2022
        %v2066 = vpack.c.bf16 %v2025, %v2024
        %v2067 = vpack.c.bf16 %v2027, %v2026
        %v2068 = vpack.c.bf16 %v2029, %v2028
        %v2069 = vpack.c.bf16 %v2031, %v2030
        %v2070 = vpack.c.bf16 %v2033, %v2032
        %v2071 = vpack.c.bf16 %v2035, %v2034
        %v2072 = vpack.c.bf16 %v2037, %v2036
        %v2073 = vpack.c.bf16 %v2039, %v2038
        %v2074 = vpack.c.bf16 %v2041, %v2040
        %v2075 = vpack.c.bf16 %v2043, %v2042
        %s2076 = scalar_lea.vmem [#allocation5], 256
        %v2077 = vld [vmem:[%s2076] sm:$0xf]
        %v2078 = vld [vmem:[%s2076 + $0x4] sm:$0xf]
        %v2079 = vld [vmem:[%s2076 + $0x8] sm:$0xf]
        %v2080 = vld [vmem:[%s2076 + $0xc] sm:$0xf]
        %v2081 = vld [vmem:[%s2076 + $0x10] sm:$0xf]
        %v2082 = vld [vmem:[%s2076 + $0x14] sm:$0xf]
        %v2083 = vld [vmem:[%s2076 + $0x18] sm:$0xf]
        %v2084 = vld [vmem:[%s2076 + $0x1c] sm:$0xf]
        %v2085 = vld [vmem:[%s2076 + $0x20] sm:$0xf]
        %v2086 = vld [vmem:[%s2076 + $0x24] sm:$0xf]
        %v2087 = vld [vmem:[%s2076 + $0x28] sm:$0xf]
        %v2088 = vld [vmem:[%s2076 + $0x2c] sm:$0xf]
        %v2089 = vld [vmem:[%s2076 + $0x30] sm:$0xf]
        %v2090 = vld [vmem:[%s2076 + $0x34] sm:$0xf]
        %v2091 = vld [vmem:[%s2076 + $0x38] sm:$0xf]
        %v2092 = vld [vmem:[%s2076 + $0x3c] sm:$0xf]
        %s2093 = scalar_lea.vmem [#allocation7], 4
        %v2094 = vld [vmem:[%s2093] sm:$0x1]
        %v2096 = vperm.slane %v2094, 0
        %v2114 = vunpack.c.l.b16 %v2077
        %v2115 = vunpack.c.l.b16 %v2078
        %v2116 = vunpack.c.l.b16 %v2079
        %v2117 = vunpack.c.l.b16 %v2080
        %v2118 = vunpack.c.l.b16 %v2081
        %v2119 = vunpack.c.l.b16 %v2082
        %v2120 = vunpack.c.l.b16 %v2083
        %v2121 = vunpack.c.l.b16 %v2084
        %v2122 = vunpack.c.l.b16 %v2085
        %v2123 = vunpack.c.l.b16 %v2086
        %v2124 = vunpack.c.l.b16 %v2087
        %v2125 = vunpack.c.l.b16 %v2088
        %v2126 = vunpack.c.l.b16 %v2089
        %v2127 = vunpack.c.l.b16 %v2090
        %v2128 = vunpack.c.l.b16 %v2091
        %v2129 = vunpack.c.l.b16 %v2092
        %v2130 = vpack.c.b16 %v2115, %v2114
        %v2131 = vpack.c.b16 %v2117, %v2116
        %v2132 = vpack.c.b16 %v2119, %v2118
        %v2133 = vpack.c.b16 %v2121, %v2120
        %v2134 = vpack.c.b16 %v2123, %v2122
        %v2135 = vpack.c.b16 %v2125, %v2124
        %v2136 = vpack.c.b16 %v2127, %v2126
        %v2137 = vpack.c.b16 %v2129, %v2128
        %2146 = vmatpush.bf16.msra.mxu0 %v2137
        %2147 = vmatpush.bf16.msra.mxu0 %v2136
        %2148 = vmatpush.bf16.msra.mxu0 %v2135
        %2149 = vmatpush.bf16.msra.mxu0 %v2134
        %2150 = vmatpush.bf16.msra.mxu0 %v2133
        %2151 = vmatpush.bf16.msra.mxu0 %v2132
        %2152 = vmatpush.bf16.msra.mxu0 %v2131
        %2153 = vmatpush.bf16.msra.mxu0 %v2130
        %2154 = vmatmul.bf16.gmra.mxu0 %v2044
        %v2155 = vpop.f32.mrf.mxu0
        %v2156 = vadd.f32 %v2096, %v2155
        %v2157 = vpop.f32.mrf.mxu0
        %v2158 = vadd.f32 %v2096, %v2157
        %2159 = vmatmul.bf16.gmra.mxu0 %v2045
        %v2160 = vpop.f32.mrf.mxu0
        %v2161 = vadd.f32 %v2096, %v2160
        %v2162 = vpop.f32.mrf.mxu0
        %v2163 = vadd.f32 %v2096, %v2162
        %2164 = vmatmul.bf16.gmra.mxu0 %v2046
        %v2165 = vpop.f32.mrf.mxu0
        %v2166 = vadd.f32 %v2096, %v2165
        %v2167 = vpop.f32.mrf.mxu0
        %v2168 = vadd.f32 %v2096, %v2167
        %2169 = vmatmul.bf16.gmra.mxu0 %v2047
        %v2170 = vpop.f32.mrf.mxu0
        %v2171 = vadd.f32 %v2096, %v2170
        %v2172 = vpop.f32.mrf.mxu0
        %v2173 = vadd.f32 %v2096, %v2172
        %2174 = vmatmul.bf16.gmra.mxu0 %v2048
        %v2175 = vpop.f32.mrf.mxu0
        %v2176 = vadd.f32 %v2096, %v2175
        %v2177 = vpop.f32.mrf.mxu0
        %v2178 = vadd.f32 %v2096, %v2177
        %2179 = vmatmul.bf16.gmra.mxu0 %v2049
        %v2180 = vpop.f32.mrf.mxu0
        %v2181 = vadd.f32 %v2096, %v2180
        %v2182 = vpop.f32.mrf.mxu0
        %v2183 = vadd.f32 %v2096, %v2182
        %2184 = vmatmul.bf16.gmra.mxu0 %v2050
        %v2185 = vpop.f32.mrf.mxu0
        %v2186 = vadd.f32 %v2096, %v2185
        %v2187 = vpop.f32.mrf.mxu0
        %v2188 = vadd.f32 %v2096, %v2187
        %2189 = vmatmul.bf16.gmra.mxu0 %v2051
        %v2190 = vpop.f32.mrf.mxu0
        %v2191 = vadd.f32 %v2096, %v2190
        %v2192 = vpop.f32.mrf.mxu0
        %v2193 = vadd.f32 %v2096, %v2192
        %2194 = vmatmul.bf16.gmra.mxu0 %v2052
        %v2195 = vpop.f32.mrf.mxu0
        %v2196 = vadd.f32 %v2096, %v2195
        %v2197 = vpop.f32.mrf.mxu0
        %v2198 = vadd.f32 %v2096, %v2197
        %2199 = vmatmul.bf16.gmra.mxu0 %v2053
        %v2200 = vpop.f32.mrf.mxu0
        %v2201 = vadd.f32 %v2096, %v2200
        %v2202 = vpop.f32.mrf.mxu0
        %v2203 = vadd.f32 %v2096, %v2202
        %2204 = vmatmul.bf16.gmra.mxu0 %v2054
        %v2205 = vpop.f32.mrf.mxu0
        %v2206 = vadd.f32 %v2096, %v2205
        %v2207 = vpop.f32.mrf.mxu0
        %v2208 = vadd.f32 %v2096, %v2207
        %2209 = vmatmul.bf16.gmra.mxu0 %v2055
        %v2210 = vpop.f32.mrf.mxu0
        %v2211 = vadd.f32 %v2096, %v2210
        %v2212 = vpop.f32.mrf.mxu0
        %v2213 = vadd.f32 %v2096, %v2212
        %2214 = vmatmul.bf16.gmra.mxu0 %v2056
        %v2215 = vpop.f32.mrf.mxu0
        %v2216 = vadd.f32 %v2096, %v2215
        %v2217 = vpop.f32.mrf.mxu0
        %v2218 = vadd.f32 %v2096, %v2217
        %2219 = vmatmul.bf16.gmra.mxu0 %v2057
        %v2220 = vpop.f32.mrf.mxu0
        %v2221 = vadd.f32 %v2096, %v2220
        %v2222 = vpop.f32.mrf.mxu0
        %v2223 = vadd.f32 %v2096, %v2222
        %2224 = vmatmul.bf16.gmra.mxu0 %v2058
        %v2225 = vpop.f32.mrf.mxu0
        %v2226 = vadd.f32 %v2096, %v2225
        %v2227 = vpop.f32.mrf.mxu0
        %v2228 = vadd.f32 %v2096, %v2227
        %2229 = vmatmul.bf16.gmra.mxu0 %v2059
        %v2230 = vpop.f32.mrf.mxu0
        %v2231 = vadd.f32 %v2096, %v2230
        %v2232 = vpop.f32.mrf.mxu0
        %v2233 = vadd.f32 %v2096, %v2232
        %2234 = vmatmul.bf16.gmra.mxu0 %v2060
        %v2235 = vpop.f32.mrf.mxu0
        %v2236 = vadd.f32 %v2096, %v2235
        %v2237 = vpop.f32.mrf.mxu0
        %v2238 = vadd.f32 %v2096, %v2237
        %2239 = vmatmul.bf16.gmra.mxu0 %v2061
        %v2240 = vpop.f32.mrf.mxu0
        %v2241 = vadd.f32 %v2096, %v2240
        %v2242 = vpop.f32.mrf.mxu0
        %v2243 = vadd.f32 %v2096, %v2242
        %2244 = vmatmul.bf16.gmra.mxu0 %v2062
        %v2245 = vpop.f32.mrf.mxu0
        %v2246 = vadd.f32 %v2096, %v2245
        %v2247 = vpop.f32.mrf.mxu0
        %v2248 = vadd.f32 %v2096, %v2247
        %2249 = vmatmul.bf16.gmra.mxu0 %v2063
        %v2250 = vpop.f32.mrf.mxu0
        %v2251 = vadd.f32 %v2096, %v2250
        %v2252 = vpop.f32.mrf.mxu0
        %v2253 = vadd.f32 %v2096, %v2252
        %2254 = vmatmul.bf16.gmra.mxu0 %v2064
        %v2255 = vpop.f32.mrf.mxu0
        %v2256 = vadd.f32 %v2096, %v2255
        %v2257 = vpop.f32.mrf.mxu0
        %v2258 = vadd.f32 %v2096, %v2257
        %2259 = vmatmul.bf16.gmra.mxu0 %v2065
        %v2260 = vpop.f32.mrf.mxu0
        %v2261 = vadd.f32 %v2096, %v2260
        %v2262 = vpop.f32.mrf.mxu0
        %v2263 = vadd.f32 %v2096, %v2262
        %2264 = vmatmul.bf16.gmra.mxu0 %v2066
        %v2265 = vpop.f32.mrf.mxu0
        %v2266 = vadd.f32 %v2096, %v2265
        %v2267 = vpop.f32.mrf.mxu0
        %v2268 = vadd.f32 %v2096, %v2267
        %2269 = vmatmul.bf16.gmra.mxu0 %v2067
        %v2270 = vpop.f32.mrf.mxu0
        %v2271 = vadd.f32 %v2096, %v2270
        %v2272 = vpop.f32.mrf.mxu0
        %v2273 = vadd.f32 %v2096, %v2272
        %2274 = vmatmul.bf16.gmra.mxu0 %v2068
        %v2275 = vpop.f32.mrf.mxu0
        %v2276 = vadd.f32 %v2096, %v2275
        %v2277 = vpop.f32.mrf.mxu0
        %v2278 = vadd.f32 %v2096, %v2277
        %2279 = vmatmul.bf16.gmra.mxu0 %v2069
        %v2280 = vpop.f32.mrf.mxu0
        %v2281 = vadd.f32 %v2096, %v2280
        %v2282 = vpop.f32.mrf.mxu0
        %v2283 = vadd.f32 %v2096, %v2282
        %2284 = vmatmul.bf16.gmra.mxu0 %v2070
        %v2285 = vpop.f32.mrf.mxu0
        %v2286 = vadd.f32 %v2096, %v2285
        %v2287 = vpop.f32.mrf.mxu0
        %v2288 = vadd.f32 %v2096, %v2287
        %2289 = vmatmul.bf16.gmra.mxu0 %v2071
        %v2290 = vpop.f32.mrf.mxu0
        %v2291 = vadd.f32 %v2096, %v2290
        %v2292 = vpop.f32.mrf.mxu0
        %v2293 = vadd.f32 %v2096, %v2292
        %2294 = vmatmul.bf16.gmra.mxu0 %v2072
        %v2295 = vpop.f32.mrf.mxu0
        %v2296 = vadd.f32 %v2096, %v2295
        %v2297 = vpop.f32.mrf.mxu0
        %v2298 = vadd.f32 %v2096, %v2297
        %2299 = vmatmul.bf16.gmra.mxu0 %v2073
        %v2300 = vpop.f32.mrf.mxu0
        %v2301 = vadd.f32 %v2096, %v2300
        %v2302 = vpop.f32.mrf.mxu0
        %v2303 = vadd.f32 %v2096, %v2302
        %2304 = vmatmul.bf16.gmra.mxu0 %v2074
        %v2305 = vpop.f32.mrf.mxu0
        %v2306 = vadd.f32 %v2096, %v2305
        %v2307 = vpop.f32.mrf.mxu0
        %v2308 = vadd.f32 %v2096, %v2307
        %2309 = vmatmul.bf16.gmra.mxu0 %v2075
        %v2310 = vpop.f32.mrf.mxu0
        %v2311 = vadd.f32 %v2096, %v2310
        %v2312 = vpop.f32.mrf.mxu0
        %v2313 = vadd.f32 %v2096, %v2312
        %2314 = vdwg.mxu0
        %v2315 = vmul.f32 %v2156, 0.02
        %v2316 = vmul.f32 %v2158, 0.02
        %v2317 = vmul.f32 %v2161, 0.02
        %v2318 = vmul.f32 %v2163, 0.02
        %v2319 = vmul.f32 %v2166, 0.02
        %v2320 = vmul.f32 %v2168, 0.02
        %v2321 = vmul.f32 %v2171, 0.02
        %v2322 = vmul.f32 %v2173, 0.02
        %v2323 = vmul.f32 %v2176, 0.02
        %v2324 = vmul.f32 %v2178, 0.02
        %v2325 = vmul.f32 %v2181, 0.02
        %v2326 = vmul.f32 %v2183, 0.02
        %v2327 = vmul.f32 %v2186, 0.02
        %v2328 = vmul.f32 %v2188, 0.02
        %v2329 = vmul.f32 %v2191, 0.02
        %v2330 = vmul.f32 %v2193, 0.02
        %v2331 = vmul.f32 %v2196, 0.02
        %v2332 = vmul.f32 %v2198, 0.02
        %v2333 = vmul.f32 %v2201, 0.02
        %v2334 = vmul.f32 %v2203, 0.02
        %v2335 = vmul.f32 %v2206, 0.02
        %v2336 = vmul.f32 %v2208, 0.02
        %v2337 = vmul.f32 %v2211, 0.02
        %v2338 = vmul.f32 %v2213, 0.02
        %v2339 = vmul.f32 %v2216, 0.02
        %v2340 = vmul.f32 %v2218, 0.02
        %v2341 = vmul.f32 %v2221, 0.02
        %v2342 = vmul.f32 %v2223, 0.02
        %v2343 = vmul.f32 %v2226, 0.02
        %v2344 = vmul.f32 %v2228, 0.02
        %v2345 = vmul.f32 %v2231, 0.02
        %v2346 = vmul.f32 %v2233, 0.02
        %v2347 = vmul.f32 %v2236, 0.02
        %v2348 = vmul.f32 %v2238, 0.02
        %v2349 = vmul.f32 %v2241, 0.02
        %v2350 = vmul.f32 %v2243, 0.02
        %v2351 = vmul.f32 %v2246, 0.02
        %v2352 = vmul.f32 %v2248, 0.02
        %v2353 = vmul.f32 %v2251, 0.02
        %v2354 = vmul.f32 %v2253, 0.02
        %v2355 = vmul.f32 %v2256, 0.02
        %v2356 = vmul.f32 %v2258, 0.02
        %v2357 = vmul.f32 %v2261, 0.02
        %v2358 = vmul.f32 %v2263, 0.02
        %v2359 = vmul.f32 %v2266, 0.02
        %v2360 = vmul.f32 %v2268, 0.02
        %v2361 = vmul.f32 %v2271, 0.02
        %v2362 = vmul.f32 %v2273, 0.02
        %v2363 = vmul.f32 %v2276, 0.02
        %v2364 = vmul.f32 %v2278, 0.02
        %v2365 = vmul.f32 %v2281, 0.02
        %v2366 = vmul.f32 %v2283, 0.02
        %v2367 = vmul.f32 %v2286, 0.02
        %v2368 = vmul.f32 %v2288, 0.02
        %v2369 = vmul.f32 %v2291, 0.02
        %v2370 = vmul.f32 %v2293, 0.02
        %v2371 = vmul.f32 %v2296, 0.02
        %v2372 = vmul.f32 %v2298, 0.02
        %v2373 = vmul.f32 %v2301, 0.02
        %v2374 = vmul.f32 %v2303, 0.02
        %v2375 = vmul.f32 %v2306, 0.02
        %v2376 = vmul.f32 %v2308, 0.02
        %v2377 = vmul.f32 %v2311, 0.02
        %v2378 = vmul.f32 %v2313, 0.02
        %v2379 = vmax.f32 %v2156, %v2315
        %v2380 = vmax.f32 %v2158, %v2316
        %v2381 = vmax.f32 %v2161, %v2317
        %v2382 = vmax.f32 %v2163, %v2318
        %v2383 = vmax.f32 %v2166, %v2319
        %v2384 = vmax.f32 %v2168, %v2320
        %v2385 = vmax.f32 %v2171, %v2321
        %v2386 = vmax.f32 %v2173, %v2322
        %v2387 = vmax.f32 %v2176, %v2323
        %v2388 = vmax.f32 %v2178, %v2324
        %v2389 = vmax.f32 %v2181, %v2325
        %v2390 = vmax.f32 %v2183, %v2326
        %v2391 = vmax.f32 %v2186, %v2327
        %v2392 = vmax.f32 %v2188, %v2328
        %v2393 = vmax.f32 %v2191, %v2329
        %v2394 = vmax.f32 %v2193, %v2330
        %v2395 = vmax.f32 %v2196, %v2331
        %v2396 = vmax.f32 %v2198, %v2332
        %v2397 = vmax.f32 %v2201, %v2333
        %v2398 = vmax.f32 %v2203, %v2334
        %v2399 = vmax.f32 %v2206, %v2335
        %v2400 = vmax.f32 %v2208, %v2336
        %v2401 = vmax.f32 %v2211, %v2337
        %v2402 = vmax.f32 %v2213, %v2338
        %v2403 = vmax.f32 %v2216, %v2339
        %v2404 = vmax.f32 %v2218, %v2340
        %v2405 = vmax.f32 %v2221, %v2341
        %v2406 = vmax.f32 %v2223, %v2342
        %v2407 = vmax.f32 %v2226, %v2343
        %v2408 = vmax.f32 %v2228, %v2344
        %v2409 = vmax.f32 %v2231, %v2345
        %v2410 = vmax.f32 %v2233, %v2346
        %v2411 = vmax.f32 %v2236, %v2347
        %v2412 = vmax.f32 %v2238, %v2348
        %v2413 = vmax.f32 %v2241, %v2349
        %v2414 = vmax.f32 %v2243, %v2350
        %v2415 = vmax.f32 %v2246, %v2351
        %v2416 = vmax.f32 %v2248, %v2352
        %v2417 = vmax.f32 %v2251, %v2353
        %v2418 = vmax.f32 %v2253, %v2354
        %v2419 = vmax.f32 %v2256, %v2355
        %v2420 = vmax.f32 %v2258, %v2356
        %v2421 = vmax.f32 %v2261, %v2357
        %v2422 = vmax.f32 %v2263, %v2358
        %v2423 = vmax.f32 %v2266, %v2359
        %v2424 = vmax.f32 %v2268, %v2360
        %v2425 = vmax.f32 %v2271, %v2361
        %v2426 = vmax.f32 %v2273, %v2362
        %v2427 = vmax.f32 %v2276, %v2363
        %v2428 = vmax.f32 %v2278, %v2364
        %v2429 = vmax.f32 %v2281, %v2365
        %v2430 = vmax.f32 %v2283, %v2366
        %v2431 = vmax.f32 %v2286, %v2367
        %v2432 = vmax.f32 %v2288, %v2368
        %v2433 = vmax.f32 %v2291, %v2369
        %v2434 = vmax.f32 %v2293, %v2370
        %v2435 = vmax.f32 %v2296, %v2371
        %v2436 = vmax.f32 %v2298, %v2372
        %v2437 = vmax.f32 %v2301, %v2373
        %v2438 = vmax.f32 %v2303, %v2374
        %v2439 = vmax.f32 %v2306, %v2375
        %v2440 = vmax.f32 %v2308, %v2376
        %v2441 = vmax.f32 %v2311, %v2377
        %v2442 = vmax.f32 %v2313, %v2378
        %v2443 = vpack.c.bf16 %v2380, %v2379
        %v2444 = vpack.c.bf16 %v2382, %v2381
        %v2445 = vpack.c.bf16 %v2384, %v2383
        %v2446 = vpack.c.bf16 %v2386, %v2385
        %v2447 = vpack.c.bf16 %v2388, %v2387
        %v2448 = vpack.c.bf16 %v2390, %v2389
        %v2449 = vpack.c.bf16 %v2392, %v2391
        %v2450 = vpack.c.bf16 %v2394, %v2393
        %v2451 = vpack.c.bf16 %v2396, %v2395
        %v2452 = vpack.c.bf16 %v2398, %v2397
        %v2453 = vpack.c.bf16 %v2400, %v2399
        %v2454 = vpack.c.bf16 %v2402, %v2401
        %v2455 = vpack.c.bf16 %v2404, %v2403
        %v2456 = vpack.c.bf16 %v2406, %v2405
        %v2457 = vpack.c.bf16 %v2408, %v2407
        %v2458 = vpack.c.bf16 %v2410, %v2409
        %v2459 = vpack.c.bf16 %v2412, %v2411
        %v2460 = vpack.c.bf16 %v2414, %v2413
        %v2461 = vpack.c.bf16 %v2416, %v2415
        %v2462 = vpack.c.bf16 %v2418, %v2417
        %v2463 = vpack.c.bf16 %v2420, %v2419
        %v2464 = vpack.c.bf16 %v2422, %v2421
        %v2465 = vpack.c.bf16 %v2424, %v2423
        %v2466 = vpack.c.bf16 %v2426, %v2425
        %v2467 = vpack.c.bf16 %v2428, %v2427
        %v2468 = vpack.c.bf16 %v2430, %v2429
        %v2469 = vpack.c.bf16 %v2432, %v2431
        %v2470 = vpack.c.bf16 %v2434, %v2433
        %v2471 = vpack.c.bf16 %v2436, %v2435
        %v2472 = vpack.c.bf16 %v2438, %v2437
        %v2473 = vpack.c.bf16 %v2440, %v2439
        %v2474 = vpack.c.bf16 %v2442, %v2441
        %s2475 = scalar_lea.vmem [#allocation5], 320
        %v2476 = vld [vmem:[%s2475] sm:$0xf]
        %v2477 = vld [vmem:[%s2475 + $0x4] sm:$0xf]
        %v2478 = vld [vmem:[%s2475 + $0x8] sm:$0xf]
        %v2479 = vld [vmem:[%s2475 + $0xc] sm:$0xf]
        %v2480 = vld [vmem:[%s2475 + $0x10] sm:$0xf]
        %v2481 = vld [vmem:[%s2475 + $0x14] sm:$0xf]
        %v2482 = vld [vmem:[%s2475 + $0x18] sm:$0xf]
        %v2483 = vld [vmem:[%s2475 + $0x1c] sm:$0xf]
        %v2484 = vld [vmem:[%s2475 + $0x20] sm:$0xf]
        %v2485 = vld [vmem:[%s2475 + $0x24] sm:$0xf]
        %v2486 = vld [vmem:[%s2475 + $0x28] sm:$0xf]
        %v2487 = vld [vmem:[%s2475 + $0x2c] sm:$0xf]
        %v2488 = vld [vmem:[%s2475 + $0x30] sm:$0xf]
        %v2489 = vld [vmem:[%s2475 + $0x34] sm:$0xf]
        %v2490 = vld [vmem:[%s2475 + $0x38] sm:$0xf]
        %v2491 = vld [vmem:[%s2475 + $0x3c] sm:$0xf]
        %s2492 = scalar_lea.vmem [#allocation7], 5
        %v2493 = vld [vmem:[%s2492] sm:$0x1]
        %v2495 = vperm.slane %v2493, 0
        %v2513 = vunpack.c.l.b16 %v2476
        %v2514 = vunpack.c.l.b16 %v2477
        %v2515 = vunpack.c.l.b16 %v2478
        %v2516 = vunpack.c.l.b16 %v2479
        %v2517 = vunpack.c.l.b16 %v2480
        %v2518 = vunpack.c.l.b16 %v2481
        %v2519 = vunpack.c.l.b16 %v2482
        %v2520 = vunpack.c.l.b16 %v2483
        %v2521 = vunpack.c.l.b16 %v2484
        %v2522 = vunpack.c.l.b16 %v2485
        %v2523 = vunpack.c.l.b16 %v2486
        %v2524 = vunpack.c.l.b16 %v2487
        %v2525 = vunpack.c.l.b16 %v2488
        %v2526 = vunpack.c.l.b16 %v2489
        %v2527 = vunpack.c.l.b16 %v2490
        %v2528 = vunpack.c.l.b16 %v2491
        %v2529 = vpack.c.b16 %v2514, %v2513
        %v2530 = vpack.c.b16 %v2516, %v2515
        %v2531 = vpack.c.b16 %v2518, %v2517
        %v2532 = vpack.c.b16 %v2520, %v2519
        %v2533 = vpack.c.b16 %v2522, %v2521
        %v2534 = vpack.c.b16 %v2524, %v2523
        %v2535 = vpack.c.b16 %v2526, %v2525
        %v2536 = vpack.c.b16 %v2528, %v2527
        %2545 = vmatpush.bf16.msra.mxu0 %v2536
        %2546 = vmatpush.bf16.msra.mxu0 %v2535
        %2547 = vmatpush.bf16.msra.mxu0 %v2534
        %2548 = vmatpush.bf16.msra.mxu0 %v2533
        %2549 = vmatpush.bf16.msra.mxu0 %v2532
        %2550 = vmatpush.bf16.msra.mxu0 %v2531
        %2551 = vmatpush.bf16.msra.mxu0 %v2530
        %2552 = vmatpush.bf16.msra.mxu0 %v2529
        %2553 = vmatmul.bf16.gmra.mxu0 %v2443
        %v2554 = vpop.f32.mrf.mxu0
        %v2555 = vadd.f32 %v2495, %v2554
        %v2556 = vpop.f32.mrf.mxu0
        %v2557 = vadd.f32 %v2495, %v2556
        %2558 = vmatmul.bf16.gmra.mxu0 %v2444
        %v2559 = vpop.f32.mrf.mxu0
        %v2560 = vadd.f32 %v2495, %v2559
        %v2561 = vpop.f32.mrf.mxu0
        %v2562 = vadd.f32 %v2495, %v2561
        %2563 = vmatmul.bf16.gmra.mxu0 %v2445
        %v2564 = vpop.f32.mrf.mxu0
        %v2565 = vadd.f32 %v2495, %v2564
        %v2566 = vpop.f32.mrf.mxu0
        %v2567 = vadd.f32 %v2495, %v2566
        %2568 = vmatmul.bf16.gmra.mxu0 %v2446
        %v2569 = vpop.f32.mrf.mxu0
        %v2570 = vadd.f32 %v2495, %v2569
        %v2571 = vpop.f32.mrf.mxu0
        %v2572 = vadd.f32 %v2495, %v2571
        %2573 = vmatmul.bf16.gmra.mxu0 %v2447
        %v2574 = vpop.f32.mrf.mxu0
        %v2575 = vadd.f32 %v2495, %v2574
        %v2576 = vpop.f32.mrf.mxu0
        %v2577 = vadd.f32 %v2495, %v2576
        %2578 = vmatmul.bf16.gmra.mxu0 %v2448
        %v2579 = vpop.f32.mrf.mxu0
        %v2580 = vadd.f32 %v2495, %v2579
        %v2581 = vpop.f32.mrf.mxu0
        %v2582 = vadd.f32 %v2495, %v2581
        %2583 = vmatmul.bf16.gmra.mxu0 %v2449
        %v2584 = vpop.f32.mrf.mxu0
        %v2585 = vadd.f32 %v2495, %v2584
        %v2586 = vpop.f32.mrf.mxu0
        %v2587 = vadd.f32 %v2495, %v2586
        %2588 = vmatmul.bf16.gmra.mxu0 %v2450
        %v2589 = vpop.f32.mrf.mxu0
        %v2590 = vadd.f32 %v2495, %v2589
        %v2591 = vpop.f32.mrf.mxu0
        %v2592 = vadd.f32 %v2495, %v2591
        %2593 = vmatmul.bf16.gmra.mxu0 %v2451
        %v2594 = vpop.f32.mrf.mxu0
        %v2595 = vadd.f32 %v2495, %v2594
        %v2596 = vpop.f32.mrf.mxu0
        %v2597 = vadd.f32 %v2495, %v2596
        %2598 = vmatmul.bf16.gmra.mxu0 %v2452
        %v2599 = vpop.f32.mrf.mxu0
        %v2600 = vadd.f32 %v2495, %v2599
        %v2601 = vpop.f32.mrf.mxu0
        %v2602 = vadd.f32 %v2495, %v2601
        %2603 = vmatmul.bf16.gmra.mxu0 %v2453
        %v2604 = vpop.f32.mrf.mxu0
        %v2605 = vadd.f32 %v2495, %v2604
        %v2606 = vpop.f32.mrf.mxu0
        %v2607 = vadd.f32 %v2495, %v2606
        %2608 = vmatmul.bf16.gmra.mxu0 %v2454
        %v2609 = vpop.f32.mrf.mxu0
        %v2610 = vadd.f32 %v2495, %v2609
        %v2611 = vpop.f32.mrf.mxu0
        %v2612 = vadd.f32 %v2495, %v2611
        %2613 = vmatmul.bf16.gmra.mxu0 %v2455
        %v2614 = vpop.f32.mrf.mxu0
        %v2615 = vadd.f32 %v2495, %v2614
        %v2616 = vpop.f32.mrf.mxu0
        %v2617 = vadd.f32 %v2495, %v2616
        %2618 = vmatmul.bf16.gmra.mxu0 %v2456
        %v2619 = vpop.f32.mrf.mxu0
        %v2620 = vadd.f32 %v2495, %v2619
        %v2621 = vpop.f32.mrf.mxu0
        %v2622 = vadd.f32 %v2495, %v2621
        %2623 = vmatmul.bf16.gmra.mxu0 %v2457
        %v2624 = vpop.f32.mrf.mxu0
        %v2625 = vadd.f32 %v2495, %v2624
        %v2626 = vpop.f32.mrf.mxu0
        %v2627 = vadd.f32 %v2495, %v2626
        %2628 = vmatmul.bf16.gmra.mxu0 %v2458
        %v2629 = vpop.f32.mrf.mxu0
        %v2630 = vadd.f32 %v2495, %v2629
        %v2631 = vpop.f32.mrf.mxu0
        %v2632 = vadd.f32 %v2495, %v2631
        %2633 = vmatmul.bf16.gmra.mxu0 %v2459
        %v2634 = vpop.f32.mrf.mxu0
        %v2635 = vadd.f32 %v2495, %v2634
        %v2636 = vpop.f32.mrf.mxu0
        %v2637 = vadd.f32 %v2495, %v2636
        %2638 = vmatmul.bf16.gmra.mxu0 %v2460
        %v2639 = vpop.f32.mrf.mxu0
        %v2640 = vadd.f32 %v2495, %v2639
        %v2641 = vpop.f32.mrf.mxu0
        %v2642 = vadd.f32 %v2495, %v2641
        %2643 = vmatmul.bf16.gmra.mxu0 %v2461
        %v2644 = vpop.f32.mrf.mxu0
        %v2645 = vadd.f32 %v2495, %v2644
        %v2646 = vpop.f32.mrf.mxu0
        %v2647 = vadd.f32 %v2495, %v2646
        %2648 = vmatmul.bf16.gmra.mxu0 %v2462
        %v2649 = vpop.f32.mrf.mxu0
        %v2650 = vadd.f32 %v2495, %v2649
        %v2651 = vpop.f32.mrf.mxu0
        %v2652 = vadd.f32 %v2495, %v2651
        %2653 = vmatmul.bf16.gmra.mxu0 %v2463
        %v2654 = vpop.f32.mrf.mxu0
        %v2655 = vadd.f32 %v2495, %v2654
        %v2656 = vpop.f32.mrf.mxu0
        %v2657 = vadd.f32 %v2495, %v2656
        %2658 = vmatmul.bf16.gmra.mxu0 %v2464
        %v2659 = vpop.f32.mrf.mxu0
        %v2660 = vadd.f32 %v2495, %v2659
        %v2661 = vpop.f32.mrf.mxu0
        %v2662 = vadd.f32 %v2495, %v2661
        %2663 = vmatmul.bf16.gmra.mxu0 %v2465
        %v2664 = vpop.f32.mrf.mxu0
        %v2665 = vadd.f32 %v2495, %v2664
        %v2666 = vpop.f32.mrf.mxu0
        %v2667 = vadd.f32 %v2495, %v2666
        %2668 = vmatmul.bf16.gmra.mxu0 %v2466
        %v2669 = vpop.f32.mrf.mxu0
        %v2670 = vadd.f32 %v2495, %v2669
        %v2671 = vpop.f32.mrf.mxu0
        %v2672 = vadd.f32 %v2495, %v2671
        %2673 = vmatmul.bf16.gmra.mxu0 %v2467
        %v2674 = vpop.f32.mrf.mxu0
        %v2675 = vadd.f32 %v2495, %v2674
        %v2676 = vpop.f32.mrf.mxu0
        %v2677 = vadd.f32 %v2495, %v2676
        %2678 = vmatmul.bf16.gmra.mxu0 %v2468
        %v2679 = vpop.f32.mrf.mxu0
        %v2680 = vadd.f32 %v2495, %v2679
        %v2681 = vpop.f32.mrf.mxu0
        %v2682 = vadd.f32 %v2495, %v2681
        %2683 = vmatmul.bf16.gmra.mxu0 %v2469
        %v2684 = vpop.f32.mrf.mxu0
        %v2685 = vadd.f32 %v2495, %v2684
        %v2686 = vpop.f32.mrf.mxu0
        %v2687 = vadd.f32 %v2495, %v2686
        %2688 = vmatmul.bf16.gmra.mxu0 %v2470
        %v2689 = vpop.f32.mrf.mxu0
        %v2690 = vadd.f32 %v2495, %v2689
        %v2691 = vpop.f32.mrf.mxu0
        %v2692 = vadd.f32 %v2495, %v2691
        %2693 = vmatmul.bf16.gmra.mxu0 %v2471
        %v2694 = vpop.f32.mrf.mxu0
        %v2695 = vadd.f32 %v2495, %v2694
        %v2696 = vpop.f32.mrf.mxu0
        %v2697 = vadd.f32 %v2495, %v2696
        %2698 = vmatmul.bf16.gmra.mxu0 %v2472
        %v2699 = vpop.f32.mrf.mxu0
        %v2700 = vadd.f32 %v2495, %v2699
        %v2701 = vpop.f32.mrf.mxu0
        %v2702 = vadd.f32 %v2495, %v2701
        %2703 = vmatmul.bf16.gmra.mxu0 %v2473
        %v2704 = vpop.f32.mrf.mxu0
        %v2705 = vadd.f32 %v2495, %v2704
        %v2706 = vpop.f32.mrf.mxu0
        %v2707 = vadd.f32 %v2495, %v2706
        %2708 = vmatmul.bf16.gmra.mxu0 %v2474
        %v2709 = vpop.f32.mrf.mxu0
        %v2710 = vadd.f32 %v2495, %v2709
        %v2711 = vpop.f32.mrf.mxu0
        %v2712 = vadd.f32 %v2495, %v2711
        %2713 = vdwg.mxu0
        %v2714 = vmul.f32 %v2555, 0.02
        %v2715 = vmul.f32 %v2557, 0.02
        %v2716 = vmul.f32 %v2560, 0.02
        %v2717 = vmul.f32 %v2562, 0.02
        %v2718 = vmul.f32 %v2565, 0.02
        %v2719 = vmul.f32 %v2567, 0.02
        %v2720 = vmul.f32 %v2570, 0.02
        %v2721 = vmul.f32 %v2572, 0.02
        %v2722 = vmul.f32 %v2575, 0.02
        %v2723 = vmul.f32 %v2577, 0.02
        %v2724 = vmul.f32 %v2580, 0.02
        %v2725 = vmul.f32 %v2582, 0.02
        %v2726 = vmul.f32 %v2585, 0.02
        %v2727 = vmul.f32 %v2587, 0.02
        %v2728 = vmul.f32 %v2590, 0.02
        %v2729 = vmul.f32 %v2592, 0.02
        %v2730 = vmul.f32 %v2595, 0.02
        %v2731 = vmul.f32 %v2597, 0.02
        %v2732 = vmul.f32 %v2600, 0.02
        %v2733 = vmul.f32 %v2602, 0.02
        %v2734 = vmul.f32 %v2605, 0.02
        %v2735 = vmul.f32 %v2607, 0.02
        %v2736 = vmul.f32 %v2610, 0.02
        %v2737 = vmul.f32 %v2612, 0.02
        %v2738 = vmul.f32 %v2615, 0.02
        %v2739 = vmul.f32 %v2617, 0.02
        %v2740 = vmul.f32 %v2620, 0.02
        %v2741 = vmul.f32 %v2622, 0.02
        %v2742 = vmul.f32 %v2625, 0.02
        %v2743 = vmul.f32 %v2627, 0.02
        %v2744 = vmul.f32 %v2630, 0.02
        %v2745 = vmul.f32 %v2632, 0.02
        %v2746 = vmul.f32 %v2635, 0.02
        %v2747 = vmul.f32 %v2637, 0.02
        %v2748 = vmul.f32 %v2640, 0.02
        %v2749 = vmul.f32 %v2642, 0.02
        %v2750 = vmul.f32 %v2645, 0.02
        %v2751 = vmul.f32 %v2647, 0.02
        %v2752 = vmul.f32 %v2650, 0.02
        %v2753 = vmul.f32 %v2652, 0.02
        %v2754 = vmul.f32 %v2655, 0.02
        %v2755 = vmul.f32 %v2657, 0.02
        %v2756 = vmul.f32 %v2660, 0.02
        %v2757 = vmul.f32 %v2662, 0.02
        %v2758 = vmul.f32 %v2665, 0.02
        %v2759 = vmul.f32 %v2667, 0.02
        %v2760 = vmul.f32 %v2670, 0.02
        %v2761 = vmul.f32 %v2672, 0.02
        %v2762 = vmul.f32 %v2675, 0.02
        %v2763 = vmul.f32 %v2677, 0.02
        %v2764 = vmul.f32 %v2680, 0.02
        %v2765 = vmul.f32 %v2682, 0.02
        %v2766 = vmul.f32 %v2685, 0.02
        %v2767 = vmul.f32 %v2687, 0.02
        %v2768 = vmul.f32 %v2690, 0.02
        %v2769 = vmul.f32 %v2692, 0.02
        %v2770 = vmul.f32 %v2695, 0.02
        %v2771 = vmul.f32 %v2697, 0.02
        %v2772 = vmul.f32 %v2700, 0.02
        %v2773 = vmul.f32 %v2702, 0.02
        %v2774 = vmul.f32 %v2705, 0.02
        %v2775 = vmul.f32 %v2707, 0.02
        %v2776 = vmul.f32 %v2710, 0.02
        %v2777 = vmul.f32 %v2712, 0.02
        %v2778 = vmax.f32 %v2555, %v2714
        %v2779 = vmax.f32 %v2557, %v2715
        %v2780 = vmax.f32 %v2560, %v2716
        %v2781 = vmax.f32 %v2562, %v2717
        %v2782 = vmax.f32 %v2565, %v2718
        %v2783 = vmax.f32 %v2567, %v2719
        %v2784 = vmax.f32 %v2570, %v2720
        %v2785 = vmax.f32 %v2572, %v2721
        %v2786 = vmax.f32 %v2575, %v2722
        %v2787 = vmax.f32 %v2577, %v2723
        %v2788 = vmax.f32 %v2580, %v2724
        %v2789 = vmax.f32 %v2582, %v2725
        %v2790 = vmax.f32 %v2585, %v2726
        %v2791 = vmax.f32 %v2587, %v2727
        %v2792 = vmax.f32 %v2590, %v2728
        %v2793 = vmax.f32 %v2592, %v2729
        %v2794 = vmax.f32 %v2595, %v2730
        %v2795 = vmax.f32 %v2597, %v2731
        %v2796 = vmax.f32 %v2600, %v2732
        %v2797 = vmax.f32 %v2602, %v2733
        %v2798 = vmax.f32 %v2605, %v2734
        %v2799 = vmax.f32 %v2607, %v2735
        %v2800 = vmax.f32 %v2610, %v2736
        %v2801 = vmax.f32 %v2612, %v2737
        %v2802 = vmax.f32 %v2615, %v2738
        %v2803 = vmax.f32 %v2617, %v2739
        %v2804 = vmax.f32 %v2620, %v2740
        %v2805 = vmax.f32 %v2622, %v2741
        %v2806 = vmax.f32 %v2625, %v2742
        %v2807 = vmax.f32 %v2627, %v2743
        %v2808 = vmax.f32 %v2630, %v2744
        %v2809 = vmax.f32 %v2632, %v2745
        %v2810 = vmax.f32 %v2635, %v2746
        %v2811 = vmax.f32 %v2637, %v2747
        %v2812 = vmax.f32 %v2640, %v2748
        %v2813 = vmax.f32 %v2642, %v2749
        %v2814 = vmax.f32 %v2645, %v2750
        %v2815 = vmax.f32 %v2647, %v2751
        %v2816 = vmax.f32 %v2650, %v2752
        %v2817 = vmax.f32 %v2652, %v2753
        %v2818 = vmax.f32 %v2655, %v2754
        %v2819 = vmax.f32 %v2657, %v2755
        %v2820 = vmax.f32 %v2660, %v2756
        %v2821 = vmax.f32 %v2662, %v2757
        %v2822 = vmax.f32 %v2665, %v2758
        %v2823 = vmax.f32 %v2667, %v2759
        %v2824 = vmax.f32 %v2670, %v2760
        %v2825 = vmax.f32 %v2672, %v2761
        %v2826 = vmax.f32 %v2675, %v2762
        %v2827 = vmax.f32 %v2677, %v2763
        %v2828 = vmax.f32 %v2680, %v2764
        %v2829 = vmax.f32 %v2682, %v2765
        %v2830 = vmax.f32 %v2685, %v2766
        %v2831 = vmax.f32 %v2687, %v2767
        %v2832 = vmax.f32 %v2690, %v2768
        %v2833 = vmax.f32 %v2692, %v2769
        %v2834 = vmax.f32 %v2695, %v2770
        %v2835 = vmax.f32 %v2697, %v2771
        %v2836 = vmax.f32 %v2700, %v2772
        %v2837 = vmax.f32 %v2702, %v2773
        %v2838 = vmax.f32 %v2705, %v2774
        %v2839 = vmax.f32 %v2707, %v2775
        %v2840 = vmax.f32 %v2710, %v2776
        %v2841 = vmax.f32 %v2712, %v2777
        %v2842 = vpack.c.bf16 %v2779, %v2778
        %v2843 = vpack.c.bf16 %v2781, %v2780
        %v2844 = vpack.c.bf16 %v2783, %v2782
        %v2845 = vpack.c.bf16 %v2785, %v2784
        %v2846 = vpack.c.bf16 %v2787, %v2786
        %v2847 = vpack.c.bf16 %v2789, %v2788
        %v2848 = vpack.c.bf16 %v2791, %v2790
        %v2849 = vpack.c.bf16 %v2793, %v2792
        %v2850 = vpack.c.bf16 %v2795, %v2794
        %v2851 = vpack.c.bf16 %v2797, %v2796
        %v2852 = vpack.c.bf16 %v2799, %v2798
        %v2853 = vpack.c.bf16 %v2801, %v2800
        %v2854 = vpack.c.bf16 %v2803, %v2802
        %v2855 = vpack.c.bf16 %v2805, %v2804
        %v2856 = vpack.c.bf16 %v2807, %v2806
        %v2857 = vpack.c.bf16 %v2809, %v2808
        %v2858 = vpack.c.bf16 %v2811, %v2810
        %v2859 = vpack.c.bf16 %v2813, %v2812
        %v2860 = vpack.c.bf16 %v2815, %v2814
        %v2861 = vpack.c.bf16 %v2817, %v2816
        %v2862 = vpack.c.bf16 %v2819, %v2818
        %v2863 = vpack.c.bf16 %v2821, %v2820
        %v2864 = vpack.c.bf16 %v2823, %v2822
        %v2865 = vpack.c.bf16 %v2825, %v2824
        %v2866 = vpack.c.bf16 %v2827, %v2826
        %v2867 = vpack.c.bf16 %v2829, %v2828
        %v2868 = vpack.c.bf16 %v2831, %v2830
        %v2869 = vpack.c.bf16 %v2833, %v2832
        %v2870 = vpack.c.bf16 %v2835, %v2834
        %v2871 = vpack.c.bf16 %v2837, %v2836
        %v2872 = vpack.c.bf16 %v2839, %v2838
        %v2873 = vpack.c.bf16 %v2841, %v2840
        %s2874 = scalar_lea.vmem [#allocation5], 384
        %v2875 = vld [vmem:[%s2874] sm:$0xf]
        %v2876 = vld [vmem:[%s2874 + $0x4] sm:$0xf]
        %v2877 = vld [vmem:[%s2874 + $0x8] sm:$0xf]
        %v2878 = vld [vmem:[%s2874 + $0xc] sm:$0xf]
        %v2879 = vld [vmem:[%s2874 + $0x10] sm:$0xf]
        %v2880 = vld [vmem:[%s2874 + $0x14] sm:$0xf]
        %v2881 = vld [vmem:[%s2874 + $0x18] sm:$0xf]
        %v2882 = vld [vmem:[%s2874 + $0x1c] sm:$0xf]
        %v2883 = vld [vmem:[%s2874 + $0x20] sm:$0xf]
        %v2884 = vld [vmem:[%s2874 + $0x24] sm:$0xf]
        %v2885 = vld [vmem:[%s2874 + $0x28] sm:$0xf]
        %v2886 = vld [vmem:[%s2874 + $0x2c] sm:$0xf]
        %v2887 = vld [vmem:[%s2874 + $0x30] sm:$0xf]
        %v2888 = vld [vmem:[%s2874 + $0x34] sm:$0xf]
        %v2889 = vld [vmem:[%s2874 + $0x38] sm:$0xf]
        %v2890 = vld [vmem:[%s2874 + $0x3c] sm:$0xf]
        %s2891 = scalar_lea.vmem [#allocation7], 6
        %v2892 = vld [vmem:[%s2891] sm:$0x1]
        %v2894 = vperm.slane %v2892, 0
        %v2912 = vunpack.c.l.b16 %v2875
        %v2913 = vunpack.c.l.b16 %v2876
        %v2914 = vunpack.c.l.b16 %v2877
        %v2915 = vunpack.c.l.b16 %v2878
        %v2916 = vunpack.c.l.b16 %v2879
        %v2917 = vunpack.c.l.b16 %v2880
        %v2918 = vunpack.c.l.b16 %v2881
        %v2919 = vunpack.c.l.b16 %v2882
        %v2920 = vunpack.c.l.b16 %v2883
        %v2921 = vunpack.c.l.b16 %v2884
        %v2922 = vunpack.c.l.b16 %v2885
        %v2923 = vunpack.c.l.b16 %v2886
        %v2924 = vunpack.c.l.b16 %v2887
        %v2925 = vunpack.c.l.b16 %v2888
        %v2926 = vunpack.c.l.b16 %v2889
        %v2927 = vunpack.c.l.b16 %v2890
        %v2928 = vpack.c.b16 %v2913, %v2912
        %v2929 = vpack.c.b16 %v2915, %v2914
        %v2930 = vpack.c.b16 %v2917, %v2916
        %v2931 = vpack.c.b16 %v2919, %v2918
        %v2932 = vpack.c.b16 %v2921, %v2920
        %v2933 = vpack.c.b16 %v2923, %v2922
        %v2934 = vpack.c.b16 %v2925, %v2924
        %v2935 = vpack.c.b16 %v2927, %v2926
        %2944 = vmatpush.bf16.msra.mxu0 %v2935
        %2945 = vmatpush.bf16.msra.mxu0 %v2934
        %2946 = vmatpush.bf16.msra.mxu0 %v2933
        %2947 = vmatpush.bf16.msra.mxu0 %v2932
        %2948 = vmatpush.bf16.msra.mxu0 %v2931
        %2949 = vmatpush.bf16.msra.mxu0 %v2930
        %2950 = vmatpush.bf16.msra.mxu0 %v2929
        %2951 = vmatpush.bf16.msra.mxu0 %v2928
        %2952 = vmatmul.bf16.gmra.mxu0 %v2842
        %v2953 = vpop.f32.mrf.mxu0
        %v2954 = vadd.f32 %v2894, %v2953
        %v2955 = vpop.f32.mrf.mxu0
        %v2956 = vadd.f32 %v2894, %v2955
        %2957 = vmatmul.bf16.gmra.mxu0 %v2843
        %v2958 = vpop.f32.mrf.mxu0
        %v2959 = vadd.f32 %v2894, %v2958
        %v2960 = vpop.f32.mrf.mxu0
        %v2961 = vadd.f32 %v2894, %v2960
        %2962 = vmatmul.bf16.gmra.mxu0 %v2844
        %v2963 = vpop.f32.mrf.mxu0
        %v2964 = vadd.f32 %v2894, %v2963
        %v2965 = vpop.f32.mrf.mxu0
        %v2966 = vadd.f32 %v2894, %v2965
        %2967 = vmatmul.bf16.gmra.mxu0 %v2845
        %v2968 = vpop.f32.mrf.mxu0
        %v2969 = vadd.f32 %v2894, %v2968
        %v2970 = vpop.f32.mrf.mxu0
        %v2971 = vadd.f32 %v2894, %v2970
        %2972 = vmatmul.bf16.gmra.mxu0 %v2846
        %v2973 = vpop.f32.mrf.mxu0
        %v2974 = vadd.f32 %v2894, %v2973
        %v2975 = vpop.f32.mrf.mxu0
        %v2976 = vadd.f32 %v2894, %v2975
        %2977 = vmatmul.bf16.gmra.mxu0 %v2847
        %v2978 = vpop.f32.mrf.mxu0
        %v2979 = vadd.f32 %v2894, %v2978
        %v2980 = vpop.f32.mrf.mxu0
        %v2981 = vadd.f32 %v2894, %v2980
        %2982 = vmatmul.bf16.gmra.mxu0 %v2848
        %v2983 = vpop.f32.mrf.mxu0
        %v2984 = vadd.f32 %v2894, %v2983
        %v2985 = vpop.f32.mrf.mxu0
        %v2986 = vadd.f32 %v2894, %v2985
        %2987 = vmatmul.bf16.gmra.mxu0 %v2849
        %v2988 = vpop.f32.mrf.mxu0
        %v2989 = vadd.f32 %v2894, %v2988
        %v2990 = vpop.f32.mrf.mxu0
        %v2991 = vadd.f32 %v2894, %v2990
        %2992 = vmatmul.bf16.gmra.mxu0 %v2850
        %v2993 = vpop.f32.mrf.mxu0
        %v2994 = vadd.f32 %v2894, %v2993
        %v2995 = vpop.f32.mrf.mxu0
        %v2996 = vadd.f32 %v2894, %v2995
        %2997 = vmatmul.bf16.gmra.mxu0 %v2851
        %v2998 = vpop.f32.mrf.mxu0
        %v2999 = vadd.f32 %v2894, %v2998
        %v3000 = vpop.f32.mrf.mxu0
        %v3001 = vadd.f32 %v2894, %v3000
        %3002 = vmatmul.bf16.gmra.mxu0 %v2852
        %v3003 = vpop.f32.mrf.mxu0
        %v3004 = vadd.f32 %v2894, %v3003
        %v3005 = vpop.f32.mrf.mxu0
        %v3006 = vadd.f32 %v2894, %v3005
        %3007 = vmatmul.bf16.gmra.mxu0 %v2853
        %v3008 = vpop.f32.mrf.mxu0
        %v3009 = vadd.f32 %v2894, %v3008
        %v3010 = vpop.f32.mrf.mxu0
        %v3011 = vadd.f32 %v2894, %v3010
        %3012 = vmatmul.bf16.gmra.mxu0 %v2854
        %v3013 = vpop.f32.mrf.mxu0
        %v3014 = vadd.f32 %v2894, %v3013
        %v3015 = vpop.f32.mrf.mxu0
        %v3016 = vadd.f32 %v2894, %v3015
        %3017 = vmatmul.bf16.gmra.mxu0 %v2855
        %v3018 = vpop.f32.mrf.mxu0
        %v3019 = vadd.f32 %v2894, %v3018
        %v3020 = vpop.f32.mrf.mxu0
        %v3021 = vadd.f32 %v2894, %v3020
        %3022 = vmatmul.bf16.gmra.mxu0 %v2856
        %v3023 = vpop.f32.mrf.mxu0
        %v3024 = vadd.f32 %v2894, %v3023
        %v3025 = vpop.f32.mrf.mxu0
        %v3026 = vadd.f32 %v2894, %v3025
        %3027 = vmatmul.bf16.gmra.mxu0 %v2857
        %v3028 = vpop.f32.mrf.mxu0
        %v3029 = vadd.f32 %v2894, %v3028
        %v3030 = vpop.f32.mrf.mxu0
        %v3031 = vadd.f32 %v2894, %v3030
        %3032 = vmatmul.bf16.gmra.mxu0 %v2858
        %v3033 = vpop.f32.mrf.mxu0
        %v3034 = vadd.f32 %v2894, %v3033
        %v3035 = vpop.f32.mrf.mxu0
        %v3036 = vadd.f32 %v2894, %v3035
        %3037 = vmatmul.bf16.gmra.mxu0 %v2859
        %v3038 = vpop.f32.mrf.mxu0
        %v3039 = vadd.f32 %v2894, %v3038
        %v3040 = vpop.f32.mrf.mxu0
        %v3041 = vadd.f32 %v2894, %v3040
        %3042 = vmatmul.bf16.gmra.mxu0 %v2860
        %v3043 = vpop.f32.mrf.mxu0
        %v3044 = vadd.f32 %v2894, %v3043
        %v3045 = vpop.f32.mrf.mxu0
        %v3046 = vadd.f32 %v2894, %v3045
        %3047 = vmatmul.bf16.gmra.mxu0 %v2861
        %v3048 = vpop.f32.mrf.mxu0
        %v3049 = vadd.f32 %v2894, %v3048
        %v3050 = vpop.f32.mrf.mxu0
        %v3051 = vadd.f32 %v2894, %v3050
        %3052 = vmatmul.bf16.gmra.mxu0 %v2862
        %v3053 = vpop.f32.mrf.mxu0
        %v3054 = vadd.f32 %v2894, %v3053
        %v3055 = vpop.f32.mrf.mxu0
        %v3056 = vadd.f32 %v2894, %v3055
        %3057 = vmatmul.bf16.gmra.mxu0 %v2863
        %v3058 = vpop.f32.mrf.mxu0
        %v3059 = vadd.f32 %v2894, %v3058
        %v3060 = vpop.f32.mrf.mxu0
        %v3061 = vadd.f32 %v2894, %v3060
        %3062 = vmatmul.bf16.gmra.mxu0 %v2864
        %v3063 = vpop.f32.mrf.mxu0
        %v3064 = vadd.f32 %v2894, %v3063
        %v3065 = vpop.f32.mrf.mxu0
        %v3066 = vadd.f32 %v2894, %v3065
        %3067 = vmatmul.bf16.gmra.mxu0 %v2865
        %v3068 = vpop.f32.mrf.mxu0
        %v3069 = vadd.f32 %v2894, %v3068
        %v3070 = vpop.f32.mrf.mxu0
        %v3071 = vadd.f32 %v2894, %v3070
        %3072 = vmatmul.bf16.gmra.mxu0 %v2866
        %v3073 = vpop.f32.mrf.mxu0
        %v3074 = vadd.f32 %v2894, %v3073
        %v3075 = vpop.f32.mrf.mxu0
        %v3076 = vadd.f32 %v2894, %v3075
        %3077 = vmatmul.bf16.gmra.mxu0 %v2867
        %v3078 = vpop.f32.mrf.mxu0
        %v3079 = vadd.f32 %v2894, %v3078
        %v3080 = vpop.f32.mrf.mxu0
        %v3081 = vadd.f32 %v2894, %v3080
        %3082 = vmatmul.bf16.gmra.mxu0 %v2868
        %v3083 = vpop.f32.mrf.mxu0
        %v3084 = vadd.f32 %v2894, %v3083
        %v3085 = vpop.f32.mrf.mxu0
        %v3086 = vadd.f32 %v2894, %v3085
        %3087 = vmatmul.bf16.gmra.mxu0 %v2869
        %v3088 = vpop.f32.mrf.mxu0
        %v3089 = vadd.f32 %v2894, %v3088
        %v3090 = vpop.f32.mrf.mxu0
        %v3091 = vadd.f32 %v2894, %v3090
        %3092 = vmatmul.bf16.gmra.mxu0 %v2870
        %v3093 = vpop.f32.mrf.mxu0
        %v3094 = vadd.f32 %v2894, %v3093
        %v3095 = vpop.f32.mrf.mxu0
        %v3096 = vadd.f32 %v2894, %v3095
        %3097 = vmatmul.bf16.gmra.mxu0 %v2871
        %v3098 = vpop.f32.mrf.mxu0
        %v3099 = vadd.f32 %v2894, %v3098
        %v3100 = vpop.f32.mrf.mxu0
        %v3101 = vadd.f32 %v2894, %v3100
        %3102 = vmatmul.bf16.gmra.mxu0 %v2872
        %v3103 = vpop.f32.mrf.mxu0
        %v3104 = vadd.f32 %v2894, %v3103
        %v3105 = vpop.f32.mrf.mxu0
        %v3106 = vadd.f32 %v2894, %v3105
        %3107 = vmatmul.bf16.gmra.mxu0 %v2873
        %v3108 = vpop.f32.mrf.mxu0
        %v3109 = vadd.f32 %v2894, %v3108
        %v3110 = vpop.f32.mrf.mxu0
        %v3111 = vadd.f32 %v2894, %v3110
        %3112 = vdwg.mxu0
        %v3113 = vmax.f32 %v2954, 0.0
        %v3114 = vmax.f32 %v2956, 0.0
        %v3115 = vmax.f32 %v2959, 0.0
        %v3116 = vmax.f32 %v2961, 0.0
        %v3117 = vmax.f32 %v2964, 0.0
        %v3118 = vmax.f32 %v2966, 0.0
        %v3119 = vmax.f32 %v2969, 0.0
        %v3120 = vmax.f32 %v2971, 0.0
        %v3121 = vmax.f32 %v2974, 0.0
        %v3122 = vmax.f32 %v2976, 0.0
        %v3123 = vmax.f32 %v2979, 0.0
        %v3124 = vmax.f32 %v2981, 0.0
        %v3125 = vmax.f32 %v2984, 0.0
        %v3126 = vmax.f32 %v2986, 0.0
        %v3127 = vmax.f32 %v2989, 0.0
        %v3128 = vmax.f32 %v2991, 0.0
        %v3129 = vmax.f32 %v2994, 0.0
        %v3130 = vmax.f32 %v2996, 0.0
        %v3131 = vmax.f32 %v2999, 0.0
        %v3132 = vmax.f32 %v3001, 0.0
        %v3133 = vmax.f32 %v3004, 0.0
        %v3134 = vmax.f32 %v3006, 0.0
        %v3135 = vmax.f32 %v3009, 0.0
        %v3136 = vmax.f32 %v3011, 0.0
        %v3137 = vmax.f32 %v3014, 0.0
        %v3138 = vmax.f32 %v3016, 0.0
        %v3139 = vmax.f32 %v3019, 0.0
        %v3140 = vmax.f32 %v3021, 0.0
        %v3141 = vmax.f32 %v3024, 0.0
        %v3142 = vmax.f32 %v3026, 0.0
        %v3143 = vmax.f32 %v3029, 0.0
        %v3144 = vmax.f32 %v3031, 0.0
        %v3145 = vmax.f32 %v3034, 0.0
        %v3146 = vmax.f32 %v3036, 0.0
        %v3147 = vmax.f32 %v3039, 0.0
        %v3148 = vmax.f32 %v3041, 0.0
        %v3149 = vmax.f32 %v3044, 0.0
        %v3150 = vmax.f32 %v3046, 0.0
        %v3151 = vmax.f32 %v3049, 0.0
        %v3152 = vmax.f32 %v3051, 0.0
        %v3153 = vmax.f32 %v3054, 0.0
        %v3154 = vmax.f32 %v3056, 0.0
        %v3155 = vmax.f32 %v3059, 0.0
        %v3156 = vmax.f32 %v3061, 0.0
        %v3157 = vmax.f32 %v3064, 0.0
        %v3158 = vmax.f32 %v3066, 0.0
        %v3159 = vmax.f32 %v3069, 0.0
        %v3160 = vmax.f32 %v3071, 0.0
        %v3161 = vmax.f32 %v3074, 0.0
        %v3162 = vmax.f32 %v3076, 0.0
        %v3163 = vmax.f32 %v3079, 0.0
        %v3164 = vmax.f32 %v3081, 0.0
        %v3165 = vmax.f32 %v3084, 0.0
        %v3166 = vmax.f32 %v3086, 0.0
        %v3167 = vmax.f32 %v3089, 0.0
        %v3168 = vmax.f32 %v3091, 0.0
        %v3169 = vmax.f32 %v3094, 0.0
        %v3170 = vmax.f32 %v3096, 0.0
        %v3171 = vmax.f32 %v3099, 0.0
        %v3172 = vmax.f32 %v3101, 0.0
        %v3173 = vmax.f32 %v3104, 0.0
        %v3174 = vmax.f32 %v3106, 0.0
        %v3175 = vmax.f32 %v3109, 0.0
        %v3176 = vmax.f32 %v3111, 0.0
        %v3177 = vmin.f32 %v3113, 1.0
        %v3178 = vmin.f32 %v3114, 1.0
        %v3179 = vmin.f32 %v3115, 1.0
        %v3180 = vmin.f32 %v3116, 1.0
        %v3181 = vmin.f32 %v3117, 1.0
        %v3182 = vmin.f32 %v3118, 1.0
        %v3183 = vmin.f32 %v3119, 1.0
        %v3184 = vmin.f32 %v3120, 1.0
        %v3185 = vmin.f32 %v3121, 1.0
        %v3186 = vmin.f32 %v3122, 1.0
        %v3187 = vmin.f32 %v3123, 1.0
        %v3188 = vmin.f32 %v3124, 1.0
        %v3189 = vmin.f32 %v3125, 1.0
        %v3190 = vmin.f32 %v3126, 1.0
        %v3191 = vmin.f32 %v3127, 1.0
        %v3192 = vmin.f32 %v3128, 1.0
        %v3193 = vmin.f32 %v3129, 1.0
        %v3194 = vmin.f32 %v3130, 1.0
        %v3195 = vmin.f32 %v3131, 1.0
        %v3196 = vmin.f32 %v3132, 1.0
        %v3197 = vmin.f32 %v3133, 1.0
        %v3198 = vmin.f32 %v3134, 1.0
        %v3199 = vmin.f32 %v3135, 1.0
        %v3200 = vmin.f32 %v3136, 1.0
        %v3201 = vmin.f32 %v3137, 1.0
        %v3202 = vmin.f32 %v3138, 1.0
        %v3203 = vmin.f32 %v3139, 1.0
        %v3204 = vmin.f32 %v3140, 1.0
        %v3205 = vmin.f32 %v3141, 1.0
        %v3206 = vmin.f32 %v3142, 1.0
        %v3207 = vmin.f32 %v3143, 1.0
        %v3208 = vmin.f32 %v3144, 1.0
        %v3209 = vmin.f32 %v3145, 1.0
        %v3210 = vmin.f32 %v3146, 1.0
        %v3211 = vmin.f32 %v3147, 1.0
        %v3212 = vmin.f32 %v3148, 1.0
        %v3213 = vmin.f32 %v3149, 1.0
        %v3214 = vmin.f32 %v3150, 1.0
        %v3215 = vmin.f32 %v3151, 1.0
        %v3216 = vmin.f32 %v3152, 1.0
        %v3217 = vmin.f32 %v3153, 1.0
        %v3218 = vmin.f32 %v3154, 1.0
        %v3219 = vmin.f32 %v3155, 1.0
        %v3220 = vmin.f32 %v3156, 1.0
        %v3221 = vmin.f32 %v3157, 1.0
        %v3222 = vmin.f32 %v3158, 1.0
        %v3223 = vmin.f32 %v3159, 1.0
        %v3224 = vmin.f32 %v3160, 1.0
        %v3225 = vmin.f32 %v3161, 1.0
        %v3226 = vmin.f32 %v3162, 1.0
        %v3227 = vmin.f32 %v3163, 1.0
        %v3228 = vmin.f32 %v3164, 1.0
        %v3229 = vmin.f32 %v3165, 1.0
        %v3230 = vmin.f32 %v3166, 1.0
        %v3231 = vmin.f32 %v3167, 1.0
        %v3232 = vmin.f32 %v3168, 1.0
        %v3233 = vmin.f32 %v3169, 1.0
        %v3234 = vmin.f32 %v3170, 1.0
        %v3235 = vmin.f32 %v3171, 1.0
        %v3236 = vmin.f32 %v3172, 1.0
        %v3237 = vmin.f32 %v3173, 1.0
        %v3238 = vmin.f32 %v3174, 1.0
        %v3239 = vmin.f32 %v3175, 1.0
        %v3240 = vmin.f32 %v3176, 1.0
        %3241 = vst [vmem:[%s223] sm:$0xff] %v3177
        %3242 = vst [vmem:[%s223 + $0x8] sm:$0xff] %v3178
        %3243 = vst [vmem:[%s223 + $0x10] sm:$0xff] %v3179
        %3244 = vst [vmem:[%s223 + $0x18] sm:$0xff] %v3180
        %3245 = vst [vmem:[%s223 + $0x20] sm:$0xff] %v3181
        %3246 = vst [vmem:[%s223 + $0x28] sm:$0xff] %v3182
        %3247 = vst [vmem:[%s223 + $0x30] sm:$0xff] %v3183
        %3248 = vst [vmem:[%s223 + $0x38] sm:$0xff] %v3184
        %3249 = vst [vmem:[%s223 + $0x40] sm:$0xff] %v3185
        %3250 = vst [vmem:[%s223 + $0x48] sm:$0xff] %v3186
        %3251 = vst [vmem:[%s223 + $0x50] sm:$0xff] %v3187
        %3252 = vst [vmem:[%s223 + $0x58] sm:$0xff] %v3188
        %3253 = vst [vmem:[%s223 + $0x60] sm:$0xff] %v3189
        %3254 = vst [vmem:[%s223 + $0x68] sm:$0xff] %v3190
        %3255 = vst [vmem:[%s223 + $0x70] sm:$0xff] %v3191
        %3256 = vst [vmem:[%s223 + $0x78] sm:$0xff] %v3192
        %3257 = vst [vmem:[%s223 + $0x80] sm:$0xff] %v3193
        %3258 = vst [vmem:[%s223 + $0x88] sm:$0xff] %v3194
        %3259 = vst [vmem:[%s223 + $0x90] sm:$0xff] %v3195
        %3260 = vst [vmem:[%s223 + $0x98] sm:$0xff] %v3196
        %3261 = vst [vmem:[%s223 + $0xa0] sm:$0xff] %v3197
        %3262 = vst [vmem:[%s223 + $0xa8] sm:$0xff] %v3198
        %3263 = vst [vmem:[%s223 + $0xb0] sm:$0xff] %v3199
        %3264 = vst [vmem:[%s223 + $0xb8] sm:$0xff] %v3200
        %3265 = vst [vmem:[%s223 + $0xc0] sm:$0xff] %v3201
        %3266 = vst [vmem:[%s223 + $0xc8] sm:$0xff] %v3202
        %3267 = vst [vmem:[%s223 + $0xd0] sm:$0xff] %v3203
        %3268 = vst [vmem:[%s223 + $0xd8] sm:$0xff] %v3204
        %3269 = vst [vmem:[%s223 + $0xe0] sm:$0xff] %v3205
        %3270 = vst [vmem:[%s223 + $0xe8] sm:$0xff] %v3206
        %3271 = vst [vmem:[%s223 + $0xf0] sm:$0xff] %v3207
        %3272 = vst [vmem:[%s223 + $0xf8] sm:$0xff] %v3208
        %3273 = vst [vmem:[%s223 + $0x100] sm:$0xff] %v3209
        %3274 = vst [vmem:[%s223 + $0x108] sm:$0xff] %v3210
        %3275 = vst [vmem:[%s223 + $0x110] sm:$0xff] %v3211
        %3276 = vst [vmem:[%s223 + $0x118] sm:$0xff] %v3212
        %3277 = vst [vmem:[%s223 + $0x120] sm:$0xff] %v3213
        %3278 = vst [vmem:[%s223 + $0x128] sm:$0xff] %v3214
        %3279 = vst [vmem:[%s223 + $0x130] sm:$0xff] %v3215
        %3280 = vst [vmem:[%s223 + $0x138] sm:$0xff] %v3216
        %3281 = vst [vmem:[%s223 + $0x140] sm:$0xff] %v3217
        %3282 = vst [vmem:[%s223 + $0x148] sm:$0xff] %v3218
        %3283 = vst [vmem:[%s223 + $0x150] sm:$0xff] %v3219
        %3284 = vst [vmem:[%s223 + $0x158] sm:$0xff] %v3220
        %3285 = vst [vmem:[%s223 + $0x160] sm:$0xff] %v3221
        %3286 = vst [vmem:[%s223 + $0x168] sm:$0xff] %v3222
        %3287 = vst [vmem:[%s223 + $0x170] sm:$0xff] %v3223
        %3288 = vst [vmem:[%s223 + $0x178] sm:$0xff] %v3224
        %3289 = vst [vmem:[%s223 + $0x180] sm:$0xff] %v3225
        %3290 = vst [vmem:[%s223 + $0x188] sm:$0xff] %v3226
        %3291 = vst [vmem:[%s223 + $0x190] sm:$0xff] %v3227
        %3292 = vst [vmem:[%s223 + $0x198] sm:$0xff] %v3228
        %3293 = vst [vmem:[%s223 + $0x1a0] sm:$0xff] %v3229
        %3294 = vst [vmem:[%s223 + $0x1a8] sm:$0xff] %v3230
        %3295 = vst [vmem:[%s223 + $0x1b0] sm:$0xff] %v3231
        %3296 = vst [vmem:[%s223 + $0x1b8] sm:$0xff] %v3232
        %3297 = vst [vmem:[%s223 + $0x1c0] sm:$0xff] %v3233
        %3298 = vst [vmem:[%s223 + $0x1c8] sm:$0xff] %v3234
        %3299 = vst [vmem:[%s223 + $0x1d0] sm:$0xff] %v3235
        %3300 = vst [vmem:[%s223 + $0x1d8] sm:$0xff] %v3236
        %3301 = vst [vmem:[%s223 + $0x1e0] sm:$0xff] %v3237
        %3302 = vst [vmem:[%s223 + $0x1e8] sm:$0xff] %v3238
        %3303 = vst [vmem:[%s223 + $0x1f0] sm:$0xff] %v3239
        %3304 = vst [vmem:[%s223 + $0x1f8] sm:$0xff] %v3240
        %s3305 = sand.u32 %s97, 1
        %s3306 = scalar_lea.sflag [#allocation4], %s3305
        %s3307 = sand.u32 %s97, 1
        %s3308 = smul.addr %s3307, 512
        %s3309 = scalar_lea.vmem [#allocation8], %s3308
        // Predicated region
        $region45: #{tpu_custom_call.1} parent=31 // pred_check
          %p3310 = pneg %p107
        $region46: #{tpu_custom_call.1} parent=31 // pred_check_branch
          %3312 = sbr.rel (%p3310) target = $region48
        $region47: #{tpu_custom_call.1} parent=31 // pred_region
          %s3313 = smul.u32 64, %s21
          %3315 = vsyncadd %s3306, 0
          %s3316 = smul.addr %s3313, 8
          %s3317 = scalar_lea.hbm %s3, %s3316
          %s3318 = sshll.u32 %s3309, 4
          %s3319 = int_to_ptr.vmem [resolvable:$true] %s3318
          %s3320 = sshll.u32 %s3317, 4
          %s3321 = int_to_ptr.hbm [resolvable:$true] %s3320
          %3326 = dma.vmem_to_hbm [thread:$0]  %s3319, 8192, %s3321, %s3306, 128, 128, 8
        $region48: #{tpu_custom_call.1} parent=31 // pred_fallthru
          _
      $region32: #{tpu_custom_call.1} parent=5 // pred_fallthru
        _
      %p3327 = scmp.le.s32.totalorder 2, %s16
      // Predicated region
      $region49: #{tpu_custom_call.1} parent=5 // pred_check
        %p3328 = pneg %p3327
      $region50: #{tpu_custom_call.1} parent=5 // pred_check_branch
        %3330 = sbr.rel (%p3328) target = $region52
      $region51: #{tpu_custom_call.1} parent=5 // pred_region
        %s3331 = ssub.s32 %s16, 2
        // Predicated region
        $region53: #{tpu_custom_call.1} parent=51 // pred_check
          %p3332 = pneg %p113
        $region54: #{tpu_custom_call.1} parent=51 // pred_check_branch
          %3334 = sbr.rel (%p3332) target = $region56
        $region55: #{tpu_custom_call.1} parent=51 // pred_region
          %s3335 = sand.u32 %s98, 1
          %s3336 = scalar_lea.sflag [#allocation4], %s3335
          %s3337 = sand.u32 %s98, 1
          %s3338 = smul.addr %s3337, 512
          %s3339 = scalar_lea.vmem [#allocation8], %s3338
          %3341 = dma.done %s3336, 8192
        $region56: #{tpu_custom_call.1} parent=51 // pred_fallthru
          _
      $region52: #{tpu_custom_call.1} parent=5 // pred_fallthru
        _
    $region6: #{tpu_custom_call.1} parent=1 // loop_footer
      %s20 = sadd.s32 1, %s16
    $region7: #{tpu_custom_call.1} parent=1 // loop_footer_branch
      %15 = sbr.rel target = $region3
    $region8: #{tpu_custom_call.1} parent=1 // loop_exit
      _
    %3342 = vsyncpa [#allocation3], 1
    %s3343 = scalar_lea.sflag [#allocation3], 1
    %3344 = vsyncpa %s3343, 1
    %3345 = vsyncpa [#allocation6], 1
    %3346 = vsyncpa [#allocation4], 1
    %s3347 = scalar_lea.sflag [#allocation4], 1
    %3348 = vsyncpa %s3347, 1

</llo_original>
